<compile_context>
chip_gen: v6e
topology: v6e:2x2x1
jax: 0.10.0
libtpu: 0.0.40
codegen_flags: <defaults>
</compile_context>

<pallas_src>
import numpy as np
import jax
import jax.numpy as jnp
from jax import lax
from jax.experimental import pallas as pl
from jax.experimental.pallas import tpu as pltpu


BN_EPS = 1e-5
LRELU_SLOPE = 0.2
LANE = 128


def _full_spec(shape):
    # Whole-array block (grid=(1,)); block == full array dims -> valid on TPU.
    return pl.BlockSpec(shape, lambda i: (0,) * len(shape))


def _round_up(v, m):
    return ((v + m - 1) // m) * m


# ---------------------------------------------------------------------------
# Fused kernel: head + body ConvBlocks + tail conv/tanh + residual add
# ---------------------------------------------------------------------------
def _make_fused_kernel(K, img_w, num_blocks, counts, kkc):
    # Flat tap offsets in the m = n*H*W + i*W + j indexing.
    offsets = [kh * img_w + kw for kh in range(K) for kw in range(K)]

    def build_patches(x):
        # x: (Cpad, Mw).  Each tap is a static lane shift of the slab; wrapped
        # values only land on positions never read by valid outputs.
        cols = [x if off == 0 else jnp.roll(x, -off, axis=1) for off in offsets]
        return jnp.concatenate(cols, axis=0)            # (K*K*Cpad, Mw)

    def kernel(x_ref, wb_ref, bn_ref, wt_ref, y_ref, m_ref, o_ref):
        x = x_ref[...]                                   # (Cpad, Mw) f32
        wb = wb_ref[...]                                 # (nb, Cpad, kkc)
        bn = bn_ref[...]                                 # (nb, Cpad, 2)
        masks = m_ref[...]                               # (nb, Mw)

        for l in range(num_blocks):
            patches = build_patches(x)                   # (kkc, Mw)
            acc = jnp.dot(wb[l], patches,
                          preferred_element_type=jnp.float32)   # (Cpad, Mw)

            # Training-mode BatchNorm over valid positions only (lane reductions).
            vm = masks[l:l + 1, :]                       # (1, Mw)
            am = acc * vm
            inv_cnt = 1.0 / counts[l]
            s = jnp.sum(am, axis=1, keepdims=True)       # (Cpad, 1)
            ss = jnp.sum(am * am, axis=1, keepdims=True)
            mean = s * inv_cnt
            var = jnp.maximum(ss * inv_cnt - mean * mean, 0.0)   # clamp cancellation
            scale = bn[l, :, 0:1] * lax.rsqrt(var + BN_EPS)      # gamma * rsqrt
            shift = bn[l, :, 1:2] - mean * scale                 # beta - mean*scale
            y = acc * scale + shift
            x = jnp.maximum(y, LRELU_SLOPE * y)          # LeakyReLU(0.2), lane-dense

        # Tail: conv + bias + tanh + residual add, all lane-dense.
        patches = build_patches(x)
        wt = wt_ref[...]                                 # (nc_out, kkc + 1)
        acc = jnp.dot(wt[:, :kkc], patches, preferred_element_type=jnp.float32)
        acc = acc + wt[:, kkc:kkc + 1]
        o_ref[...] = jnp.tanh(acc) + y_ref[...]

    return kernel


# ---------------------------------------------------------------------------
# Parameter init (deterministic, synthetic) & full forward wrapper
# ---------------------------------------------------------------------------
def init_params(key, nc_im=3, nfc=8, min_nfc=8, num_layer=5, ker_size=3):
    # Channel plan exactly as in the PyTorch __init__.
    chans = [(nc_im, nfc)]                               # head
    N = nfc
    for i in range(int(num_layer) - 2):                  # body
        N = int(nfc / pow(2, i + 1))
        chans.append((max(2 * N, min_nfc), max(N, min_nfc)))
    tail_in = max(N, min_nfc)

    blocks = []
    for (cin, cout) in chans:
        key, kw, kb, kg, kbe = jax.random.split(key, 5)
        w = 0.1 * jax.random.normal(kw, (ker_size, ker_size, cin, cout), jnp.float32)
        b = 0.1 * jax.random.normal(kb, (1, cout), jnp.float32)
        g = 1.0 + 0.1 * jax.random.normal(kg, (1, cout), jnp.float32)
        be = 0.1 * jax.random.normal(kbe, (1, cout), jnp.float32)
        blocks.append((w, b, g, be))

    key, kw, kb = jax.random.split(key, 3)
    wt = 0.1 * jax.random.normal(kw, (ker_size, ker_size, tail_in, nc_im), jnp.float32)
    bt = 0.1 * jax.random.normal(kb, (1, nc_im), jnp.float32)
    return {"blocks": blocks, "tail": (wt, bt)}


def generator_forward(x_nchw, y_nchw, params, ker_size=3):
    K = ker_size
    blocks = params["blocks"]
    wt, bt = params["tail"]
    num_blocks = len(blocks)
    num_convs = num_blocks + 1

    N, C, H, W = x_nchw.shape
    HW = H * W
    M = N * HW
    Mw = _round_up(M, LANE)
    Ho = H - num_convs * (K - 1)
    Wo = W - num_convs * (K - 1)
    nc_out = wt.shape[3]

    # Uniform padded channel count -> all ConvBlock weights share one shape.
    cpad = max([C] + [w.shape[2] for (w, _, _, _) in blocks]
               + [w.shape[3] for (w, _, _, _) in blocks] + [wt.shape[2]])
    cpad = _round_up(cpad, 8)
    kkc = K * K * cpad

    # --- lane-dense activation slab: (cpad, Mw), flat index n*H*W + i*W + j ---
    x_cm = jnp.transpose(x_nchw.astype(jnp.float32), (1, 0, 2, 3)).reshape(C, M)
    x_slab = jnp.zeros((cpad, Mw), jnp.float32).at[:C, :M].set(x_cm)

    # --- packed ConvBlock weights (Cout, K*K*Cin) and BN gamma/beta.
    #     Conv bias intentionally dropped: cancels under batch-stat BN. ---
    w_list, bn_list = [], []
    for (w, _b, g, be) in blocks:
        _, _, ci, co = w.shape
        wp = jnp.zeros((K, K, cpad, cpad), jnp.float32).at[:, :, :ci, :co].set(w)
        w_list.append(jnp.transpose(wp, (3, 0, 1, 2)).reshape(cpad, kkc))
        p = jnp.zeros((cpad, 2), jnp.float32)
        p = p.at[:co, 0].set(g.reshape(-1)).at[:co, 1].set(be.reshape(-1))
        bn_list.append(p)
    w_blocks = jnp.stack(w_list)                          # (nb, cpad, kkc)
    bn_packed = jnp.stack(bn_list)                        # (nb, cpad, 2)

    # --- tail weight with bias packed as the last column ---
    ci = wt.shape[2]
    wtp = jnp.zeros((K, K, cpad, nc_out), jnp.float32).at[:, :, :ci, :].set(wt)
    wt2d = jnp.transpose(wtp, (3, 0, 1, 2)).reshape(nc_out, kkc)
    w_tail = jnp.concatenate([wt2d, bt.reshape(nc_out, 1)], axis=1)   # (nc_out, kkc+1)

    # --- skip tensor, cropped as in the PyTorch forward (ind from H applied to
    #     both spatial axes), scattered into the same flat lane-dense layout ---
    ind = int((y_nchw.shape[2] - Ho) // 2)
    y_crop = y_nchw[:, 0:3, ind:y_nchw.shape[2] - ind, ind:y_nchw.shape[3] - ind]
    y_crop = jnp.transpose(y_crop.astype(jnp.float32), (1, 0, 2, 3))  # (3, N, Ho, Wo)
    y_full = jnp.zeros((nc_out, N, H, W), jnp.float32).at[:, :, :Ho, :Wo].set(y_crop)
    y_slab = jnp.zeros((nc_out, Mw), jnp.float32).at[:, :M].set(y_full.reshape(nc_out, M))

    # --- per-ConvBlock BN validity masks (valid conv output positions) ---
    mask_np = np.zeros((num_blocks, Mw), np.float32)
    counts = []
    for l in range(num_blocks):
        ho = H - (l + 1) * (K - 1)
        wo = W - (l + 1) * (K - 1)
        counts.append(float(N * ho * wo))
        for n in range(N):
            for i in range(ho):
                base = n * HW + i * W
                mask_np[l, base:base + wo] = 1.0
    masks = jnp.asarray(mask_np)

    inputs = [x_slab, w_blocks, bn_packed, w_tail, y_slab, masks]
    kernel = _make_fused_kernel(K, W, num_blocks, counts, kkc)

    flops = 2 * kkc * Mw * (cpad * num_blocks + nc_out)
    out_slab = pl.pallas_call(
        kernel,
        grid=(1,),
        in_specs=[_full_spec(a.shape) for a in inputs],
        out_specs=_full_spec((nc_out, Mw)),
        out_shape=jax.ShapeDtypeStruct((nc_out, Mw), jnp.float32),
        compiler_params=pltpu.CompilerParams(
            dimension_semantics=("arbitrary",)),
        cost_estimate=pl.CostEstimate(
            flops=int(flops),
            transcendentals=int(nc_out * Mw + 8 * num_blocks),
            bytes_accessed=int(sum(a.size * 4 for a in inputs) + nc_out * Mw * 4)),
    )(*inputs)

    # Extract the valid (Ho, Wo) window and return NCHW (tiny host epilogue).
    out = out_slab[:, :M].reshape(nc_out, N, H, W)[:, :, :Ho, :Wo]
    return jnp.transpose(out, (1, 0, 2, 3))


# ---------------------------------------------------------------------------
# Pure-JAX reference (correctness only) — faithful translation, including the
# conv bias and two-pass BN statistics.
# ---------------------------------------------------------------------------
def ref_forward(x_nchw, y_nchw, params):
    x = jnp.transpose(x_nchw, (0, 2, 3, 1)).astype(jnp.float32)
    dn = ("NHWC", "HWIO", "NHWC")
    for (w, b, g, be) in params["blocks"]:
        x = lax.conv_general_dilated(x, w, (1, 1), "VALID",
                                     dimension_numbers=dn) + b.reshape(1, 1, 1, -1)
        mean = jnp.mean(x, axis=(0, 1, 2), keepdims=True)
        var = jnp.mean((x - mean) ** 2, axis=(0, 1, 2), keepdims=True)
        x = (x - mean) * lax.rsqrt(var + BN_EPS)
        x = x * g.reshape(1, 1, 1, -1) + be.reshape(1, 1, 1, -1)
        x = jnp.where(x >= 0, x, LRELU_SLOPE * x)
    wt, bt = params["tail"]
    x = lax.conv_general_dilated(x, wt, (1, 1), "VALID",
                                 dimension_numbers=dn) + bt.reshape(1, 1, 1, -1)
    x = jnp.tanh(x)
    x = jnp.transpose(x, (0, 3, 1, 2))
    ind = int((y_nchw.shape[2] - x.shape[2]) // 2)
    y = y_nchw[:, 0:3, ind:y_nchw.shape[2] - ind, ind:y_nchw.shape[3] - ind]
    return x + y


if __name__ == "__main__":
    key = jax.random.PRNGKey(0)
    kp, kx, ky = jax.random.split(key, 3)

    params = init_params(kp)

    # 5 valid 3x3 convs shrink spatial by 10: 26 -> 16; y cropped by ind=5/side.
    x = jax.random.normal(kx, (2, 3, 26, 26), jnp.float32)
    y = jax.random.normal(ky, (2, 3, 26, 26), jnp.float32)

    fwd = jax.jit(generator_forward)
    out = jax.block_until_ready(fwd(x, y, params))
    assert out.shape == (2, 3, 16, 16), out.shape

    ref = ref_forward(x, y, params)
    max_err = float(jnp.max(jnp.abs(out - ref)))
    if max_err > 2e-3:
        raise AssertionError(f"Pallas output mismatch vs reference: max_err={max_err}")

    print("KERNEL_OK")
</pallas_src>

<mosaic_0001>
module attributes {stable_mosaic.version = 11 : i64} {
  func.func @kernel(%arg0: i32, %arg1: memref<8x1408xf32, #tpu.memory_space<vmem>>, %arg2: memref<4x8x72xf32, #tpu.memory_space<vmem>>, %arg3: memref<4x8x2xf32, #tpu.memory_space<vmem>>, %arg4: memref<3x73xf32, #tpu.memory_space<vmem>>, %arg5: memref<3x1408xf32, #tpu.memory_space<vmem>>, %arg6: memref<4x1408xf32, #tpu.memory_space<vmem>>, %arg7: memref<3x1408xf32, #tpu.memory_space<vmem>>) attributes {dimension_semantics = [#tpu.dimension_semantics<arbitrary>], iteration_bounds = array<i64: 1>, scalar_prefetch = 0 : i64, scratch_operands = 0 : i64, tpu.core_type = #tpu.core_type<tc>, window_params = [{pipeline_mode = #tpu.pipeline_mode<synchronous>, transform_indices = @transform_0, window_bounds = array<i64: 8, 1408>}, {pipeline_mode = #tpu.pipeline_mode<synchronous>, transform_indices = @transform_1, window_bounds = array<i64: 4, 8, 72>}, {pipeline_mode = #tpu.pipeline_mode<synchronous>, transform_indices = @transform_2, window_bounds = array<i64: 4, 8, 2>}, {pipeline_mode = #tpu.pipeline_mode<synchronous>, transform_indices = @transform_3, window_bounds = array<i64: 3, 73>}, {pipeline_mode = #tpu.pipeline_mode<synchronous>, transform_indices = @transform_4, window_bounds = array<i64: 3, 1408>}, {pipeline_mode = #tpu.pipeline_mode<synchronous>, transform_indices = @transform_5, window_bounds = array<i64: 4, 1408>}, {pipeline_mode = #tpu.pipeline_mode<synchronous>, transform_indices = @transform_6, window_bounds = array<i64: 3, 1408>}]} {
    %c0 = arith.constant 0 : index
    %c0_0 = arith.constant 0 : index
    %0 = vector.load %arg1[%c0, %c0_0] : memref<8x1408xf32, #tpu.memory_space<vmem>>, vector<8x1408xf32>
    %c0_1 = arith.constant 0 : index
    %c0_2 = arith.constant 0 : index
    %c0_3 = arith.constant 0 : index
    %1 = vector.load %arg2[%c0_1, %c0_2, %c0_3] : memref<4x8x72xf32, #tpu.memory_space<vmem>>, vector<4x8x72xf32>
    %c0_4 = arith.constant 0 : index
    %c0_5 = arith.constant 0 : index
    %c0_6 = arith.constant 0 : index
    %2 = vector.load %arg3[%c0_4, %c0_5, %c0_6] : memref<4x8x2xf32, #tpu.memory_space<vmem>>, vector<4x8x2xf32>
    %c0_7 = arith.constant 0 : index
    %c0_8 = arith.constant 0 : index
    %3 = vector.load %arg6[%c0_7, %c0_8] : memref<4x1408xf32, #tpu.memory_space<vmem>>, vector<4x1408xf32>
    %4 = vector.extract_strided_slice %0 {offsets = [0, 1], sizes = [8, 1407], strides = [1, 1]} : vector<8x1408xf32> to vector<8x1407xf32>
    %5 = vector.extract_strided_slice %0 {offsets = [0, 0], sizes = [8, 1], strides = [1, 1]} : vector<8x1408xf32> to vector<8x1xf32>
    %6 = tpu.concatenate %4, %5 in 1 : vector<8x1407xf32>, vector<8x1xf32> -> vector<8x1408xf32>
    %7 = vector.extract_strided_slice %0 {offsets = [0, 2], sizes = [8, 1406], strides = [1, 1]} : vector<8x1408xf32> to vector<8x1406xf32>
    %8 = vector.extract_strided_slice %0 {offsets = [0, 0], sizes = [8, 2], strides = [1, 1]} : vector<8x1408xf32> to vector<8x2xf32>
    %9 = tpu.concatenate %7, %8 in 1 : vector<8x1406xf32>, vector<8x2xf32> -> vector<8x1408xf32>
    %10 = vector.extract_strided_slice %0 {offsets = [0, 26], sizes = [8, 1382], strides = [1, 1]} : vector<8x1408xf32> to vector<8x1382xf32>
    %11 = vector.extract_strided_slice %0 {offsets = [0, 0], sizes = [8, 26], strides = [1, 1]} : vector<8x1408xf32> to vector<8x26xf32>
    %12 = tpu.concatenate %10, %11 in 1 : vector<8x1382xf32>, vector<8x26xf32> -> vector<8x1408xf32>
    %13 = vector.extract_strided_slice %0 {offsets = [0, 27], sizes = [8, 1381], strides = [1, 1]} : vector<8x1408xf32> to vector<8x1381xf32>
    %14 = vector.extract_strided_slice %0 {offsets = [0, 0], sizes = [8, 27], strides = [1, 1]} : vector<8x1408xf32> to vector<8x27xf32>
    %15 = tpu.concatenate %13, %14 in 1 : vector<8x1381xf32>, vector<8x27xf32> -> vector<8x1408xf32>
    %16 = vector.extract_strided_slice %0 {offsets = [0, 28], sizes = [8, 1380], strides = [1, 1]} : vector<8x1408xf32> to vector<8x1380xf32>
    %17 = vector.extract_strided_slice %0 {offsets = [0, 0], sizes = [8, 28], strides = [1, 1]} : vector<8x1408xf32> to vector<8x28xf32>
    %18 = tpu.concatenate %16, %17 in 1 : vector<8x1380xf32>, vector<8x28xf32> -> vector<8x1408xf32>
    %19 = vector.extract_strided_slice %0 {offsets = [0, 52], sizes = [8, 1356], strides = [1, 1]} : vector<8x1408xf32> to vector<8x1356xf32>
    %20 = vector.extract_strided_slice %0 {offsets = [0, 0], sizes = [8, 52], strides = [1, 1]} : vector<8x1408xf32> to vector<8x52xf32>
    %21 = tpu.concatenate %19, %20 in 1 : vector<8x1356xf32>, vector<8x52xf32> -> vector<8x1408xf32>
    %22 = vector.extract_strided_slice %0 {offsets = [0, 53], sizes = [8, 1355], strides = [1, 1]} : vector<8x1408xf32> to vector<8x1355xf32>
    %23 = vector.extract_strided_slice %0 {offsets = [0, 0], sizes = [8, 53], strides = [1, 1]} : vector<8x1408xf32> to vector<8x53xf32>
    %24 = tpu.concatenate %22, %23 in 1 : vector<8x1355xf32>, vector<8x53xf32> -> vector<8x1408xf32>
    %25 = vector.extract_strided_slice %0 {offsets = [0, 54], sizes = [8, 1354], strides = [1, 1]} : vector<8x1408xf32> to vector<8x1354xf32>
    %26 = vector.extract_strided_slice %0 {offsets = [0, 0], sizes = [8, 54], strides = [1, 1]} : vector<8x1408xf32> to vector<8x54xf32>
    %27 = tpu.concatenate %25, %26 in 1 : vector<8x1354xf32>, vector<8x54xf32> -> vector<8x1408xf32>
    %28 = tpu.concatenate %0, %6, %9, %12, %15, %18, %21, %24, %27 in 0 : vector<8x1408xf32>, vector<8x1408xf32>, vector<8x1408xf32>, vector<8x1408xf32>, vector<8x1408xf32>, vector<8x1408xf32>, vector<8x1408xf32>, vector<8x1408xf32>, vector<8x1408xf32> -> vector<72x1408xf32>
    %29 = vector.extract_strided_slice %1 {offsets = [0, 0, 0], sizes = [1, 8, 72], strides = [1, 1, 1]} : vector<4x8x72xf32> to vector<1x8x72xf32>
    %30 = vector.shape_cast %29 : vector<1x8x72xf32> to vector<8x72xf32>
    %cst = arith.constant dense<0.000000e+00> : vector<8x1408xf32>
    %31 = tpu.matmul %30, %28, %cst {dimension_numbers = #tpu.dot_dimension_numbers<[1], [0], [0], [1], [0, 0, 1, 1], [], []>} : vector<8x72xf32>, vector<72x1408xf32>, vector<8x1408xf32> -> vector<8x1408xf32>
    %32 = vector.extract_strided_slice %3 {offsets = [0, 0], sizes = [1, 1408], strides = [1, 1]} : vector<4x1408xf32> to vector<1x1408xf32>
    %33 = vector.broadcast %32 : vector<1x1408xf32> to vector<8x1408xf32>
    %34 = arith.mulf %31, %33 : vector<8x1408xf32>
    %cst_9 = arith.constant dense<0.000000e+00> : vector<8xf32>
    %35 = vector.multi_reduction <add>, %34, %cst_9 [1] : vector<8x1408xf32> to vector<8xf32>
    %36 = vector.shape_cast %35 : vector<8xf32> to vector<8x1xf32>
    %37 = arith.mulf %34, %34 : vector<8x1408xf32>
    %cst_10 = arith.constant dense<0.000000e+00> : vector<8xf32>
    %38 = vector.multi_reduction <add>, %37, %cst_10 [1] : vector<8x1408xf32> to vector<8xf32>
    %39 = vector.shape_cast %38 : vector<8xf32> to vector<8x1xf32>
    %cst_11 = arith.constant 8.68055562E-4 : f32
    %40 = vector.broadcast %cst_11 : f32 to vector<8x1xf32>
    %41 = arith.mulf %36, %40 : vector<8x1xf32>
    %cst_12 = arith.constant 8.68055562E-4 : f32
    %42 = vector.broadcast %cst_12 : f32 to vector<8x1xf32>
    %43 = arith.mulf %39, %42 : vector<8x1xf32>
    %44 = arith.mulf %41, %41 : vector<8x1xf32>
    %45 = arith.subf %43, %44 : vector<8x1xf32>
    %cst_13 = arith.constant 0.000000e+00 : f32
    %46 = vector.broadcast %cst_13 : f32 to vector<8x1xf32>
    %47 = arith.maximumf %45, %46 : vector<8x1xf32>
    %48 = vector.extract_strided_slice %2 {offsets = [0, 0, 0], sizes = [1, 8, 1], strides = [1, 1, 1]} : vector<4x8x2xf32> to vector<1x8x1xf32>
    %49 = vector.shape_cast %48 : vector<1x8x1xf32> to vector<8x1xf32>
    %cst_14 = arith.constant 9.99999974E-6 : f32
    %50 = vector.broadcast %cst_14 : f32 to vector<8x1xf32>
    %51 = arith.addf %47, %50 : vector<8x1xf32>
    %52 = math.rsqrt %51 : vector<8x1xf32>
    %53 = arith.mulf %49, %52 : vector<8x1xf32>
    %54 = vector.extract_strided_slice %2 {offsets = [0, 0, 1], sizes = [1, 8, 1], strides = [1, 1, 1]} : vector<4x8x2xf32> to vector<1x8x1xf32>
    %55 = vector.shape_cast %54 : vector<1x8x1xf32> to vector<8x1xf32>
    %56 = arith.mulf %41, %53 : vector<8x1xf32>
    %57 = arith.subf %55, %56 : vector<8x1xf32>
    %58 = vector.broadcast %53 : vector<8x1xf32> to vector<8x1408xf32>
    %59 = arith.mulf %31, %58 : vector<8x1408xf32>
    %60 = vector.broadcast %57 : vector<8x1xf32> to vector<8x1408xf32>
    %61 = arith.addf %59, %60 : vector<8x1408xf32>
    %cst_15 = arith.constant 2.000000e-01 : f32
    %62 = vector.broadcast %cst_15 : f32 to vector<8x1408xf32>
    %63 = arith.mulf %62, %61 : vector<8x1408xf32>
    %64 = arith.maximumf %61, %63 : vector<8x1408xf32>
    %65 = vector.extract_strided_slice %64 {offsets = [0, 1], sizes = [8, 1407], strides = [1, 1]} : vector<8x1408xf32> to vector<8x1407xf32>
    %66 = vector.extract_strided_slice %64 {offsets = [0, 0], sizes = [8, 1], strides = [1, 1]} : vector<8x1408xf32> to vector<8x1xf32>
    %67 = tpu.concatenate %65, %66 in 1 : vector<8x1407xf32>, vector<8x1xf32> -> vector<8x1408xf32>
    %68 = vector.extract_strided_slice %64 {offsets = [0, 2], sizes = [8, 1406], strides = [1, 1]} : vector<8x1408xf32> to vector<8x1406xf32>
    %69 = vector.extract_strided_slice %64 {offsets = [0, 0], sizes = [8, 2], strides = [1, 1]} : vector<8x1408xf32> to vector<8x2xf32>
    %70 = tpu.concatenate %68, %69 in 1 : vector<8x1406xf32>, vector<8x2xf32> -> vector<8x1408xf32>
    %71 = vector.extract_strided_slice %64 {offsets = [0, 26], sizes = [8, 1382], strides = [1, 1]} : vector<8x1408xf32> to vector<8x1382xf32>
    %72 = vector.extract_strided_slice %64 {offsets = [0, 0], sizes = [8, 26], strides = [1, 1]} : vector<8x1408xf32> to vector<8x26xf32>
    %73 = tpu.concatenate %71, %72 in 1 : vector<8x1382xf32>, vector<8x26xf32> -> vector<8x1408xf32>
    %74 = vector.extract_strided_slice %64 {offsets = [0, 27], sizes = [8, 1381], strides = [1, 1]} : vector<8x1408xf32> to vector<8x1381xf32>
    %75 = vector.extract_strided_slice %64 {offsets = [0, 0], sizes = [8, 27], strides = [1, 1]} : vector<8x1408xf32> to vector<8x27xf32>
    %76 = tpu.concatenate %74, %75 in 1 : vector<8x1381xf32>, vector<8x27xf32> -> vector<8x1408xf32>
    %77 = vector.extract_strided_slice %64 {offsets = [0, 28], sizes = [8, 1380], strides = [1, 1]} : vector<8x1408xf32> to vector<8x1380xf32>
    %78 = vector.extract_strided_slice %64 {offsets = [0, 0], sizes = [8, 28], strides = [1, 1]} : vector<8x1408xf32> to vector<8x28xf32>
    %79 = tpu.concatenate %77, %78 in 1 : vector<8x1380xf32>, vector<8x28xf32> -> vector<8x1408xf32>
    %80 = vector.extract_strided_slice %64 {offsets = [0, 52], sizes = [8, 1356], strides = [1, 1]} : vector<8x1408xf32> to vector<8x1356xf32>
    %81 = vector.extract_strided_slice %64 {offsets = [0, 0], sizes = [8, 52], strides = [1, 1]} : vector<8x1408xf32> to vector<8x52xf32>
    %82 = tpu.concatenate %80, %81 in 1 : vector<8x1356xf32>, vector<8x52xf32> -> vector<8x1408xf32>
    %83 = vector.extract_strided_slice %64 {offsets = [0, 53], sizes = [8, 1355], strides = [1, 1]} : vector<8x1408xf32> to vector<8x1355xf32>
    %84 = vector.extract_strided_slice %64 {offsets = [0, 0], sizes = [8, 53], strides = [1, 1]} : vector<8x1408xf32> to vector<8x53xf32>
    %85 = tpu.concatenate %83, %84 in 1 : vector<8x1355xf32>, vector<8x53xf32> -> vector<8x1408xf32>
    %86 = vector.extract_strided_slice %64 {offsets = [0, 54], sizes = [8, 1354], strides = [1, 1]} : vector<8x1408xf32> to vector<8x1354xf32>
    %87 = vector.extract_strided_slice %64 {offsets = [0, 0], sizes = [8, 54], strides = [1, 1]} : vector<8x1408xf32> to vector<8x54xf32>
    %88 = tpu.concatenate %86, %87 in 1 : vector<8x1354xf32>, vector<8x54xf32> -> vector<8x1408xf32>
    %89 = tpu.concatenate %64, %67, %70, %73, %76, %79, %82, %85, %88 in 0 : vector<8x1408xf32>, vector<8x1408xf32>, vector<8x1408xf32>, vector<8x1408xf32>, vector<8x1408xf32>, vector<8x1408xf32>, vector<8x1408xf32>, vector<8x1408xf32>, vector<8x1408xf32> -> vector<72x1408xf32>
    %90 = vector.extract_strided_slice %1 {offsets = [1, 0, 0], sizes = [1, 8, 72], strides = [1, 1, 1]} : vector<4x8x72xf32> to vector<1x8x72xf32>
    %91 = vector.shape_cast %90 : vector<1x8x72xf32> to vector<8x72xf32>
    %cst_16 = arith.constant dense<0.000000e+00> : vector<8x1408xf32>
    %92 = tpu.matmul %91, %89, %cst_16 {dimension_numbers = #tpu.dot_dimension_numbers<[1], [0], [0], [1], [0, 0, 1, 1], [], []>} : vector<8x72xf32>, vector<72x1408xf32>, vector<8x1408xf32> -> vector<8x1408xf32>
    %93 = vector.extract_strided_slice %3 {offsets = [1, 0], sizes = [1, 1408], strides = [1, 1]} : vector<4x1408xf32> to vector<1x1408xf32>
    %94 = vector.broadcast %93 : vector<1x1408xf32> to vector<8x1408xf32>
    %95 = arith.mulf %92, %94 : vector<8x1408xf32>
    %cst_17 = arith.constant dense<0.000000e+00> : vector<8xf32>
    %96 = vector.multi_reduction <add>, %95, %cst_17 [1] : vector<8x1408xf32> to vector<8xf32>
    %97 = vector.shape_cast %96 : vector<8xf32> to vector<8x1xf32>
    %98 = arith.mulf %95, %95 : vector<8x1408xf32>
    %cst_18 = arith.constant dense<0.000000e+00> : vector<8xf32>
    %99 = vector.multi_reduction <add>, %98, %cst_18 [1] : vector<8x1408xf32> to vector<8xf32>
    %100 = vector.shape_cast %99 : vector<8xf32> to vector<8x1xf32>
    %cst_19 = arith.constant 0.00103305781 : f32
    %101 = vector.broadcast %cst_19 : f32 to vector<8x1xf32>
    %102 = arith.mulf %97, %101 : vector<8x1xf32>
    %cst_20 = arith.constant 0.00103305781 : f32
    %103 = vector.broadcast %cst_20 : f32 to vector<8x1xf32>
    %104 = arith.mulf %100, %103 : vector<8x1xf32>
    %105 = arith.mulf %102, %102 : vector<8x1xf32>
    %106 = arith.subf %104, %105 : vector<8x1xf32>
    %cst_21 = arith.constant 0.000000e+00 : f32
    %107 = vector.broadcast %cst_21 : f32 to vector<8x1xf32>
    %108 = arith.maximumf %106, %107 : vector<8x1xf32>
    %109 = vector.extract_strided_slice %2 {offsets = [1, 0, 0], sizes = [1, 8, 1], strides = [1, 1, 1]} : vector<4x8x2xf32> to vector<1x8x1xf32>
    %110 = vector.shape_cast %109 : vector<1x8x1xf32> to vector<8x1xf32>
    %cst_22 = arith.constant 9.99999974E-6 : f32
    %111 = vector.broadcast %cst_22 : f32 to vector<8x1xf32>
    %112 = arith.addf %108, %111 : vector<8x1xf32>
    %113 = math.rsqrt %112 : vector<8x1xf32>
    %114 = arith.mulf %110, %113 : vector<8x1xf32>
    %115 = vector.extract_strided_slice %2 {offsets = [1, 0, 1], sizes = [1, 8, 1], strides = [1, 1, 1]} : vector<4x8x2xf32> to vector<1x8x1xf32>
    %116 = vector.shape_cast %115 : vector<1x8x1xf32> to vector<8x1xf32>
    %117 = arith.mulf %102, %114 : vector<8x1xf32>
    %118 = arith.subf %116, %117 : vector<8x1xf32>
    %119 = vector.broadcast %114 : vector<8x1xf32> to vector<8x1408xf32>
    %120 = arith.mulf %92, %119 : vector<8x1408xf32>
    %121 = vector.broadcast %118 : vector<8x1xf32> to vector<8x1408xf32>
    %122 = arith.addf %120, %121 : vector<8x1408xf32>
    %cst_23 = arith.constant 2.000000e-01 : f32
    %123 = vector.broadcast %cst_23 : f32 to vector<8x1408xf32>
    %124 = arith.mulf %123, %122 : vector<8x1408xf32>
    %125 = arith.maximumf %122, %124 : vector<8x1408xf32>
    %126 = vector.extract_strided_slice %125 {offsets = [0, 1], sizes = [8, 1407], strides = [1, 1]} : vector<8x1408xf32> to vector<8x1407xf32>
    %127 = vector.extract_strided_slice %125 {offsets = [0, 0], sizes = [8, 1], strides = [1, 1]} : vector<8x1408xf32> to vector<8x1xf32>
    %128 = tpu.concatenate %126, %127 in 1 : vector<8x1407xf32>, vector<8x1xf32> -> vector<8x1408xf32>
    %129 = vector.extract_strided_slice %125 {offsets = [0, 2], sizes = [8, 1406], strides = [1, 1]} : vector<8x1408xf32> to vector<8x1406xf32>
    %130 = vector.extract_strided_slice %125 {offsets = [0, 0], sizes = [8, 2], strides = [1, 1]} : vector<8x1408xf32> to vector<8x2xf32>
    %131 = tpu.concatenate %129, %130 in 1 : vector<8x1406xf32>, vector<8x2xf32> -> vector<8x1408xf32>
    %132 = vector.extract_strided_slice %125 {offsets = [0, 26], sizes = [8, 1382], strides = [1, 1]} : vector<8x1408xf32> to vector<8x1382xf32>
    %133 = vector.extract_strided_slice %125 {offsets = [0, 0], sizes = [8, 26], strides = [1, 1]} : vector<8x1408xf32> to vector<8x26xf32>
    %134 = tpu.concatenate %132, %133 in 1 : vector<8x1382xf32>, vector<8x26xf32> -> vector<8x1408xf32>
    %135 = vector.extract_strided_slice %125 {offsets = [0, 27], sizes = [8, 1381], strides = [1, 1]} : vector<8x1408xf32> to vector<8x1381xf32>
    %136 = vector.extract_strided_slice %125 {offsets = [0, 0], sizes = [8, 27], strides = [1, 1]} : vector<8x1408xf32> to vector<8x27xf32>
    %137 = tpu.concatenate %135, %136 in 1 : vector<8x1381xf32>, vector<8x27xf32> -> vector<8x1408xf32>
    %138 = vector.extract_strided_slice %125 {offsets = [0, 28], sizes = [8, 1380], strides = [1, 1]} : vector<8x1408xf32> to vector<8x1380xf32>
    %139 = vector.extract_strided_slice %125 {offsets = [0, 0], sizes = [8, 28], strides = [1, 1]} : vector<8x1408xf32> to vector<8x28xf32>
    %140 = tpu.concatenate %138, %139 in 1 : vector<8x1380xf32>, vector<8x28xf32> -> vector<8x1408xf32>
    %141 = vector.extract_strided_slice %125 {offsets = [0, 52], sizes = [8, 1356], strides = [1, 1]} : vector<8x1408xf32> to vector<8x1356xf32>
    %142 = vector.extract_strided_slice %125 {offsets = [0, 0], sizes = [8, 52], strides = [1, 1]} : vector<8x1408xf32> to vector<8x52xf32>
    %143 = tpu.concatenate %141, %142 in 1 : vector<8x1356xf32>, vector<8x52xf32> -> vector<8x1408xf32>
    %144 = vector.extract_strided_slice %125 {offsets = [0, 53], sizes = [8, 1355], strides = [1, 1]} : vector<8x1408xf32> to vector<8x1355xf32>
    %145 = vector.extract_strided_slice %125 {offsets = [0, 0], sizes = [8, 53], strides = [1, 1]} : vector<8x1408xf32> to vector<8x53xf32>
    %146 = tpu.concatenate %144, %145 in 1 : vector<8x1355xf32>, vector<8x53xf32> -> vector<8x1408xf32>
    %147 = vector.extract_strided_slice %125 {offsets = [0, 54], sizes = [8, 1354], strides = [1, 1]} : vector<8x1408xf32> to vector<8x1354xf32>
    %148 = vector.extract_strided_slice %125 {offsets = [0, 0], sizes = [8, 54], strides = [1, 1]} : vector<8x1408xf32> to vector<8x54xf32>
    %149 = tpu.concatenate %147, %148 in 1 : vector<8x1354xf32>, vector<8x54xf32> -> vector<8x1408xf32>
    %150 = tpu.concatenate %125, %128, %131, %134, %137, %140, %143, %146, %149 in 0 : vector<8x1408xf32>, vector<8x1408xf32>, vector<8x1408xf32>, vector<8x1408xf32>, vector<8x1408xf32>, vector<8x1408xf32>, vector<8x1408xf32>, vector<8x1408xf32>, vector<8x1408xf32> -> vector<72x1408xf32>
    %151 = vector.extract_strided_slice %1 {offsets = [2, 0, 0], sizes = [1, 8, 72], strides = [1, 1, 1]} : vector<4x8x72xf32> to vector<1x8x72xf32>
    %152 = vector.shape_cast %151 : vector<1x8x72xf32> to vector<8x72xf32>
    %cst_24 = arith.constant dense<0.000000e+00> : vector<8x1408xf32>
    %153 = tpu.matmul %152, %150, %cst_24 {dimension_numbers = #tpu.dot_dimension_numbers<[1], [0], [0], [1], [0, 0, 1, 1], [], []>} : vector<8x72xf32>, vector<72x1408xf32>, vector<8x1408xf32> -> vector<8x1408xf32>
    %154 = vector.extract_strided_slice %3 {offsets = [2, 0], sizes = [1, 1408], strides = [1, 1]} : vector<4x1408xf32> to vector<1x1408xf32>
    %155 = vector.broadcast %154 : vector<1x1408xf32> to vector<8x1408xf32>
    %156 = arith.mulf %153, %155 : vector<8x1408xf32>
    %cst_25 = arith.constant dense<0.000000e+00> : vector<8xf32>
    %157 = vector.multi_reduction <add>, %156, %cst_25 [1] : vector<8x1408xf32> to vector<8xf32>
    %158 = vector.shape_cast %157 : vector<8xf32> to vector<8x1xf32>
    %159 = arith.mulf %156, %156 : vector<8x1408xf32>
    %cst_26 = arith.constant dense<0.000000e+00> : vector<8xf32>
    %160 = vector.multi_reduction <add>, %159, %cst_26 [1] : vector<8x1408xf32> to vector<8xf32>
    %161 = vector.shape_cast %160 : vector<8xf32> to vector<8x1xf32>
    %cst_27 = arith.constant 1.250000e-03 : f32
    %162 = vector.broadcast %cst_27 : f32 to vector<8x1xf32>
    %163 = arith.mulf %158, %162 : vector<8x1xf32>
    %cst_28 = arith.constant 1.250000e-03 : f32
    %164 = vector.broadcast %cst_28 : f32 to vector<8x1xf32>
    %165 = arith.mulf %161, %164 : vector<8x1xf32>
    %166 = arith.mulf %163, %163 : vector<8x1xf32>
    %167 = arith.subf %165, %166 : vector<8x1xf32>
    %cst_29 = arith.constant 0.000000e+00 : f32
    %168 = vector.broadcast %cst_29 : f32 to vector<8x1xf32>
    %169 = arith.maximumf %167, %168 : vector<8x1xf32>
    %170 = vector.extract_strided_slice %2 {offsets = [2, 0, 0], sizes = [1, 8, 1], strides = [1, 1, 1]} : vector<4x8x2xf32> to vector<1x8x1xf32>
    %171 = vector.shape_cast %170 : vector<1x8x1xf32> to vector<8x1xf32>
    %cst_30 = arith.constant 9.99999974E-6 : f32
    %172 = vector.broadcast %cst_30 : f32 to vector<8x1xf32>
    %173 = arith.addf %169, %172 : vector<8x1xf32>
    %174 = math.rsqrt %173 : vector<8x1xf32>
    %175 = arith.mulf %171, %174 : vector<8x1xf32>
    %176 = vector.extract_strided_slice %2 {offsets = [2, 0, 1], sizes = [1, 8, 1], strides = [1, 1, 1]} : vector<4x8x2xf32> to vector<1x8x1xf32>
    %177 = vector.shape_cast %176 : vector<1x8x1xf32> to vector<8x1xf32>
    %178 = arith.mulf %163, %175 : vector<8x1xf32>
    %179 = arith.subf %177, %178 : vector<8x1xf32>
    %180 = vector.broadcast %175 : vector<8x1xf32> to vector<8x1408xf32>
    %181 = arith.mulf %153, %180 : vector<8x1408xf32>
    %182 = vector.broadcast %179 : vector<8x1xf32> to vector<8x1408xf32>
    %183 = arith.addf %181, %182 : vector<8x1408xf32>
    %cst_31 = arith.constant 2.000000e-01 : f32
    %184 = vector.broadcast %cst_31 : f32 to vector<8x1408xf32>
    %185 = arith.mulf %184, %183 : vector<8x1408xf32>
    %186 = arith.maximumf %183, %185 : vector<8x1408xf32>
    %187 = vector.extract_strided_slice %186 {offsets = [0, 1], sizes = [8, 1407], strides = [1, 1]} : vector<8x1408xf32> to vector<8x1407xf32>
    %188 = vector.extract_strided_slice %186 {offsets = [0, 0], sizes = [8, 1], strides = [1, 1]} : vector<8x1408xf32> to vector<8x1xf32>
    %189 = tpu.concatenate %187, %188 in 1 : vector<8x1407xf32>, vector<8x1xf32> -> vector<8x1408xf32>
    %190 = vector.extract_strided_slice %186 {offsets = [0, 2], sizes = [8, 1406], strides = [1, 1]} : vector<8x1408xf32> to vector<8x1406xf32>
    %191 = vector.extract_strided_slice %186 {offsets = [0, 0], sizes = [8, 2], strides = [1, 1]} : vector<8x1408xf32> to vector<8x2xf32>
    %192 = tpu.concatenate %190, %191 in 1 : vector<8x1406xf32>, vector<8x2xf32> -> vector<8x1408xf32>
    %193 = vector.extract_strided_slice %186 {offsets = [0, 26], sizes = [8, 1382], strides = [1, 1]} : vector<8x1408xf32> to vector<8x1382xf32>
    %194 = vector.extract_strided_slice %186 {offsets = [0, 0], sizes = [8, 26], strides = [1, 1]} : vector<8x1408xf32> to vector<8x26xf32>
    %195 = tpu.concatenate %193, %194 in 1 : vector<8x1382xf32>, vector<8x26xf32> -> vector<8x1408xf32>
    %196 = vector.extract_strided_slice %186 {offsets = [0, 27], sizes = [8, 1381], strides = [1, 1]} : vector<8x1408xf32> to vector<8x1381xf32>
    %197 = vector.extract_strided_slice %186 {offsets = [0, 0], sizes = [8, 27], strides = [1, 1]} : vector<8x1408xf32> to vector<8x27xf32>
    %198 = tpu.concatenate %196, %197 in 1 : vector<8x1381xf32>, vector<8x27xf32> -> vector<8x1408xf32>
    %199 = vector.extract_strided_slice %186 {offsets = [0, 28], sizes = [8, 1380], strides = [1, 1]} : vector<8x1408xf32> to vector<8x1380xf32>
    %200 = vector.extract_strided_slice %186 {offsets = [0, 0], sizes = [8, 28], strides = [1, 1]} : vector<8x1408xf32> to vector<8x28xf32>
    %201 = tpu.concatenate %199, %200 in 1 : vector<8x1380xf32>, vector<8x28xf32> -> vector<8x1408xf32>
    %202 = vector.extract_strided_slice %186 {offsets = [0, 52], sizes = [8, 1356], strides = [1, 1]} : vector<8x1408xf32> to vector<8x1356xf32>
    %203 = vector.extract_strided_slice %186 {offsets = [0, 0], sizes = [8, 52], strides = [1, 1]} : vector<8x1408xf32> to vector<8x52xf32>
    %204 = tpu.concatenate %202, %203 in 1 : vector<8x1356xf32>, vector<8x52xf32> -> vector<8x1408xf32>
    %205 = vector.extract_strided_slice %186 {offsets = [0, 53], sizes = [8, 1355], strides = [1, 1]} : vector<8x1408xf32> to vector<8x1355xf32>
    %206 = vector.extract_strided_slice %186 {offsets = [0, 0], sizes = [8, 53], strides = [1, 1]} : vector<8x1408xf32> to vector<8x53xf32>
    %207 = tpu.concatenate %205, %206 in 1 : vector<8x1355xf32>, vector<8x53xf32> -> vector<8x1408xf32>
    %208 = vector.extract_strided_slice %186 {offsets = [0, 54], sizes = [8, 1354], strides = [1, 1]} : vector<8x1408xf32> to vector<8x1354xf32>
    %209 = vector.extract_strided_slice %186 {offsets = [0, 0], sizes = [8, 54], strides = [1, 1]} : vector<8x1408xf32> to vector<8x54xf32>
    %210 = tpu.concatenate %208, %209 in 1 : vector<8x1354xf32>, vector<8x54xf32> -> vector<8x1408xf32>
    %211 = tpu.concatenate %186, %189, %192, %195, %198, %201, %204, %207, %210 in 0 : vector<8x1408xf32>, vector<8x1408xf32>, vector<8x1408xf32>, vector<8x1408xf32>, vector<8x1408xf32>, vector<8x1408xf32>, vector<8x1408xf32>, vector<8x1408xf32>, vector<8x1408xf32> -> vector<72x1408xf32>
    %212 = vector.extract_strided_slice %1 {offsets = [3, 0, 0], sizes = [1, 8, 72], strides = [1, 1, 1]} : vector<4x8x72xf32> to vector<1x8x72xf32>
    %213 = vector.shape_cast %212 : vector<1x8x72xf32> to vector<8x72xf32>
    %cst_32 = arith.constant dense<0.000000e+00> : vector<8x1408xf32>
    %214 = tpu.matmul %213, %211, %cst_32 {dimension_numbers = #tpu.dot_dimension_numbers<[1], [0], [0], [1], [0, 0, 1, 1], [], []>} : vector<8x72xf32>, vector<72x1408xf32>, vector<8x1408xf32> -> vector<8x1408xf32>
    %215 = vector.extract_strided_slice %3 {offsets = [3, 0], sizes = [1, 1408], strides = [1, 1]} : vector<4x1408xf32> to vector<1x1408xf32>
    %216 = vector.broadcast %215 : vector<1x1408xf32> to vector<8x1408xf32>
    %217 = arith.mulf %214, %216 : vector<8x1408xf32>
    %cst_33 = arith.constant dense<0.000000e+00> : vector<8xf32>
    %218 = vector.multi_reduction <add>, %217, %cst_33 [1] : vector<8x1408xf32> to vector<8xf32>
    %219 = vector.shape_cast %218 : vector<8xf32> to vector<8x1xf32>
    %220 = arith.mulf %217, %217 : vector<8x1408xf32>
    %cst_34 = arith.constant dense<0.000000e+00> : vector<8xf32>
    %221 = vector.multi_reduction <add>, %220, %cst_34 [1] : vector<8x1408xf32> to vector<8xf32>
    %222 = vector.shape_cast %221 : vector<8xf32> to vector<8x1xf32>
    %cst_35 = arith.constant 0.00154320989 : f32
    %223 = vector.broadcast %cst_35 : f32 to vector<8x1xf32>
    %224 = arith.mulf %219, %223 : vector<8x1xf32>
    %cst_36 = arith.constant 0.00154320989 : f32
    %225 = vector.broadcast %cst_36 : f32 to vector<8x1xf32>
    %226 = arith.mulf %222, %225 : vector<8x1xf32>
    %227 = arith.mulf %224, %224 : vector<8x1xf32>
    %228 = arith.subf %226, %227 : vector<8x1xf32>
    %cst_37 = arith.constant 0.000000e+00 : f32
    %229 = vector.broadcast %cst_37 : f32 to vector<8x1xf32>
    %230 = arith.maximumf %228, %229 : vector<8x1xf32>
    %231 = vector.extract_strided_slice %2 {offsets = [3, 0, 0], sizes = [1, 8, 1], strides = [1, 1, 1]} : vector<4x8x2xf32> to vector<1x8x1xf32>
    %232 = vector.shape_cast %231 : vector<1x8x1xf32> to vector<8x1xf32>
    %cst_38 = arith.constant 9.99999974E-6 : f32
    %233 = vector.broadcast %cst_38 : f32 to vector<8x1xf32>
    %234 = arith.addf %230, %233 : vector<8x1xf32>
    %235 = math.rsqrt %234 : vector<8x1xf32>
    %236 = arith.mulf %232, %235 : vector<8x1xf32>
    %237 = vector.extract_strided_slice %2 {offsets = [3, 0, 1], sizes = [1, 8, 1], strides = [1, 1, 1]} : vector<4x8x2xf32> to vector<1x8x1xf32>
    %238 = vector.shape_cast %237 : vector<1x8x1xf32> to vector<8x1xf32>
    %239 = arith.mulf %224, %236 : vector<8x1xf32>
    %240 = arith.subf %238, %239 : vector<8x1xf32>
    %241 = vector.broadcast %236 : vector<8x1xf32> to vector<8x1408xf32>
    %242 = arith.mulf %214, %241 : vector<8x1408xf32>
    %243 = vector.broadcast %240 : vector<8x1xf32> to vector<8x1408xf32>
    %244 = arith.addf %242, %243 : vector<8x1408xf32>
    %cst_39 = arith.constant 2.000000e-01 : f32
    %245 = vector.broadcast %cst_39 : f32 to vector<8x1408xf32>
    %246 = arith.mulf %245, %244 : vector<8x1408xf32>
    %247 = arith.maximumf %244, %246 : vector<8x1408xf32>
    %248 = vector.extract_strided_slice %247 {offsets = [0, 1], sizes = [8, 1407], strides = [1, 1]} : vector<8x1408xf32> to vector<8x1407xf32>
    %249 = vector.extract_strided_slice %247 {offsets = [0, 0], sizes = [8, 1], strides = [1, 1]} : vector<8x1408xf32> to vector<8x1xf32>
    %250 = tpu.concatenate %248, %249 in 1 : vector<8x1407xf32>, vector<8x1xf32> -> vector<8x1408xf32>
    %251 = vector.extract_strided_slice %247 {offsets = [0, 2], sizes = [8, 1406], strides = [1, 1]} : vector<8x1408xf32> to vector<8x1406xf32>
    %252 = vector.extract_strided_slice %247 {offsets = [0, 0], sizes = [8, 2], strides = [1, 1]} : vector<8x1408xf32> to vector<8x2xf32>
    %253 = tpu.concatenate %251, %252 in 1 : vector<8x1406xf32>, vector<8x2xf32> -> vector<8x1408xf32>
    %254 = vector.extract_strided_slice %247 {offsets = [0, 26], sizes = [8, 1382], strides = [1, 1]} : vector<8x1408xf32> to vector<8x1382xf32>
    %255 = vector.extract_strided_slice %247 {offsets = [0, 0], sizes = [8, 26], strides = [1, 1]} : vector<8x1408xf32> to vector<8x26xf32>
    %256 = tpu.concatenate %254, %255 in 1 : vector<8x1382xf32>, vector<8x26xf32> -> vector<8x1408xf32>
    %257 = vector.extract_strided_slice %247 {offsets = [0, 27], sizes = [8, 1381], strides = [1, 1]} : vector<8x1408xf32> to vector<8x1381xf32>
    %258 = vector.extract_strided_slice %247 {offsets = [0, 0], sizes = [8, 27], strides = [1, 1]} : vector<8x1408xf32> to vector<8x27xf32>
    %259 = tpu.concatenate %257, %258 in 1 : vector<8x1381xf32>, vector<8x27xf32> -> vector<8x1408xf32>
    %260 = vector.extract_strided_slice %247 {offsets = [0, 28], sizes = [8, 1380], strides = [1, 1]} : vector<8x1408xf32> to vector<8x1380xf32>
    %261 = vector.extract_strided_slice %247 {offsets = [0, 0], sizes = [8, 28], strides = [1, 1]} : vector<8x1408xf32> to vector<8x28xf32>
    %262 = tpu.concatenate %260, %261 in 1 : vector<8x1380xf32>, vector<8x28xf32> -> vector<8x1408xf32>
    %263 = vector.extract_strided_slice %247 {offsets = [0, 52], sizes = [8, 1356], strides = [1, 1]} : vector<8x1408xf32> to vector<8x1356xf32>
    %264 = vector.extract_strided_slice %247 {offsets = [0, 0], sizes = [8, 52], strides = [1, 1]} : vector<8x1408xf32> to vector<8x52xf32>
    %265 = tpu.concatenate %263, %264 in 1 : vector<8x1356xf32>, vector<8x52xf32> -> vector<8x1408xf32>
    %266 = vector.extract_strided_slice %247 {offsets = [0, 53], sizes = [8, 1355], strides = [1, 1]} : vector<8x1408xf32> to vector<8x1355xf32>
    %267 = vector.extract_strided_slice %247 {offsets = [0, 0], sizes = [8, 53], strides = [1, 1]} : vector<8x1408xf32> to vector<8x53xf32>
    %268 = tpu.concatenate %266, %267 in 1 : vector<8x1355xf32>, vector<8x53xf32> -> vector<8x1408xf32>
    %269 = vector.extract_strided_slice %247 {offsets = [0, 54], sizes = [8, 1354], strides = [1, 1]} : vector<8x1408xf32> to vector<8x1354xf32>
    %270 = vector.extract_strided_slice %247 {offsets = [0, 0], sizes = [8, 54], strides = [1, 1]} : vector<8x1408xf32> to vector<8x54xf32>
    %271 = tpu.concatenate %269, %270 in 1 : vector<8x1354xf32>, vector<8x54xf32> -> vector<8x1408xf32>
    %272 = tpu.concatenate %247, %250, %253, %256, %259, %262, %265, %268, %271 in 0 : vector<8x1408xf32>, vector<8x1408xf32>, vector<8x1408xf32>, vector<8x1408xf32>, vector<8x1408xf32>, vector<8x1408xf32>, vector<8x1408xf32>, vector<8x1408xf32>, vector<8x1408xf32> -> vector<72x1408xf32>
    %c0_40 = arith.constant 0 : index
    %c0_41 = arith.constant 0 : index
    %273 = vector.load %arg4[%c0_40, %c0_41] : memref<3x73xf32, #tpu.memory_space<vmem>>, vector<3x73xf32>
    %274 = vector.extract_strided_slice %273 {offsets = [0, 0], sizes = [3, 72], strides = [1, 1]} : vector<3x73xf32> to vector<3x72xf32>
    %cst_42 = arith.constant dense<0.000000e+00> : vector<3x1408xf32>
    %275 = tpu.matmul %274, %272, %cst_42 {dimension_numbers = #tpu.dot_dimension_numbers<[1], [0], [0], [1], [0, 0, 1, 1], [], []>} : vector<3x72xf32>, vector<72x1408xf32>, vector<3x1408xf32> -> vector<3x1408xf32>
    %276 = vector.extract_strided_slice %273 {offsets = [0, 72], sizes = [3, 1], strides = [1, 1]} : vector<3x73xf32> to vector<3x1xf32>
    %277 = vector.broadcast %276 : vector<3x1xf32> to vector<3x1408xf32>
    %278 = arith.addf %275, %277 : vector<3x1408xf32>
    %279 = math.tanh %278 : vector<3x1408xf32>
    %c0_43 = arith.constant 0 : index
    %c0_44 = arith.constant 0 : index
    %280 = vector.load %arg5[%c0_43, %c0_44] : memref<3x1408xf32, #tpu.memory_space<vmem>>, vector<3x1408xf32>
    %281 = arith.addf %279, %280 : vector<3x1408xf32>
    %c0_45 = arith.constant 0 : index
    %c0_46 = arith.constant 0 : index
    %282 = vector.load %arg7[%c0_45, %c0_46] : memref<3x1408xf32, #tpu.memory_space<vmem>>, vector<3x1408xf32>
    tpu.vector_store %arg7[%c0_45, %c0_46], %281 {strides = array<i32>} : memref<3x1408xf32, #tpu.memory_space<vmem>>, vector<3x1408xf32>,
    return
  }
  func.func @transform_0(%arg0: i32) -> (i32, i32) {
    %c0_i32 = arith.constant 0 : i32
    %c0_i32_0 = arith.constant 0 : i32
    %c0_i32_1 = arith.constant 0 : i32
    return %c0_i32, %c0_i32_0 : i32, i32
  }
  func.func @transform_1(%arg0: i32) -> (i32, i32, i32) {
    %c0_i32 = arith.constant 0 : i32
    %c0_i32_0 = arith.constant 0 : i32
    %c0_i32_1 = arith.constant 0 : i32
    %c0_i32_2 = arith.constant 0 : i32
    return %c0_i32, %c0_i32_0, %c0_i32_1 : i32, i32, i32
  }
  func.func @transform_2(%arg0: i32) -> (i32, i32, i32) {
    %c0_i32 = arith.constant 0 : i32
    %c0_i32_0 = arith.constant 0 : i32
    %c0_i32_1 = arith.constant 0 : i32
    %c0_i32_2 = arith.constant 0 : i32
    return %c0_i32, %c0_i32_0, %c0_i32_1 : i32, i32, i32
  }
  func.func @transform_3(%arg0: i32) -> (i32, i32) {
    %c0_i32 = arith.constant 0 : i32
    %c0_i32_0 = arith.constant 0 : i32
    %c0_i32_1 = arith.constant 0 : i32
    return %c0_i32, %c0_i32_0 : i32, i32
  }
  func.func @transform_4(%arg0: i32) -> (i32, i32) {
    %c0_i32 = arith.constant 0 : i32
    %c0_i32_0 = arith.constant 0 : i32
    %c0_i32_1 = arith.constant 0 : i32
    return %c0_i32, %c0_i32_0 : i32, i32
  }
  func.func @transform_5(%arg0: i32) -> (i32, i32) {
    %c0_i32 = arith.constant 0 : i32
    %c0_i32_0 = arith.constant 0 : i32
    %c0_i32_1 = arith.constant 0 : i32
    return %c0_i32, %c0_i32_0 : i32, i32
  }
  func.func @transform_6(%arg0: i32) -> (i32, i32) {
    %c0_i32 = arith.constant 0 : i32
    %c0_i32_0 = arith.constant 0 : i32
    %c0_i32_1 = arith.constant 0 : i32
    return %c0_i32, %c0_i32_0 : i32, i32
  }
}

</mosaic_0001>

<llo_original>
// kernel: generator_forward.1
$region0: #{generator_forward.1}
  #allocation0 [shape = 'u32[]', space=smem, size = 0x4, offset = 0x4, fixed_abs, tag = 'smem constant byte address 0x4 - core index']
  #allocation1 [shape = 'u32[144,128]{1,0:T(1,128)}', space=vmem, size = 0x12000, scoped, tag = 'internal scratch']
  %s0 = inlined_call_operand.vmem [shape: f32[8,1408], index: 0, kind: input, shape index: {}]
  %s1 = inlined_call_operand.vmem [shape: f32[4,8,72], index: 1, kind: input, shape index: {}]
  %s2 = inlined_call_operand.vmem [shape: f32[4,8,2], index: 2, kind: input, shape index: {}]
  %s3 = inlined_call_operand.vmem [shape: f32[3,73], index: 3, kind: input, shape index: {}]
  %s4 = inlined_call_operand.vmem [shape: f32[3,1408], index: 4, kind: input, shape index: {}]
  %s5 = inlined_call_operand.vmem [shape: f32[4,1408], index: 5, kind: input, shape index: {}]
  %s6 = inlined_call_operand.vmem [shape: f32[3,1408], index: 6, kind: output, shape index: {}]
  %s7 = sld [smem:[#allocation0]]
  $region34: #{generator_forward.1} parent=0
    _
  %s9 = ssub.s32 1, %s7
  %s10 = scalar_select 0, %s9, %s7
  // Predicated region
  $region2: #{generator_forward.1} parent=0 // pred_check
    _
  $region3: #{generator_forward.1} parent=0 // pred_check_branch
    %12 = sbr.rel (0) target = $region5
  $region4: #{generator_forward.1} parent=0 // pred_region
    _
  $region5: #{generator_forward.1} parent=0 // pred_fallthru
    _
  // Predicated region
  $region6: #{generator_forward.1} parent=0 // pred_check
    _
  $region7: #{generator_forward.1} parent=0 // pred_check_branch
    %14 = sbr.rel (0) target = $region9
  $region8: #{generator_forward.1} parent=0 // pred_region
    _
  $region9: #{generator_forward.1} parent=0 // pred_fallthru
    _
  // Predicated region
  $region10: #{generator_forward.1} parent=0 // pred_check
    _
  $region11: #{generator_forward.1} parent=0 // pred_check_branch
    %16 = sbr.rel (0) target = $region13
  $region12: #{generator_forward.1} parent=0 // pred_region
    _
  $region13: #{generator_forward.1} parent=0 // pred_fallthru
    _
  // Predicated region
  $region14: #{generator_forward.1} parent=0 // pred_check
    _
  $region15: #{generator_forward.1} parent=0 // pred_check_branch
    %18 = sbr.rel (0) target = $region17
  $region16: #{generator_forward.1} parent=0 // pred_region
    _
  $region17: #{generator_forward.1} parent=0 // pred_fallthru
    _
  // Predicated region
  $region18: #{generator_forward.1} parent=0 // pred_check
    _
  $region19: #{generator_forward.1} parent=0 // pred_check_branch
    %20 = sbr.rel (0) target = $region21
  $region20: #{generator_forward.1} parent=0 // pred_region
    _
  $region21: #{generator_forward.1} parent=0 // pred_fallthru
    _
  // Predicated region
  $region22: #{generator_forward.1} parent=0 // pred_check
    _
  $region23: #{generator_forward.1} parent=0 // pred_check_branch
    %22 = sbr.rel (0) target = $region25
  $region24: #{generator_forward.1} parent=0 // pred_region
    _
  $region25: #{generator_forward.1} parent=0 // pred_fallthru
    _
  %v23 = vld [vmem:[%s0] sm:$0xff]
  %v24 = vld [vmem:[%s0 + $0x8] sm:$0xff]
  %v25 = vld [vmem:[%s0 + $0x10] sm:$0xff]
  %v26 = vld [vmem:[%s0 + $0x18] sm:$0xff]
  %v27 = vld [vmem:[%s0 + $0x20] sm:$0xff]
  %v28 = vld [vmem:[%s0 + $0x28] sm:$0xff]
  %v29 = vld [vmem:[%s0 + $0x30] sm:$0xff]
  %v30 = vld [vmem:[%s0 + $0x38] sm:$0xff]
  %v31 = vld [vmem:[%s0 + $0x40] sm:$0xff]
  %v32 = vld [vmem:[%s0 + $0x48] sm:$0xff]
  %v33 = vld [vmem:[%s0 + $0x50] sm:$0xff]
  %v34 = vld [vmem:[%s1] sm:$0xff]
  %v35 = vld [vmem:[%s1 + $0x8] sm:$0xff]
  %v36 = vld [vmem:[%s1 + $0x10] sm:$0xff]
  %v37 = vld [vmem:[%s1 + $0x18] sm:$0xff]
  %v38 = vld [vmem:[%s2] sm:$0xff]
  %v39 = vld [vmem:[%s2 + $0x8] sm:$0xff]
  %v40 = vld [vmem:[%s2 + $0x10] sm:$0xff]
  %v41 = vld [vmem:[%s2 + $0x18] sm:$0xff]
  %v42 = vld [vmem:[%s5] sm:$0xff]
  %v43 = vld [vmem:[%s5 + $0x8] sm:$0xff]
  %v44 = vld [vmem:[%s5 + $0x10] sm:$0xff]
  %v45 = vld [vmem:[%s5 + $0x18] sm:$0xff]
  %v46 = vld [vmem:[%s5 + $0x20] sm:$0xff]
  %v47 = vld [vmem:[%s5 + $0x28] sm:$0xf]
  %59 = vrot.lane.b32.xlu0 %v23, 127
  %v60 = vpop.permute.xlu0 %59
  %61 = vrot.lane.b32.xlu0 %v24, 127
  %v62 = vpop.permute.xlu0 %61
  %63 = vrot.lane.b32.xlu0 %v25, 127
  %v64 = vpop.permute.xlu0 %63
  %65 = vrot.lane.b32.xlu0 %v26, 127
  %v66 = vpop.permute.xlu0 %65
  %67 = vrot.lane.b32.xlu0 %v27, 127
  %v68 = vpop.permute.xlu0 %67
  %69 = vrot.lane.b32.xlu0 %v28, 127
  %v70 = vpop.permute.xlu0 %69
  %71 = vrot.lane.b32.xlu0 %v29, 127
  %v72 = vpop.permute.xlu0 %71
  %73 = vrot.lane.b32.xlu0 %v30, 127
  %v74 = vpop.permute.xlu0 %73
  %75 = vrot.lane.b32.xlu0 %v31, 127
  %v76 = vpop.permute.xlu0 %75
  %77 = vrot.lane.b32.xlu0 %v32, 127
  %v78 = vpop.permute.xlu0 %77
  %79 = vrot.lane.b32.xlu0 %v33, 127
  %v80 = vpop.permute.xlu0 %79
  %vm81 = vcmask 1039360
  %v82 = vsel %vm81, %v60, %v62
  %v83 = vsel %vm81, %v62, %v64
  %v84 = vsel %vm81, %v64, %v66
  %v85 = vsel %vm81, %v66, %v68
  %v86 = vsel %vm81, %v68, %v70
  %v87 = vsel %vm81, %v70, %v72
  %v88 = vsel %vm81, %v72, %v74
  %v89 = vsel %vm81, %v74, %v76
  %v90 = vsel %vm81, %v76, %v78
  %v91 = vsel %vm81, %v78, %v80
  %v104 = vsel %vm81, %v80, %v60
  %105 = vrot.lane.b32.xlu0 %v23, 126
  %v106 = vpop.permute.xlu0 %105
  %107 = vrot.lane.b32.xlu0 %v24, 126
  %v108 = vpop.permute.xlu0 %107
  %109 = vrot.lane.b32.xlu0 %v25, 126
  %v110 = vpop.permute.xlu0 %109
  %111 = vrot.lane.b32.xlu0 %v26, 126
  %v112 = vpop.permute.xlu0 %111
  %113 = vrot.lane.b32.xlu0 %v27, 126
  %v114 = vpop.permute.xlu0 %113
  %115 = vrot.lane.b32.xlu0 %v28, 126
  %v116 = vpop.permute.xlu0 %115
  %117 = vrot.lane.b32.xlu0 %v29, 126
  %v118 = vpop.permute.xlu0 %117
  %119 = vrot.lane.b32.xlu0 %v30, 126
  %v120 = vpop.permute.xlu0 %119
  %121 = vrot.lane.b32.xlu0 %v31, 126
  %v122 = vpop.permute.xlu0 %121
  %123 = vrot.lane.b32.xlu0 %v32, 126
  %v124 = vpop.permute.xlu0 %123
  %125 = vrot.lane.b32.xlu0 %v33, 126
  %v126 = vpop.permute.xlu0 %125
  %vm127 = vcmask 1031168
  %v128 = vsel %vm127, %v106, %v108
  %v129 = vsel %vm127, %v108, %v110
  %v130 = vsel %vm127, %v110, %v112
  %v131 = vsel %vm127, %v112, %v114
  %v132 = vsel %vm127, %v114, %v116
  %v133 = vsel %vm127, %v116, %v118
  %v134 = vsel %vm127, %v118, %v120
  %v135 = vsel %vm127, %v120, %v122
  %v136 = vsel %vm127, %v122, %v124
  %v137 = vsel %vm127, %v124, %v126
  %v150 = vsel %vm127, %v126, %v106
  %151 = vrot.lane.b32.xlu0 %v23, 102
  %v152 = vpop.permute.xlu0 %151
  %153 = vrot.lane.b32.xlu0 %v24, 102
  %v154 = vpop.permute.xlu0 %153
  %155 = vrot.lane.b32.xlu0 %v25, 102
  %v156 = vpop.permute.xlu0 %155
  %157 = vrot.lane.b32.xlu0 %v26, 102
  %v158 = vpop.permute.xlu0 %157
  %159 = vrot.lane.b32.xlu0 %v27, 102
  %v160 = vpop.permute.xlu0 %159
  %161 = vrot.lane.b32.xlu0 %v28, 102
  %v162 = vpop.permute.xlu0 %161
  %163 = vrot.lane.b32.xlu0 %v29, 102
  %v164 = vpop.permute.xlu0 %163
  %165 = vrot.lane.b32.xlu0 %v30, 102
  %v166 = vpop.permute.xlu0 %165
  %167 = vrot.lane.b32.xlu0 %v31, 102
  %v168 = vpop.permute.xlu0 %167
  %169 = vrot.lane.b32.xlu0 %v32, 102
  %v170 = vpop.permute.xlu0 %169
  %171 = vrot.lane.b32.xlu0 %v33, 102
  %v172 = vpop.permute.xlu0 %171
  %vm173 = vcmask 834560
  %v174 = vsel %vm173, %v152, %v154
  %v175 = vsel %vm173, %v154, %v156
  %v176 = vsel %vm173, %v156, %v158
  %v177 = vsel %vm173, %v158, %v160
  %v178 = vsel %vm173, %v160, %v162
  %v179 = vsel %vm173, %v162, %v164
  %v180 = vsel %vm173, %v164, %v166
  %v181 = vsel %vm173, %v166, %v168
  %v182 = vsel %vm173, %v168, %v170
  %v183 = vsel %vm173, %v170, %v172
  %v196 = vsel %vm173, %v172, %v152
  %197 = vrot.lane.b32.xlu0 %v23, 101
  %v198 = vpop.permute.xlu0 %197
  %199 = vrot.lane.b32.xlu0 %v24, 101
  %v200 = vpop.permute.xlu0 %199
  %201 = vrot.lane.b32.xlu0 %v25, 101
  %v202 = vpop.permute.xlu0 %201
  %203 = vrot.lane.b32.xlu0 %v26, 101
  %v204 = vpop.permute.xlu0 %203
  %205 = vrot.lane.b32.xlu0 %v27, 101
  %v206 = vpop.permute.xlu0 %205
  %207 = vrot.lane.b32.xlu0 %v28, 101
  %v208 = vpop.permute.xlu0 %207
  %209 = vrot.lane.b32.xlu0 %v29, 101
  %v210 = vpop.permute.xlu0 %209
  %211 = vrot.lane.b32.xlu0 %v30, 101
  %v212 = vpop.permute.xlu0 %211
  %213 = vrot.lane.b32.xlu0 %v31, 101
  %v214 = vpop.permute.xlu0 %213
  %215 = vrot.lane.b32.xlu0 %v32, 101
  %v216 = vpop.permute.xlu0 %215
  %217 = vrot.lane.b32.xlu0 %v33, 101
  %v218 = vpop.permute.xlu0 %217
  %vm219 = vcmask 826368
  %v220 = vsel %vm219, %v198, %v200
  %v221 = vsel %vm219, %v200, %v202
  %v222 = vsel %vm219, %v202, %v204
  %v223 = vsel %vm219, %v204, %v206
  %v224 = vsel %vm219, %v206, %v208
  %v225 = vsel %vm219, %v208, %v210
  %v226 = vsel %vm219, %v210, %v212
  %v227 = vsel %vm219, %v212, %v214
  %v228 = vsel %vm219, %v214, %v216
  %v229 = vsel %vm219, %v216, %v218
  %v242 = vsel %vm219, %v218, %v198
  %243 = vrot.lane.b32.xlu0 %v23, 100
  %v244 = vpop.permute.xlu0 %243
  %245 = vrot.lane.b32.xlu0 %v24, 100
  %v246 = vpop.permute.xlu0 %245
  %247 = vrot.lane.b32.xlu0 %v25, 100
  %v248 = vpop.permute.xlu0 %247
  %249 = vrot.lane.b32.xlu0 %v26, 100
  %v250 = vpop.permute.xlu0 %249
  %251 = vrot.lane.b32.xlu0 %v27, 100
  %v252 = vpop.permute.xlu0 %251
  %253 = vrot.lane.b32.xlu0 %v28, 100
  %v254 = vpop.permute.xlu0 %253
  %255 = vrot.lane.b32.xlu0 %v29, 100
  %v256 = vpop.permute.xlu0 %255
  %257 = vrot.lane.b32.xlu0 %v30, 100
  %v258 = vpop.permute.xlu0 %257
  %259 = vrot.lane.b32.xlu0 %v31, 100
  %v260 = vpop.permute.xlu0 %259
  %261 = vrot.lane.b32.xlu0 %v32, 100
  %v262 = vpop.permute.xlu0 %261
  %263 = vrot.lane.b32.xlu0 %v33, 100
  %v264 = vpop.permute.xlu0 %263
  %vm265 = vcmask 818176
  %v266 = vsel %vm265, %v244, %v246
  %v267 = vsel %vm265, %v246, %v248
  %v268 = vsel %vm265, %v248, %v250
  %v269 = vsel %vm265, %v250, %v252
  %v270 = vsel %vm265, %v252, %v254
  %v271 = vsel %vm265, %v254, %v256
  %v272 = vsel %vm265, %v256, %v258
  %v273 = vsel %vm265, %v258, %v260
  %v274 = vsel %vm265, %v260, %v262
  %v275 = vsel %vm265, %v262, %v264
  %v288 = vsel %vm265, %v264, %v244
  %289 = vrot.lane.b32.xlu0 %v23, 76
  %v290 = vpop.permute.xlu0 %289
  %291 = vrot.lane.b32.xlu0 %v24, 76
  %v292 = vpop.permute.xlu0 %291
  %293 = vrot.lane.b32.xlu0 %v25, 76
  %v294 = vpop.permute.xlu0 %293
  %295 = vrot.lane.b32.xlu0 %v26, 76
  %v296 = vpop.permute.xlu0 %295
  %297 = vrot.lane.b32.xlu0 %v27, 76
  %v298 = vpop.permute.xlu0 %297
  %299 = vrot.lane.b32.xlu0 %v28, 76
  %v300 = vpop.permute.xlu0 %299
  %301 = vrot.lane.b32.xlu0 %v29, 76
  %v302 = vpop.permute.xlu0 %301
  %303 = vrot.lane.b32.xlu0 %v30, 76
  %v304 = vpop.permute.xlu0 %303
  %305 = vrot.lane.b32.xlu0 %v31, 76
  %v306 = vpop.permute.xlu0 %305
  %307 = vrot.lane.b32.xlu0 %v32, 76
  %v308 = vpop.permute.xlu0 %307
  %309 = vrot.lane.b32.xlu0 %v33, 76
  %v310 = vpop.permute.xlu0 %309
  %vm311 = vcmask 621568
  %v312 = vsel %vm311, %v290, %v292
  %v313 = vsel %vm311, %v292, %v294
  %v314 = vsel %vm311, %v294, %v296
  %v315 = vsel %vm311, %v296, %v298
  %v316 = vsel %vm311, %v298, %v300
  %v317 = vsel %vm311, %v300, %v302
  %v318 = vsel %vm311, %v302, %v304
  %v319 = vsel %vm311, %v304, %v306
  %v320 = vsel %vm311, %v306, %v308
  %v321 = vsel %vm311, %v308, %v310
  %v334 = vsel %vm311, %v310, %v290
  %335 = vrot.lane.b32.xlu0 %v23, 75
  %v336 = vpop.permute.xlu0 %335
  %337 = vrot.lane.b32.xlu0 %v24, 75
  %v338 = vpop.permute.xlu0 %337
  %339 = vrot.lane.b32.xlu0 %v25, 75
  %v340 = vpop.permute.xlu0 %339
  %341 = vrot.lane.b32.xlu0 %v26, 75
  %v342 = vpop.permute.xlu0 %341
  %343 = vrot.lane.b32.xlu0 %v27, 75
  %v344 = vpop.permute.xlu0 %343
  %345 = vrot.lane.b32.xlu0 %v28, 75
  %v346 = vpop.permute.xlu0 %345
  %347 = vrot.lane.b32.xlu0 %v29, 75
  %v348 = vpop.permute.xlu0 %347
  %349 = vrot.lane.b32.xlu0 %v30, 75
  %v350 = vpop.permute.xlu0 %349
  %351 = vrot.lane.b32.xlu0 %v31, 75
  %v352 = vpop.permute.xlu0 %351
  %353 = vrot.lane.b32.xlu0 %v32, 75
  %v354 = vpop.permute.xlu0 %353
  %355 = vrot.lane.b32.xlu0 %v33, 75
  %v356 = vpop.permute.xlu0 %355
  %vm357 = vcmask 613376
  %v358 = vsel %vm357, %v336, %v338
  %v359 = vsel %vm357, %v338, %v340
  %v360 = vsel %vm357, %v340, %v342
  %v361 = vsel %vm357, %v342, %v344
  %v362 = vsel %vm357, %v344, %v346
  %v363 = vsel %vm357, %v346, %v348
  %v364 = vsel %vm357, %v348, %v350
  %v365 = vsel %vm357, %v350, %v352
  %v366 = vsel %vm357, %v352, %v354
  %v367 = vsel %vm357, %v354, %v356
  %v380 = vsel %vm357, %v356, %v336
  %381 = vrot.lane.b32.xlu0 %v23, 74
  %v382 = vpop.permute.xlu0 %381
  %383 = vrot.lane.b32.xlu0 %v24, 74
  %v384 = vpop.permute.xlu0 %383
  %385 = vrot.lane.b32.xlu0 %v25, 74
  %v386 = vpop.permute.xlu0 %385
  %387 = vrot.lane.b32.xlu0 %v26, 74
  %v388 = vpop.permute.xlu0 %387
  %389 = vrot.lane.b32.xlu0 %v27, 74
  %v390 = vpop.permute.xlu0 %389
  %391 = vrot.lane.b32.xlu0 %v28, 74
  %v392 = vpop.permute.xlu0 %391
  %393 = vrot.lane.b32.xlu0 %v29, 74
  %v394 = vpop.permute.xlu0 %393
  %395 = vrot.lane.b32.xlu0 %v30, 74
  %v396 = vpop.permute.xlu0 %395
  %397 = vrot.lane.b32.xlu0 %v31, 74
  %v398 = vpop.permute.xlu0 %397
  %399 = vrot.lane.b32.xlu0 %v32, 74
  %v400 = vpop.permute.xlu0 %399
  %401 = vrot.lane.b32.xlu0 %v33, 74
  %v402 = vpop.permute.xlu0 %401
  %vm403 = vcmask 605184
  %v404 = vsel %vm403, %v382, %v384
  %v405 = vsel %vm403, %v384, %v386
  %v406 = vsel %vm403, %v386, %v388
  %v407 = vsel %vm403, %v388, %v390
  %v408 = vsel %vm403, %v390, %v392
  %v409 = vsel %vm403, %v392, %v394
  %v410 = vsel %vm403, %v394, %v396
  %v411 = vsel %vm403, %v396, %v398
  %v412 = vsel %vm403, %v398, %v400
  %v413 = vsel %vm403, %v400, %v402
  %v426 = vsel %vm403, %v402, %v382
  %vm427 = vcmask 588800
  %v429 = vsel %vm427, %v34, 0
  %431 = vmatprep.subr.mxu0 0.0
  %432 = vmatpush1.msra.mxu0 0.0
  %433 = vmatprep.subr.mxu0 0.0
  %434 = vmatpush1.msra.mxu0 0.0
  %435 = vmatprep.subr.mxu0 0.0
  %436 = vmatpush1.msra.mxu0 0.0
  %437 = vmatprep.subr.mxu0 0.0
  %438 = vmatpush1.msra.mxu0 0.0
  %439 = vmatprep.subr.mxu0 0.0
  %440 = vmatpush1.msra.mxu0 0.0
  %441 = vmatprep.subr.mxu0 0.0
  %442 = vmatpush1.msra.mxu0 0.0
  %443 = vmatprep.subr.mxu0 0.0
  %444 = vmatpush1.msra.mxu0 0.0
  %445 = vmatprep.subr.mxu0 %v405
  %446 = vmatpush1.msra.mxu0 %v404
  %447 = vmatprep.subr.mxu0 %v359
  %448 = vmatpush1.msra.mxu0 %v358
  %449 = vmatprep.subr.mxu0 %v313
  %450 = vmatpush1.msra.mxu0 %v312
  %451 = vmatprep.subr.mxu0 %v267
  %452 = vmatpush1.msra.mxu0 %v266
  %453 = vmatprep.subr.mxu0 %v221
  %454 = vmatpush1.msra.mxu0 %v220
  %455 = vmatprep.subr.mxu0 %v175
  %456 = vmatpush1.msra.mxu0 %v174
  %457 = vmatprep.subr.mxu0 %v129
  %458 = vmatpush1.msra.mxu0 %v128
  %459 = vmatprep.subr.mxu0 %v83
  %460 = vmatpush1.msra.mxu0 %v82
  %461 = vmatprep.subr.mxu0 %v24
  %462 = vmatpush1.msra.mxu0 %v23
  %463 = vmatprep.subr.mxu0 0.0
  %464 = vmatpush2.msra.mxu0 0.0
  %465 = vmatprep.subr.mxu0 0.0
  %466 = vmatpush2.msra.mxu0 0.0
  %467 = vmatprep.subr.mxu0 0.0
  %468 = vmatpush2.msra.mxu0 0.0
  %469 = vmatprep.subr.mxu0 0.0
  %470 = vmatpush2.msra.mxu0 0.0
  %471 = vmatprep.subr.mxu0 0.0
  %472 = vmatpush2.msra.mxu0 0.0
  %473 = vmatprep.subr.mxu0 0.0
  %474 = vmatpush2.msra.mxu0 0.0
  %475 = vmatprep.subr.mxu0 0.0
  %476 = vmatpush2.msra.mxu0 0.0
  %477 = vmatprep.subr.mxu0 0.0
  %478 = vmatpush2.msra.mxu0 0.0
  %479 = vmatprep.subr.mxu0 0.0
  %480 = vmatpush2.msra.mxu0 0.0
  %481 = vmatprep.subr.mxu0 0.0
  %482 = vmatpush2.msra.mxu0 0.0
  %483 = vmatprep.subr.mxu0 0.0
  %484 = vmatpush2.msra.mxu0 0.0
  %485 = vmatprep.subr.mxu0 0.0
  %486 = vmatpush2.msra.mxu0 0.0
  %487 = vmatprep.subr.mxu0 0.0
  %488 = vmatpush2.msra.mxu0 0.0
  %489 = vmatprep.subr.mxu0 0.0
  %490 = vmatpush2.msra.mxu0 0.0
  %491 = vmatprep.subr.mxu0 0.0
  %492 = vmatpush2.msra.mxu0 0.0
  %493 = vmatprep.subr.mxu0 0.0
  %494 = vmatpush2.msra.mxu0 0.0
  %495 = vmatprep.mubr.f32.mxu0 0.0
  %496 = vmatmul.mubr.f32.gmra.mxu0 %v429
  %v497 = vpop.f32.mrf.mxu0
  %v498 = vadd.f32 0.0, %v497
  %v499 = vpop.f32.mrf.mxu0
  %v500 = vadd.f32 0.0, %v499
  %501 = vdwg.mxu0
  %502 = vmatprep.subr.mxu0 0.0
  %503 = vmatpush1.msra.mxu0 0.0
  %504 = vmatprep.subr.mxu0 0.0
  %505 = vmatpush1.msra.mxu0 0.0
  %506 = vmatprep.subr.mxu0 0.0
  %507 = vmatpush1.msra.mxu0 0.0
  %508 = vmatprep.subr.mxu0 0.0
  %509 = vmatpush1.msra.mxu0 0.0
  %510 = vmatprep.subr.mxu0 0.0
  %511 = vmatpush1.msra.mxu0 0.0
  %512 = vmatprep.subr.mxu0 0.0
  %513 = vmatpush1.msra.mxu0 0.0
  %514 = vmatprep.subr.mxu0 0.0
  %515 = vmatpush1.msra.mxu0 0.0
  %516 = vmatprep.subr.mxu0 %v407
  %517 = vmatpush1.msra.mxu0 %v406
  %518 = vmatprep.subr.mxu0 %v361
  %519 = vmatpush1.msra.mxu0 %v360
  %520 = vmatprep.subr.mxu0 %v315
  %521 = vmatpush1.msra.mxu0 %v314
  %522 = vmatprep.subr.mxu0 %v269
  %523 = vmatpush1.msra.mxu0 %v268
  %524 = vmatprep.subr.mxu0 %v223
  %525 = vmatpush1.msra.mxu0 %v222
  %526 = vmatprep.subr.mxu0 %v177
  %527 = vmatpush1.msra.mxu0 %v176
  %528 = vmatprep.subr.mxu0 %v131
  %529 = vmatpush1.msra.mxu0 %v130
  %530 = vmatprep.subr.mxu0 %v85
  %531 = vmatpush1.msra.mxu0 %v84
  %532 = vmatprep.subr.mxu0 %v26
  %533 = vmatpush1.msra.mxu0 %v25
  %534 = vmatprep.subr.mxu0 0.0
  %535 = vmatpush2.msra.mxu0 0.0
  %536 = vmatprep.subr.mxu0 0.0
  %537 = vmatpush2.msra.mxu0 0.0
  %538 = vmatprep.subr.mxu0 0.0
  %539 = vmatpush2.msra.mxu0 0.0
  %540 = vmatprep.subr.mxu0 0.0
  %541 = vmatpush2.msra.mxu0 0.0
  %542 = vmatprep.subr.mxu0 0.0
  %543 = vmatpush2.msra.mxu0 0.0
  %544 = vmatprep.subr.mxu0 0.0
  %545 = vmatpush2.msra.mxu0 0.0
  %546 = vmatprep.subr.mxu0 0.0
  %547 = vmatpush2.msra.mxu0 0.0
  %548 = vmatprep.subr.mxu0 0.0
  %549 = vmatpush2.msra.mxu0 0.0
  %550 = vmatprep.subr.mxu0 0.0
  %551 = vmatpush2.msra.mxu0 0.0
  %552 = vmatprep.subr.mxu0 0.0
  %553 = vmatpush2.msra.mxu0 0.0
  %554 = vmatprep.subr.mxu0 0.0
  %555 = vmatpush2.msra.mxu0 0.0
  %556 = vmatprep.subr.mxu0 0.0
  %557 = vmatpush2.msra.mxu0 0.0
  %558 = vmatprep.subr.mxu0 0.0
  %559 = vmatpush2.msra.mxu0 0.0
  %560 = vmatprep.subr.mxu0 0.0
  %561 = vmatpush2.msra.mxu0 0.0
  %562 = vmatprep.subr.mxu0 0.0
  %563 = vmatpush2.msra.mxu0 0.0
  %564 = vmatprep.subr.mxu0 0.0
  %565 = vmatpush2.msra.mxu0 0.0
  %566 = vmatprep.mubr.f32.mxu0 0.0
  %567 = vmatmul.mubr.f32.gmra.mxu0 %v429
  %v568 = vpop.f32.mrf.mxu0
  %v569 = vadd.f32 0.0, %v568
  %v570 = vpop.f32.mrf.mxu0
  %v571 = vadd.f32 0.0, %v570
  %572 = vdwg.mxu0
  %573 = vmatprep.subr.mxu0 0.0
  %574 = vmatpush1.msra.mxu0 0.0
  %575 = vmatprep.subr.mxu0 0.0
  %576 = vmatpush1.msra.mxu0 0.0
  %577 = vmatprep.subr.mxu0 0.0
  %578 = vmatpush1.msra.mxu0 0.0
  %579 = vmatprep.subr.mxu0 0.0
  %580 = vmatpush1.msra.mxu0 0.0
  %581 = vmatprep.subr.mxu0 0.0
  %582 = vmatpush1.msra.mxu0 0.0
  %583 = vmatprep.subr.mxu0 0.0
  %584 = vmatpush1.msra.mxu0 0.0
  %585 = vmatprep.subr.mxu0 0.0
  %586 = vmatpush1.msra.mxu0 0.0
  %587 = vmatprep.subr.mxu0 %v409
  %588 = vmatpush1.msra.mxu0 %v408
  %589 = vmatprep.subr.mxu0 %v363
  %590 = vmatpush1.msra.mxu0 %v362
  %591 = vmatprep.subr.mxu0 %v317
  %592 = vmatpush1.msra.mxu0 %v316
  %593 = vmatprep.subr.mxu0 %v271
  %594 = vmatpush1.msra.mxu0 %v270
  %595 = vmatprep.subr.mxu0 %v225
  %596 = vmatpush1.msra.mxu0 %v224
  %597 = vmatprep.subr.mxu0 %v179
  %598 = vmatpush1.msra.mxu0 %v178
  %599 = vmatprep.subr.mxu0 %v133
  %600 = vmatpush1.msra.mxu0 %v132
  %601 = vmatprep.subr.mxu0 %v87
  %602 = vmatpush1.msra.mxu0 %v86
  %603 = vmatprep.subr.mxu0 %v28
  %604 = vmatpush1.msra.mxu0 %v27
  %605 = vmatprep.subr.mxu0 0.0
  %606 = vmatpush2.msra.mxu0 0.0
  %607 = vmatprep.subr.mxu0 0.0
  %608 = vmatpush2.msra.mxu0 0.0
  %609 = vmatprep.subr.mxu0 0.0
  %610 = vmatpush2.msra.mxu0 0.0
  %611 = vmatprep.subr.mxu0 0.0
  %612 = vmatpush2.msra.mxu0 0.0
  %613 = vmatprep.subr.mxu0 0.0
  %614 = vmatpush2.msra.mxu0 0.0
  %615 = vmatprep.subr.mxu0 0.0
  %616 = vmatpush2.msra.mxu0 0.0
  %617 = vmatprep.subr.mxu0 0.0
  %618 = vmatpush2.msra.mxu0 0.0
  %619 = vmatprep.subr.mxu0 0.0
  %620 = vmatpush2.msra.mxu0 0.0
  %621 = vmatprep.subr.mxu0 0.0
  %622 = vmatpush2.msra.mxu0 0.0
  %623 = vmatprep.subr.mxu0 0.0
  %624 = vmatpush2.msra.mxu0 0.0
  %625 = vmatprep.subr.mxu0 0.0
  %626 = vmatpush2.msra.mxu0 0.0
  %627 = vmatprep.subr.mxu0 0.0
  %628 = vmatpush2.msra.mxu0 0.0
  %629 = vmatprep.subr.mxu0 0.0
  %630 = vmatpush2.msra.mxu0 0.0
  %631 = vmatprep.subr.mxu0 0.0
  %632 = vmatpush2.msra.mxu0 0.0
  %633 = vmatprep.subr.mxu0 0.0
  %634 = vmatpush2.msra.mxu0 0.0
  %635 = vmatprep.subr.mxu0 0.0
  %636 = vmatpush2.msra.mxu0 0.0
  %637 = vmatprep.mubr.f32.mxu0 0.0
  %638 = vmatmul.mubr.f32.gmra.mxu0 %v429
  %v639 = vpop.f32.mrf.mxu0
  %v640 = vadd.f32 0.0, %v639
  %v641 = vpop.f32.mrf.mxu0
  %v642 = vadd.f32 0.0, %v641
  %643 = vdwg.mxu0
  %644 = vmatprep.subr.mxu0 0.0
  %645 = vmatpush1.msra.mxu0 0.0
  %646 = vmatprep.subr.mxu0 0.0
  %647 = vmatpush1.msra.mxu0 0.0
  %648 = vmatprep.subr.mxu0 0.0
  %649 = vmatpush1.msra.mxu0 0.0
  %650 = vmatprep.subr.mxu0 0.0
  %651 = vmatpush1.msra.mxu0 0.0
  %652 = vmatprep.subr.mxu0 0.0
  %653 = vmatpush1.msra.mxu0 0.0
  %654 = vmatprep.subr.mxu0 0.0
  %655 = vmatpush1.msra.mxu0 0.0
  %656 = vmatprep.subr.mxu0 0.0
  %657 = vmatpush1.msra.mxu0 0.0
  %658 = vmatprep.subr.mxu0 %v411
  %659 = vmatpush1.msra.mxu0 %v410
  %660 = vmatprep.subr.mxu0 %v365
  %661 = vmatpush1.msra.mxu0 %v364
  %662 = vmatprep.subr.mxu0 %v319
  %663 = vmatpush1.msra.mxu0 %v318
  %664 = vmatprep.subr.mxu0 %v273
  %665 = vmatpush1.msra.mxu0 %v272
  %666 = vmatprep.subr.mxu0 %v227
  %667 = vmatpush1.msra.mxu0 %v226
  %668 = vmatprep.subr.mxu0 %v181
  %669 = vmatpush1.msra.mxu0 %v180
  %670 = vmatprep.subr.mxu0 %v135
  %671 = vmatpush1.msra.mxu0 %v134
  %672 = vmatprep.subr.mxu0 %v89
  %673 = vmatpush1.msra.mxu0 %v88
  %674 = vmatprep.subr.mxu0 %v30
  %675 = vmatpush1.msra.mxu0 %v29
  %676 = vmatprep.subr.mxu0 0.0
  %677 = vmatpush2.msra.mxu0 0.0
  %678 = vmatprep.subr.mxu0 0.0
  %679 = vmatpush2.msra.mxu0 0.0
  %680 = vmatprep.subr.mxu0 0.0
  %681 = vmatpush2.msra.mxu0 0.0
  %682 = vmatprep.subr.mxu0 0.0
  %683 = vmatpush2.msra.mxu0 0.0
  %684 = vmatprep.subr.mxu0 0.0
  %685 = vmatpush2.msra.mxu0 0.0
  %686 = vmatprep.subr.mxu0 0.0
  %687 = vmatpush2.msra.mxu0 0.0
  %688 = vmatprep.subr.mxu0 0.0
  %689 = vmatpush2.msra.mxu0 0.0
  %690 = vmatprep.subr.mxu0 0.0
  %691 = vmatpush2.msra.mxu0 0.0
  %692 = vmatprep.subr.mxu0 0.0
  %693 = vmatpush2.msra.mxu0 0.0
  %694 = vmatprep.subr.mxu0 0.0
  %695 = vmatpush2.msra.mxu0 0.0
  %696 = vmatprep.subr.mxu0 0.0
  %697 = vmatpush2.msra.mxu0 0.0
  %698 = vmatprep.subr.mxu0 0.0
  %699 = vmatpush2.msra.mxu0 0.0
  %700 = vmatprep.subr.mxu0 0.0
  %701 = vmatpush2.msra.mxu0 0.0
  %702 = vmatprep.subr.mxu0 0.0
  %703 = vmatpush2.msra.mxu0 0.0
  %704 = vmatprep.subr.mxu0 0.0
  %705 = vmatpush2.msra.mxu0 0.0
  %706 = vmatprep.subr.mxu0 0.0
  %707 = vmatpush2.msra.mxu0 0.0
  %708 = vmatprep.mubr.f32.mxu0 0.0
  %709 = vmatmul.mubr.f32.gmra.mxu0 %v429
  %v710 = vpop.f32.mrf.mxu0
  %v711 = vadd.f32 0.0, %v710
  %v712 = vpop.f32.mrf.mxu0
  %v713 = vadd.f32 0.0, %v712
  %714 = vdwg.mxu0
  %715 = vmatprep.subr.mxu0 0.0
  %716 = vmatpush1.msra.mxu0 0.0
  %717 = vmatprep.subr.mxu0 0.0
  %718 = vmatpush1.msra.mxu0 0.0
  %719 = vmatprep.subr.mxu0 0.0
  %720 = vmatpush1.msra.mxu0 0.0
  %721 = vmatprep.subr.mxu0 0.0
  %722 = vmatpush1.msra.mxu0 0.0
  %723 = vmatprep.subr.mxu0 0.0
  %724 = vmatpush1.msra.mxu0 0.0
  %725 = vmatprep.subr.mxu0 0.0
  %726 = vmatpush1.msra.mxu0 0.0
  %727 = vmatprep.subr.mxu0 0.0
  %728 = vmatpush1.msra.mxu0 0.0
  %729 = vmatprep.subr.mxu0 %v413
  %730 = vmatpush1.msra.mxu0 %v412
  %731 = vmatprep.subr.mxu0 %v367
  %732 = vmatpush1.msra.mxu0 %v366
  %733 = vmatprep.subr.mxu0 %v321
  %734 = vmatpush1.msra.mxu0 %v320
  %735 = vmatprep.subr.mxu0 %v275
  %736 = vmatpush1.msra.mxu0 %v274
  %737 = vmatprep.subr.mxu0 %v229
  %738 = vmatpush1.msra.mxu0 %v228
  %739 = vmatprep.subr.mxu0 %v183
  %740 = vmatpush1.msra.mxu0 %v182
  %741 = vmatprep.subr.mxu0 %v137
  %742 = vmatpush1.msra.mxu0 %v136
  %743 = vmatprep.subr.mxu0 %v91
  %744 = vmatpush1.msra.mxu0 %v90
  %745 = vmatprep.subr.mxu0 %v32
  %746 = vmatpush1.msra.mxu0 %v31
  %747 = vmatprep.subr.mxu0 0.0
  %748 = vmatpush2.msra.mxu0 0.0
  %749 = vmatprep.subr.mxu0 0.0
  %750 = vmatpush2.msra.mxu0 0.0
  %751 = vmatprep.subr.mxu0 0.0
  %752 = vmatpush2.msra.mxu0 0.0
  %753 = vmatprep.subr.mxu0 0.0
  %754 = vmatpush2.msra.mxu0 0.0
  %755 = vmatprep.subr.mxu0 0.0
  %756 = vmatpush2.msra.mxu0 0.0
  %757 = vmatprep.subr.mxu0 0.0
  %758 = vmatpush2.msra.mxu0 0.0
  %759 = vmatprep.subr.mxu0 0.0
  %760 = vmatpush2.msra.mxu0 0.0
  %761 = vmatprep.subr.mxu0 0.0
  %762 = vmatpush2.msra.mxu0 0.0
  %763 = vmatprep.subr.mxu0 0.0
  %764 = vmatpush2.msra.mxu0 0.0
  %765 = vmatprep.subr.mxu0 0.0
  %766 = vmatpush2.msra.mxu0 0.0
  %767 = vmatprep.subr.mxu0 0.0
  %768 = vmatpush2.msra.mxu0 0.0
  %769 = vmatprep.subr.mxu0 0.0
  %770 = vmatpush2.msra.mxu0 0.0
  %771 = vmatprep.subr.mxu0 0.0
  %772 = vmatpush2.msra.mxu0 0.0
  %773 = vmatprep.subr.mxu0 0.0
  %774 = vmatpush2.msra.mxu0 0.0
  %775 = vmatprep.subr.mxu0 0.0
  %776 = vmatpush2.msra.mxu0 0.0
  %777 = vmatprep.subr.mxu0 0.0
  %778 = vmatpush2.msra.mxu0 0.0
  %779 = vmatprep.mubr.f32.mxu0 0.0
  %780 = vmatmul.mubr.f32.gmra.mxu0 %v429
  %v781 = vpop.f32.mrf.mxu0
  %v782 = vadd.f32 0.0, %v781
  %v783 = vpop.f32.mrf.mxu0
  %v784 = vadd.f32 0.0, %v783
  %785 = vdwg.mxu0
  %786 = vmatprep.subr.mxu0 0.0
  %787 = vmatpush1.msra.mxu0 0.0
  %788 = vmatprep.subr.mxu0 0.0
  %789 = vmatpush1.msra.mxu0 0.0
  %790 = vmatprep.subr.mxu0 0.0
  %791 = vmatpush1.msra.mxu0 0.0
  %792 = vmatprep.subr.mxu0 0.0
  %793 = vmatpush1.msra.mxu0 0.0
  %794 = vmatprep.subr.mxu0 0.0
  %795 = vmatpush1.msra.mxu0 0.0
  %796 = vmatprep.subr.mxu0 0.0
  %797 = vmatpush1.msra.mxu0 0.0
  %798 = vmatprep.subr.mxu0 0.0
  %799 = vmatpush1.msra.mxu0 0.0
  %800 = vmatprep.subr.mxu0 0.0
  %801 = vmatpush1.msra.mxu0 %v426
  %802 = vmatprep.subr.mxu0 0.0
  %803 = vmatpush1.msra.mxu0 %v380
  %804 = vmatprep.subr.mxu0 0.0
  %805 = vmatpush1.msra.mxu0 %v334
  %806 = vmatprep.subr.mxu0 0.0
  %807 = vmatpush1.msra.mxu0 %v288
  %808 = vmatprep.subr.mxu0 0.0
  %809 = vmatpush1.msra.mxu0 %v242
  %810 = vmatprep.subr.mxu0 0.0
  %811 = vmatpush1.msra.mxu0 %v196
  %812 = vmatprep.subr.mxu0 0.0
  %813 = vmatpush1.msra.mxu0 %v150
  %814 = vmatprep.subr.mxu0 0.0
  %815 = vmatpush1.msra.mxu0 %v104
  %816 = vmatprep.subr.mxu0 0.0
  %817 = vmatpush1.msra.mxu0 %v33
  %818 = vmatprep.subr.mxu0 0.0
  %819 = vmatpush2.msra.mxu0 0.0
  %820 = vmatprep.subr.mxu0 0.0
  %821 = vmatpush2.msra.mxu0 0.0
  %822 = vmatprep.subr.mxu0 0.0
  %823 = vmatpush2.msra.mxu0 0.0
  %824 = vmatprep.subr.mxu0 0.0
  %825 = vmatpush2.msra.mxu0 0.0
  %826 = vmatprep.subr.mxu0 0.0
  %827 = vmatpush2.msra.mxu0 0.0
  %828 = vmatprep.subr.mxu0 0.0
  %829 = vmatpush2.msra.mxu0 0.0
  %830 = vmatprep.subr.mxu0 0.0
  %831 = vmatpush2.msra.mxu0 0.0
  %832 = vmatprep.subr.mxu0 0.0
  %833 = vmatpush2.msra.mxu0 0.0
  %834 = vmatprep.subr.mxu0 0.0
  %835 = vmatpush2.msra.mxu0 0.0
  %836 = vmatprep.subr.mxu0 0.0
  %837 = vmatpush2.msra.mxu0 0.0
  %838 = vmatprep.subr.mxu0 0.0
  %839 = vmatpush2.msra.mxu0 0.0
  %840 = vmatprep.subr.mxu0 0.0
  %841 = vmatpush2.msra.mxu0 0.0
  %842 = vmatprep.subr.mxu0 0.0
  %843 = vmatpush2.msra.mxu0 0.0
  %844 = vmatprep.subr.mxu0 0.0
  %845 = vmatpush2.msra.mxu0 0.0
  %846 = vmatprep.subr.mxu0 0.0
  %847 = vmatpush2.msra.mxu0 0.0
  %848 = vmatprep.subr.mxu0 0.0
  %849 = vmatpush2.msra.mxu0 0.0
  %850 = vmatprep.mubr.f32.mxu0 0.0
  %851 = vmatmul.mubr.f32.gmra.mxu0 %v429
  %v852 = vpop.f32.mrf.mxu0
  %v853 = vadd.f32 0.0, %v852
  %v854 = vpop.f32.mrf.mxu0
  %855 = vdwg.mxu0
  %v862 = vlaneseq
  %v863 = vshrl.u32 %v862, 7
  %v864 = vsub.s32 0, %v863
  %v865 = vrot.slane %v42, %v864
  %v866 = vlaneseq
  %v867 = vshrl.u32 %v866, 7
  %v868 = vsub.s32 4, %v867
  %v869 = vrot.slane %v42, %v868
  %v870 = vlaneseq
  %v871 = vshrl.u32 %v870, 7
  %v872 = vsub.s32 0, %v871
  %v873 = vrot.slane %v43, %v872
  %v874 = vlaneseq
  %v875 = vshrl.u32 %v874, 7
  %v876 = vsub.s32 4, %v875
  %v877 = vrot.slane %v43, %v876
  %v878 = vlaneseq
  %v879 = vshrl.u32 %v878, 7
  %v880 = vsub.s32 0, %v879
  %v881 = vrot.slane %v44, %v880
  %v882 = vlaneseq
  %v883 = vshrl.u32 %v882, 7
  %v884 = vsub.s32 4, %v883
  %v885 = vrot.slane %v44, %v884
  %v886 = vlaneseq
  %v887 = vshrl.u32 %v886, 7
  %v888 = vsub.s32 0, %v887
  %v889 = vrot.slane %v45, %v888
  %v890 = vlaneseq
  %v891 = vshrl.u32 %v890, 7
  %v892 = vsub.s32 4, %v891
  %v893 = vrot.slane %v45, %v892
  %v894 = vlaneseq
  %v895 = vshrl.u32 %v894, 7
  %v896 = vsub.s32 0, %v895
  %v897 = vrot.slane %v46, %v896
  %v898 = vlaneseq
  %v899 = vshrl.u32 %v898, 7
  %v900 = vsub.s32 4, %v899
  %v901 = vrot.slane %v46, %v900
  %v902 = vlaneseq
  %v903 = vshrl.u32 %v902, 7
  %v904 = vsub.s32 0, %v903
  %v905 = vrot.slane %v47, %v904
  %v917 = vlaneseq
  %v918 = vshrl.u32 %v917, 7
  %v919 = vsub.s32 0, %v918
  %v920 = vrot.slane %v865, %v919
  %v921 = vlaneseq
  %v922 = vshrl.u32 %v921, 7
  %v923 = vsub.s32 0, %v922
  %v924 = vrot.slane %v869, %v923
  %v925 = vlaneseq
  %v926 = vshrl.u32 %v925, 7
  %v927 = vsub.s32 0, %v926
  %v928 = vrot.slane %v873, %v927
  %v929 = vlaneseq
  %v930 = vshrl.u32 %v929, 7
  %v931 = vsub.s32 0, %v930
  %v932 = vrot.slane %v877, %v931
  %v933 = vlaneseq
  %v934 = vshrl.u32 %v933, 7
  %v935 = vsub.s32 0, %v934
  %v936 = vrot.slane %v881, %v935
  %v937 = vlaneseq
  %v938 = vshrl.u32 %v937, 7
  %v939 = vsub.s32 0, %v938
  %v940 = vrot.slane %v885, %v939
  %v941 = vlaneseq
  %v942 = vshrl.u32 %v941, 7
  %v943 = vsub.s32 0, %v942
  %v944 = vrot.slane %v889, %v943
  %v945 = vlaneseq
  %v946 = vshrl.u32 %v945, 7
  %v947 = vsub.s32 0, %v946
  %v948 = vrot.slane %v893, %v947
  %v949 = vlaneseq
  %v950 = vshrl.u32 %v949, 7
  %v951 = vsub.s32 0, %v950
  %v952 = vrot.slane %v897, %v951
  %v953 = vlaneseq
  %v954 = vshrl.u32 %v953, 7
  %v955 = vsub.s32 0, %v954
  %v956 = vrot.slane %v901, %v955
  %v957 = vlaneseq
  %v958 = vshrl.u32 %v957, 7
  %v959 = vsub.s32 0, %v958
  %v960 = vrot.slane %v905, %v959
  %v961 = vmul.f32 %v498, %v920
  %v962 = vmul.f32 %v500, %v924
  %v963 = vmul.f32 %v569, %v928
  %v964 = vmul.f32 %v571, %v932
  %v965 = vmul.f32 %v640, %v936
  %v966 = vmul.f32 %v642, %v940
  %v967 = vmul.f32 %v711, %v944
  %v968 = vmul.f32 %v713, %v948
  %v969 = vmul.f32 %v782, %v952
  %v970 = vmul.f32 %v784, %v956
  %v971 = vmul.f32 %v853, %v960
  %v972 = vadd.f32 %v961, %v962
  %v973 = vadd.f32 %v972, %v963
  %v974 = vadd.f32 %v973, %v964
  %v975 = vadd.f32 %v974, %v965
  %v976 = vadd.f32 %v975, %v966
  %v977 = vadd.f32 %v976, %v967
  %v978 = vadd.f32 %v977, %v968
  %v979 = vadd.f32 %v978, %v969
  %v980 = vadd.f32 %v979, %v970
  %v981 = vadd.f32 %v980, %v971
  %982 = vadd.xlane.f32.xlu0 %v981
  %v983 = vpop.xlane.xlu0 %982
  %v984 = vmul.f32 %v961, %v961
  %v985 = vmul.f32 %v962, %v962
  %v986 = vmul.f32 %v963, %v963
  %v987 = vmul.f32 %v964, %v964
  %v988 = vmul.f32 %v965, %v965
  %v989 = vmul.f32 %v966, %v966
  %v990 = vmul.f32 %v967, %v967
  %v991 = vmul.f32 %v968, %v968
  %v992 = vmul.f32 %v969, %v969
  %v993 = vmul.f32 %v970, %v970
  %v994 = vmul.f32 %v971, %v971
  %v995 = vadd.f32 %v984, %v985
  %v996 = vadd.f32 %v995, %v986
  %v997 = vadd.f32 %v996, %v987
  %v998 = vadd.f32 %v997, %v988
  %v999 = vadd.f32 %v998, %v989
  %v1000 = vadd.f32 %v999, %v990
  %v1001 = vadd.f32 %v1000, %v991
  %v1002 = vadd.f32 %v1001, %v992
  %v1003 = vadd.f32 %v1002, %v993
  %v1004 = vadd.f32 %v1003, %v994
  %1005 = vadd.xlane.f32.xlu0 %v1004
  %v1006 = vpop.xlane.xlu0 %1005
  %v1007 = vmul.f32 %v983, 0.00086805556
  %v1008 = vmul.f32 %v1006, 0.00086805556
  %v1009 = vmul.f32 %v1007, %v1007
  %v1010 = vsub.f32 %v1008, %v1009
  %v1011 = vmax.f32 %v1010, 0.0
  %v1012 = vadd.f32 %v1011, 1e-05
  %v1013 = vrsqrt.pop %v1012
  %v1014 = vmul.f32 %v38, %v1013
  %v1015 = vmul.f32 %v1007, %v1014
  %1017 = vrot.lane.b32.xlu0 %v1015, 1
  %v1018 = vpop.permute.xlu0 %1017
  %v1020 = vsub.f32 %v38, %v1018
  %1022 = vset.pattern.permute.xlu0 0
  %1023 = vperm.xlu0 %1022, %v1014
  %v1024 = vpop.permute.xlu0 %1023
  %v1026 = vmul.f32 %v498, %v1024
  %v1027 = vmul.f32 %v500, %v1024
  %v1028 = vmul.f32 %v569, %v1024
  %v1029 = vmul.f32 %v571, %v1024
  %v1030 = vmul.f32 %v640, %v1024
  %v1031 = vmul.f32 %v642, %v1024
  %v1032 = vmul.f32 %v711, %v1024
  %v1033 = vmul.f32 %v713, %v1024
  %v1034 = vmul.f32 %v782, %v1024
  %v1035 = vmul.f32 %v784, %v1024
  %v1036 = vmul.f32 %v853, %v1024
  %1038 = vset.pattern.permute.xlu0 1
  %1039 = vperm.xlu0 %1038, %v1020
  %v1040 = vpop.permute.xlu0 %1039
  %v1042 = vadd.f32 %v1026, %v1040
  %v1043 = vadd.f32 %v1027, %v1040
  %v1044 = vadd.f32 %v1028, %v1040
  %v1045 = vadd.f32 %v1029, %v1040
  %v1046 = vadd.f32 %v1030, %v1040
  %v1047 = vadd.f32 %v1031, %v1040
  %v1048 = vadd.f32 %v1032, %v1040
  %v1049 = vadd.f32 %v1033, %v1040
  %v1050 = vadd.f32 %v1034, %v1040
  %v1051 = vadd.f32 %v1035, %v1040
  %v1052 = vadd.f32 %v1036, %v1040
  %v1053 = vmul.f32 %v1042, 0.2
  %v1054 = vmul.f32 %v1043, 0.2
  %v1055 = vmul.f32 %v1044, 0.2
  %v1056 = vmul.f32 %v1045, 0.2
  %v1057 = vmul.f32 %v1046, 0.2
  %v1058 = vmul.f32 %v1047, 0.2
  %v1059 = vmul.f32 %v1048, 0.2
  %v1060 = vmul.f32 %v1049, 0.2
  %v1061 = vmul.f32 %v1050, 0.2
  %v1062 = vmul.f32 %v1051, 0.2
  %v1063 = vmul.f32 %v1052, 0.2
  %v1064 = vmax.f32 %v1042, %v1053
  %v1065 = vmax.f32 %v1043, %v1054
  %v1066 = vmax.f32 %v1044, %v1055
  %v1067 = vmax.f32 %v1045, %v1056
  %v1068 = vmax.f32 %v1046, %v1057
  %v1069 = vmax.f32 %v1047, %v1058
  %v1070 = vmax.f32 %v1048, %v1059
  %v1071 = vmax.f32 %v1049, %v1060
  %v1072 = vmax.f32 %v1050, %v1061
  %v1073 = vmax.f32 %v1051, %v1062
  %v1074 = vmax.f32 %v1052, %v1063
  %1086 = vrot.lane.b32.xlu0 %v1064, 127
  %v1087 = vpop.permute.xlu0 %1086
  %1088 = vrot.lane.b32.xlu0 %v1065, 127
  %v1089 = vpop.permute.xlu0 %1088
  %1090 = vrot.lane.b32.xlu0 %v1066, 127
  %v1091 = vpop.permute.xlu0 %1090
  %1092 = vrot.lane.b32.xlu0 %v1067, 127
  %v1093 = vpop.permute.xlu0 %1092
  %1094 = vrot.lane.b32.xlu0 %v1068, 127
  %v1095 = vpop.permute.xlu0 %1094
  %1096 = vrot.lane.b32.xlu0 %v1069, 127
  %v1097 = vpop.permute.xlu0 %1096
  %1098 = vrot.lane.b32.xlu0 %v1070, 127
  %v1099 = vpop.permute.xlu0 %1098
  %1100 = vrot.lane.b32.xlu0 %v1071, 127
  %v1101 = vpop.permute.xlu0 %1100
  %1102 = vrot.lane.b32.xlu0 %v1072, 127
  %v1103 = vpop.permute.xlu0 %1102
  %1104 = vrot.lane.b32.xlu0 %v1073, 127
  %v1105 = vpop.permute.xlu0 %1104
  %1106 = vrot.lane.b32.xlu0 %v1074, 127
  %v1107 = vpop.permute.xlu0 %1106
  %v1108 = vsel %vm81, %v1087, %v1089
  %v1109 = vsel %vm81, %v1089, %v1091
  %v1110 = vsel %vm81, %v1091, %v1093
  %v1111 = vsel %vm81, %v1093, %v1095
  %v1112 = vsel %vm81, %v1095, %v1097
  %v1113 = vsel %vm81, %v1097, %v1099
  %v1114 = vsel %vm81, %v1099, %v1101
  %v1115 = vsel %vm81, %v1101, %v1103
  %v1116 = vsel %vm81, %v1103, %v1105
  %v1117 = vsel %vm81, %v1105, %v1107
  %v1130 = vsel %vm81, %v1107, %v1087
  %1131 = vrot.lane.b32.xlu0 %v1064, 126
  %v1132 = vpop.permute.xlu0 %1131
  %1133 = vrot.lane.b32.xlu0 %v1065, 126
  %v1134 = vpop.permute.xlu0 %1133
  %1135 = vrot.lane.b32.xlu0 %v1066, 126
  %v1136 = vpop.permute.xlu0 %1135
  %1137 = vrot.lane.b32.xlu0 %v1067, 126
  %v1138 = vpop.permute.xlu0 %1137
  %1139 = vrot.lane.b32.xlu0 %v1068, 126
  %v1140 = vpop.permute.xlu0 %1139
  %1141 = vrot.lane.b32.xlu0 %v1069, 126
  %v1142 = vpop.permute.xlu0 %1141
  %1143 = vrot.lane.b32.xlu0 %v1070, 126
  %v1144 = vpop.permute.xlu0 %1143
  %1145 = vrot.lane.b32.xlu0 %v1071, 126
  %v1146 = vpop.permute.xlu0 %1145
  %1147 = vrot.lane.b32.xlu0 %v1072, 126
  %v1148 = vpop.permute.xlu0 %1147
  %1149 = vrot.lane.b32.xlu0 %v1073, 126
  %v1150 = vpop.permute.xlu0 %1149
  %1151 = vrot.lane.b32.xlu0 %v1074, 126
  %v1152 = vpop.permute.xlu0 %1151
  %v1153 = vsel %vm127, %v1132, %v1134
  %v1154 = vsel %vm127, %v1134, %v1136
  %v1155 = vsel %vm127, %v1136, %v1138
  %v1156 = vsel %vm127, %v1138, %v1140
  %v1157 = vsel %vm127, %v1140, %v1142
  %v1158 = vsel %vm127, %v1142, %v1144
  %v1159 = vsel %vm127, %v1144, %v1146
  %v1160 = vsel %vm127, %v1146, %v1148
  %v1161 = vsel %vm127, %v1148, %v1150
  %v1162 = vsel %vm127, %v1150, %v1152
  %v1175 = vsel %vm127, %v1152, %v1132
  %1176 = vrot.lane.b32.xlu0 %v1064, 102
  %v1177 = vpop.permute.xlu0 %1176
  %1178 = vrot.lane.b32.xlu0 %v1065, 102
  %v1179 = vpop.permute.xlu0 %1178
  %1180 = vrot.lane.b32.xlu0 %v1066, 102
  %v1181 = vpop.permute.xlu0 %1180
  %1182 = vrot.lane.b32.xlu0 %v1067, 102
  %v1183 = vpop.permute.xlu0 %1182
  %1184 = vrot.lane.b32.xlu0 %v1068, 102
  %v1185 = vpop.permute.xlu0 %1184
  %1186 = vrot.lane.b32.xlu0 %v1069, 102
  %v1187 = vpop.permute.xlu0 %1186
  %1188 = vrot.lane.b32.xlu0 %v1070, 102
  %v1189 = vpop.permute.xlu0 %1188
  %1190 = vrot.lane.b32.xlu0 %v1071, 102
  %v1191 = vpop.permute.xlu0 %1190
  %1192 = vrot.lane.b32.xlu0 %v1072, 102
  %v1193 = vpop.permute.xlu0 %1192
  %1194 = vrot.lane.b32.xlu0 %v1073, 102
  %v1195 = vpop.permute.xlu0 %1194
  %1196 = vrot.lane.b32.xlu0 %v1074, 102
  %v1197 = vpop.permute.xlu0 %1196
  %v1198 = vsel %vm173, %v1177, %v1179
  %v1199 = vsel %vm173, %v1179, %v1181
  %v1200 = vsel %vm173, %v1181, %v1183
  %v1201 = vsel %vm173, %v1183, %v1185
  %v1202 = vsel %vm173, %v1185, %v1187
  %v1203 = vsel %vm173, %v1187, %v1189
  %v1204 = vsel %vm173, %v1189, %v1191
  %v1205 = vsel %vm173, %v1191, %v1193
  %v1206 = vsel %vm173, %v1193, %v1195
  %v1207 = vsel %vm173, %v1195, %v1197
  %v1220 = vsel %vm173, %v1197, %v1177
  %1221 = vrot.lane.b32.xlu0 %v1064, 101
  %v1222 = vpop.permute.xlu0 %1221
  %1223 = vrot.lane.b32.xlu0 %v1065, 101
  %v1224 = vpop.permute.xlu0 %1223
  %1225 = vrot.lane.b32.xlu0 %v1066, 101
  %v1226 = vpop.permute.xlu0 %1225
  %1227 = vrot.lane.b32.xlu0 %v1067, 101
  %v1228 = vpop.permute.xlu0 %1227
  %1229 = vrot.lane.b32.xlu0 %v1068, 101
  %v1230 = vpop.permute.xlu0 %1229
  %1231 = vrot.lane.b32.xlu0 %v1069, 101
  %v1232 = vpop.permute.xlu0 %1231
  %1233 = vrot.lane.b32.xlu0 %v1070, 101
  %v1234 = vpop.permute.xlu0 %1233
  %1235 = vrot.lane.b32.xlu0 %v1071, 101
  %v1236 = vpop.permute.xlu0 %1235
  %1237 = vrot.lane.b32.xlu0 %v1072, 101
  %v1238 = vpop.permute.xlu0 %1237
  %1239 = vrot.lane.b32.xlu0 %v1073, 101
  %v1240 = vpop.permute.xlu0 %1239
  %1241 = vrot.lane.b32.xlu0 %v1074, 101
  %v1242 = vpop.permute.xlu0 %1241
  %v1243 = vsel %vm219, %v1222, %v1224
  %v1244 = vsel %vm219, %v1224, %v1226
  %v1245 = vsel %vm219, %v1226, %v1228
  %v1246 = vsel %vm219, %v1228, %v1230
  %v1247 = vsel %vm219, %v1230, %v1232
  %v1248 = vsel %vm219, %v1232, %v1234
  %v1249 = vsel %vm219, %v1234, %v1236
  %v1250 = vsel %vm219, %v1236, %v1238
  %v1251 = vsel %vm219, %v1238, %v1240
  %v1252 = vsel %vm219, %v1240, %v1242
  %v1265 = vsel %vm219, %v1242, %v1222
  %1266 = vrot.lane.b32.xlu0 %v1064, 100
  %v1267 = vpop.permute.xlu0 %1266
  %1268 = vrot.lane.b32.xlu0 %v1065, 100
  %v1269 = vpop.permute.xlu0 %1268
  %1270 = vrot.lane.b32.xlu0 %v1066, 100
  %v1271 = vpop.permute.xlu0 %1270
  %1272 = vrot.lane.b32.xlu0 %v1067, 100
  %v1273 = vpop.permute.xlu0 %1272
  %1274 = vrot.lane.b32.xlu0 %v1068, 100
  %v1275 = vpop.permute.xlu0 %1274
  %1276 = vrot.lane.b32.xlu0 %v1069, 100
  %v1277 = vpop.permute.xlu0 %1276
  %1278 = vrot.lane.b32.xlu0 %v1070, 100
  %v1279 = vpop.permute.xlu0 %1278
  %1280 = vrot.lane.b32.xlu0 %v1071, 100
  %v1281 = vpop.permute.xlu0 %1280
  %1282 = vrot.lane.b32.xlu0 %v1072, 100
  %v1283 = vpop.permute.xlu0 %1282
  %1284 = vrot.lane.b32.xlu0 %v1073, 100
  %v1285 = vpop.permute.xlu0 %1284
  %1286 = vrot.lane.b32.xlu0 %v1074, 100
  %v1287 = vpop.permute.xlu0 %1286
  %v1288 = vsel %vm265, %v1267, %v1269
  %v1289 = vsel %vm265, %v1269, %v1271
  %v1290 = vsel %vm265, %v1271, %v1273
  %v1291 = vsel %vm265, %v1273, %v1275
  %v1292 = vsel %vm265, %v1275, %v1277
  %v1293 = vsel %vm265, %v1277, %v1279
  %v1294 = vsel %vm265, %v1279, %v1281
  %v1295 = vsel %vm265, %v1281, %v1283
  %v1296 = vsel %vm265, %v1283, %v1285
  %v1297 = vsel %vm265, %v1285, %v1287
  %v1310 = vsel %vm265, %v1287, %v1267
  %1311 = vrot.lane.b32.xlu0 %v1064, 76
  %v1312 = vpop.permute.xlu0 %1311
  %1313 = vrot.lane.b32.xlu0 %v1065, 76
  %v1314 = vpop.permute.xlu0 %1313
  %1315 = vrot.lane.b32.xlu0 %v1066, 76
  %v1316 = vpop.permute.xlu0 %1315
  %1317 = vrot.lane.b32.xlu0 %v1067, 76
  %v1318 = vpop.permute.xlu0 %1317
  %1319 = vrot.lane.b32.xlu0 %v1068, 76
  %v1320 = vpop.permute.xlu0 %1319
  %1321 = vrot.lane.b32.xlu0 %v1069, 76
  %v1322 = vpop.permute.xlu0 %1321
  %1323 = vrot.lane.b32.xlu0 %v1070, 76
  %v1324 = vpop.permute.xlu0 %1323
  %1325 = vrot.lane.b32.xlu0 %v1071, 76
  %v1326 = vpop.permute.xlu0 %1325
  %1327 = vrot.lane.b32.xlu0 %v1072, 76
  %v1328 = vpop.permute.xlu0 %1327
  %1329 = vrot.lane.b32.xlu0 %v1073, 76
  %v1330 = vpop.permute.xlu0 %1329
  %1331 = vrot.lane.b32.xlu0 %v1074, 76
  %v1332 = vpop.permute.xlu0 %1331
  %v1333 = vsel %vm311, %v1312, %v1314
  %v1334 = vsel %vm311, %v1314, %v1316
  %v1335 = vsel %vm311, %v1316, %v1318
  %v1336 = vsel %vm311, %v1318, %v1320
  %v1337 = vsel %vm311, %v1320, %v1322
  %v1338 = vsel %vm311, %v1322, %v1324
  %v1339 = vsel %vm311, %v1324, %v1326
  %v1340 = vsel %vm311, %v1326, %v1328
  %v1341 = vsel %vm311, %v1328, %v1330
  %v1342 = vsel %vm311, %v1330, %v1332
  %v1355 = vsel %vm311, %v1332, %v1312
  %1356 = vrot.lane.b32.xlu0 %v1064, 75
  %v1357 = vpop.permute.xlu0 %1356
  %1358 = vrot.lane.b32.xlu0 %v1065, 75
  %v1359 = vpop.permute.xlu0 %1358
  %1360 = vrot.lane.b32.xlu0 %v1066, 75
  %v1361 = vpop.permute.xlu0 %1360
  %1362 = vrot.lane.b32.xlu0 %v1067, 75
  %v1363 = vpop.permute.xlu0 %1362
  %1364 = vrot.lane.b32.xlu0 %v1068, 75
  %v1365 = vpop.permute.xlu0 %1364
  %1366 = vrot.lane.b32.xlu0 %v1069, 75
  %v1367 = vpop.permute.xlu0 %1366
  %1368 = vrot.lane.b32.xlu0 %v1070, 75
  %v1369 = vpop.permute.xlu0 %1368
  %1370 = vrot.lane.b32.xlu0 %v1071, 75
  %v1371 = vpop.permute.xlu0 %1370
  %1372 = vrot.lane.b32.xlu0 %v1072, 75
  %v1373 = vpop.permute.xlu0 %1372
  %1374 = vrot.lane.b32.xlu0 %v1073, 75
  %v1375 = vpop.permute.xlu0 %1374
  %1376 = vrot.lane.b32.xlu0 %v1074, 75
  %v1377 = vpop.permute.xlu0 %1376
  %v1378 = vsel %vm357, %v1357, %v1359
  %v1379 = vsel %vm357, %v1359, %v1361
  %v1380 = vsel %vm357, %v1361, %v1363
  %v1381 = vsel %vm357, %v1363, %v1365
  %v1382 = vsel %vm357, %v1365, %v1367
  %v1383 = vsel %vm357, %v1367, %v1369
  %v1384 = vsel %vm357, %v1369, %v1371
  %v1385 = vsel %vm357, %v1371, %v1373
  %v1386 = vsel %vm357, %v1373, %v1375
  %v1387 = vsel %vm357, %v1375, %v1377
  %v1400 = vsel %vm357, %v1377, %v1357
  %1401 = vrot.lane.b32.xlu0 %v1064, 74
  %v1402 = vpop.permute.xlu0 %1401
  %1403 = vrot.lane.b32.xlu0 %v1065, 74
  %v1404 = vpop.permute.xlu0 %1403
  %1405 = vrot.lane.b32.xlu0 %v1066, 74
  %v1406 = vpop.permute.xlu0 %1405
  %1407 = vrot.lane.b32.xlu0 %v1067, 74
  %v1408 = vpop.permute.xlu0 %1407
  %1409 = vrot.lane.b32.xlu0 %v1068, 74
  %v1410 = vpop.permute.xlu0 %1409
  %1411 = vrot.lane.b32.xlu0 %v1069, 74
  %v1412 = vpop.permute.xlu0 %1411
  %1413 = vrot.lane.b32.xlu0 %v1070, 74
  %v1414 = vpop.permute.xlu0 %1413
  %1415 = vrot.lane.b32.xlu0 %v1071, 74
  %v1416 = vpop.permute.xlu0 %1415
  %1417 = vrot.lane.b32.xlu0 %v1072, 74
  %v1418 = vpop.permute.xlu0 %1417
  %1419 = vrot.lane.b32.xlu0 %v1073, 74
  %v1420 = vpop.permute.xlu0 %1419
  %1421 = vrot.lane.b32.xlu0 %v1074, 74
  %v1422 = vpop.permute.xlu0 %1421
  %v1423 = vsel %vm403, %v1402, %v1404
  %v1424 = vsel %vm403, %v1404, %v1406
  %v1425 = vsel %vm403, %v1406, %v1408
  %v1426 = vsel %vm403, %v1408, %v1410
  %v1427 = vsel %vm403, %v1410, %v1412
  %v1428 = vsel %vm403, %v1412, %v1414
  %v1429 = vsel %vm403, %v1414, %v1416
  %v1430 = vsel %vm403, %v1416, %v1418
  %v1431 = vsel %vm403, %v1418, %v1420
  %v1432 = vsel %vm403, %v1420, %v1422
  %v1445 = vsel %vm403, %v1422, %v1402
  %v1447 = vsel %vm427, %v35, 0
  %1449 = vmatprep.subr.mxu0 0.0
  %1450 = vmatpush1.msra.mxu0 0.0
  %1451 = vmatprep.subr.mxu0 0.0
  %1452 = vmatpush1.msra.mxu0 0.0
  %1453 = vmatprep.subr.mxu0 0.0
  %1454 = vmatpush1.msra.mxu0 0.0
  %1455 = vmatprep.subr.mxu0 0.0
  %1456 = vmatpush1.msra.mxu0 0.0
  %1457 = vmatprep.subr.mxu0 0.0
  %1458 = vmatpush1.msra.mxu0 0.0
  %1459 = vmatprep.subr.mxu0 0.0
  %1460 = vmatpush1.msra.mxu0 0.0
  %1461 = vmatprep.subr.mxu0 0.0
  %1462 = vmatpush1.msra.mxu0 0.0
  %1463 = vmatprep.subr.mxu0 %v1424
  %1464 = vmatpush1.msra.mxu0 %v1423
  %1465 = vmatprep.subr.mxu0 %v1379
  %1466 = vmatpush1.msra.mxu0 %v1378
  %1467 = vmatprep.subr.mxu0 %v1334
  %1468 = vmatpush1.msra.mxu0 %v1333
  %1469 = vmatprep.subr.mxu0 %v1289
  %1470 = vmatpush1.msra.mxu0 %v1288
  %1471 = vmatprep.subr.mxu0 %v1244
  %1472 = vmatpush1.msra.mxu0 %v1243
  %1473 = vmatprep.subr.mxu0 %v1199
  %1474 = vmatpush1.msra.mxu0 %v1198
  %1475 = vmatprep.subr.mxu0 %v1154
  %1476 = vmatpush1.msra.mxu0 %v1153
  %1477 = vmatprep.subr.mxu0 %v1109
  %1478 = vmatpush1.msra.mxu0 %v1108
  %1479 = vmatprep.subr.mxu0 %v1065
  %1480 = vmatpush1.msra.mxu0 %v1064
  %1481 = vmatprep.subr.mxu0 0.0
  %1482 = vmatpush2.msra.mxu0 0.0
  %1483 = vmatprep.subr.mxu0 0.0
  %1484 = vmatpush2.msra.mxu0 0.0
  %1485 = vmatprep.subr.mxu0 0.0
  %1486 = vmatpush2.msra.mxu0 0.0
  %1487 = vmatprep.subr.mxu0 0.0
  %1488 = vmatpush2.msra.mxu0 0.0
  %1489 = vmatprep.subr.mxu0 0.0
  %1490 = vmatpush2.msra.mxu0 0.0
  %1491 = vmatprep.subr.mxu0 0.0
  %1492 = vmatpush2.msra.mxu0 0.0
  %1493 = vmatprep.subr.mxu0 0.0
  %1494 = vmatpush2.msra.mxu0 0.0
  %1495 = vmatprep.subr.mxu0 0.0
  %1496 = vmatpush2.msra.mxu0 0.0
  %1497 = vmatprep.subr.mxu0 0.0
  %1498 = vmatpush2.msra.mxu0 0.0
  %1499 = vmatprep.subr.mxu0 0.0
  %1500 = vmatpush2.msra.mxu0 0.0
  %1501 = vmatprep.subr.mxu0 0.0
  %1502 = vmatpush2.msra.mxu0 0.0
  %1503 = vmatprep.subr.mxu0 0.0
  %1504 = vmatpush2.msra.mxu0 0.0
  %1505 = vmatprep.subr.mxu0 0.0
  %1506 = vmatpush2.msra.mxu0 0.0
  %1507 = vmatprep.subr.mxu0 0.0
  %1508 = vmatpush2.msra.mxu0 0.0
  %1509 = vmatprep.subr.mxu0 0.0
  %1510 = vmatpush2.msra.mxu0 0.0
  %1511 = vmatprep.subr.mxu0 0.0
  %1512 = vmatpush2.msra.mxu0 0.0
  %1513 = vmatprep.mubr.f32.mxu0 0.0
  %1514 = vmatmul.mubr.f32.gmra.mxu0 %v1447
  %v1515 = vpop.f32.mrf.mxu0
  %v1516 = vadd.f32 0.0, %v1515
  %v1517 = vpop.f32.mrf.mxu0
  %v1518 = vadd.f32 0.0, %v1517
  %1519 = vdwg.mxu0
  %1520 = vmatprep.subr.mxu0 0.0
  %1521 = vmatpush1.msra.mxu0 0.0
  %1522 = vmatprep.subr.mxu0 0.0
  %1523 = vmatpush1.msra.mxu0 0.0
  %1524 = vmatprep.subr.mxu0 0.0
  %1525 = vmatpush1.msra.mxu0 0.0
  %1526 = vmatprep.subr.mxu0 0.0
  %1527 = vmatpush1.msra.mxu0 0.0
  %1528 = vmatprep.subr.mxu0 0.0
  %1529 = vmatpush1.msra.mxu0 0.0
  %1530 = vmatprep.subr.mxu0 0.0
  %1531 = vmatpush1.msra.mxu0 0.0
  %1532 = vmatprep.subr.mxu0 0.0
  %1533 = vmatpush1.msra.mxu0 0.0
  %1534 = vmatprep.subr.mxu0 %v1426
  %1535 = vmatpush1.msra.mxu0 %v1425
  %1536 = vmatprep.subr.mxu0 %v1381
  %1537 = vmatpush1.msra.mxu0 %v1380
  %1538 = vmatprep.subr.mxu0 %v1336
  %1539 = vmatpush1.msra.mxu0 %v1335
  %1540 = vmatprep.subr.mxu0 %v1291
  %1541 = vmatpush1.msra.mxu0 %v1290
  %1542 = vmatprep.subr.mxu0 %v1246
  %1543 = vmatpush1.msra.mxu0 %v1245
  %1544 = vmatprep.subr.mxu0 %v1201
  %1545 = vmatpush1.msra.mxu0 %v1200
  %1546 = vmatprep.subr.mxu0 %v1156
  %1547 = vmatpush1.msra.mxu0 %v1155
  %1548 = vmatprep.subr.mxu0 %v1111
  %1549 = vmatpush1.msra.mxu0 %v1110
  %1550 = vmatprep.subr.mxu0 %v1067
  %1551 = vmatpush1.msra.mxu0 %v1066
  %1552 = vmatprep.subr.mxu0 0.0
  %1553 = vmatpush2.msra.mxu0 0.0
  %1554 = vmatprep.subr.mxu0 0.0
  %1555 = vmatpush2.msra.mxu0 0.0
  %1556 = vmatprep.subr.mxu0 0.0
  %1557 = vmatpush2.msra.mxu0 0.0
  %1558 = vmatprep.subr.mxu0 0.0
  %1559 = vmatpush2.msra.mxu0 0.0
  %1560 = vmatprep.subr.mxu0 0.0
  %1561 = vmatpush2.msra.mxu0 0.0
  %1562 = vmatprep.subr.mxu0 0.0
  %1563 = vmatpush2.msra.mxu0 0.0
  %1564 = vmatprep.subr.mxu0 0.0
  %1565 = vmatpush2.msra.mxu0 0.0
  %1566 = vmatprep.subr.mxu0 0.0
  %1567 = vmatpush2.msra.mxu0 0.0
  %1568 = vmatprep.subr.mxu0 0.0
  %1569 = vmatpush2.msra.mxu0 0.0
  %1570 = vmatprep.subr.mxu0 0.0
  %1571 = vmatpush2.msra.mxu0 0.0
  %1572 = vmatprep.subr.mxu0 0.0
  %1573 = vmatpush2.msra.mxu0 0.0
  %1574 = vmatprep.subr.mxu0 0.0
  %1575 = vmatpush2.msra.mxu0 0.0
  %1576 = vmatprep.subr.mxu0 0.0
  %1577 = vmatpush2.msra.mxu0 0.0
  %1578 = vmatprep.subr.mxu0 0.0
  %1579 = vmatpush2.msra.mxu0 0.0
  %1580 = vmatprep.subr.mxu0 0.0
  %1581 = vmatpush2.msra.mxu0 0.0
  %1582 = vmatprep.subr.mxu0 0.0
  %1583 = vmatpush2.msra.mxu0 0.0
  %1584 = vmatprep.mubr.f32.mxu0 0.0
  %1585 = vmatmul.mubr.f32.gmra.mxu0 %v1447
  %v1586 = vpop.f32.mrf.mxu0
  %v1587 = vadd.f32 0.0, %v1586
  %v1588 = vpop.f32.mrf.mxu0
  %v1589 = vadd.f32 0.0, %v1588
  %1590 = vdwg.mxu0
  %1591 = vmatprep.subr.mxu0 0.0
  %1592 = vmatpush1.msra.mxu0 0.0
  %1593 = vmatprep.subr.mxu0 0.0
  %1594 = vmatpush1.msra.mxu0 0.0
  %1595 = vmatprep.subr.mxu0 0.0
  %1596 = vmatpush1.msra.mxu0 0.0
  %1597 = vmatprep.subr.mxu0 0.0
  %1598 = vmatpush1.msra.mxu0 0.0
  %1599 = vmatprep.subr.mxu0 0.0
  %1600 = vmatpush1.msra.mxu0 0.0
  %1601 = vmatprep.subr.mxu0 0.0
  %1602 = vmatpush1.msra.mxu0 0.0
  %1603 = vmatprep.subr.mxu0 0.0
  %1604 = vmatpush1.msra.mxu0 0.0
  %1605 = vmatprep.subr.mxu0 %v1428
  %1606 = vmatpush1.msra.mxu0 %v1427
  %1607 = vmatprep.subr.mxu0 %v1383
  %1608 = vmatpush1.msra.mxu0 %v1382
  %1609 = vmatprep.subr.mxu0 %v1338
  %1610 = vmatpush1.msra.mxu0 %v1337
  %1611 = vmatprep.subr.mxu0 %v1293
  %1612 = vmatpush1.msra.mxu0 %v1292
  %1613 = vmatprep.subr.mxu0 %v1248
  %1614 = vmatpush1.msra.mxu0 %v1247
  %1615 = vmatprep.subr.mxu0 %v1203
  %1616 = vmatpush1.msra.mxu0 %v1202
  %1617 = vmatprep.subr.mxu0 %v1158
  %1618 = vmatpush1.msra.mxu0 %v1157
  %1619 = vmatprep.subr.mxu0 %v1113
  %1620 = vmatpush1.msra.mxu0 %v1112
  %1621 = vmatprep.subr.mxu0 %v1069
  %1622 = vmatpush1.msra.mxu0 %v1068
  %1623 = vmatprep.subr.mxu0 0.0
  %1624 = vmatpush2.msra.mxu0 0.0
  %1625 = vmatprep.subr.mxu0 0.0
  %1626 = vmatpush2.msra.mxu0 0.0
  %1627 = vmatprep.subr.mxu0 0.0
  %1628 = vmatpush2.msra.mxu0 0.0
  %1629 = vmatprep.subr.mxu0 0.0
  %1630 = vmatpush2.msra.mxu0 0.0
  %1631 = vmatprep.subr.mxu0 0.0
  %1632 = vmatpush2.msra.mxu0 0.0
  %1633 = vmatprep.subr.mxu0 0.0
  %1634 = vmatpush2.msra.mxu0 0.0
  %1635 = vmatprep.subr.mxu0 0.0
  %1636 = vmatpush2.msra.mxu0 0.0
  %1637 = vmatprep.subr.mxu0 0.0
  %1638 = vmatpush2.msra.mxu0 0.0
  %1639 = vmatprep.subr.mxu0 0.0
  %1640 = vmatpush2.msra.mxu0 0.0
  %1641 = vmatprep.subr.mxu0 0.0
  %1642 = vmatpush2.msra.mxu0 0.0
  %1643 = vmatprep.subr.mxu0 0.0
  %1644 = vmatpush2.msra.mxu0 0.0
  %1645 = vmatprep.subr.mxu0 0.0
  %1646 = vmatpush2.msra.mxu0 0.0
  %1647 = vmatprep.subr.mxu0 0.0
  %1648 = vmatpush2.msra.mxu0 0.0
  %1649 = vmatprep.subr.mxu0 0.0
  %1650 = vmatpush2.msra.mxu0 0.0
  %1651 = vmatprep.subr.mxu0 0.0
  %1652 = vmatpush2.msra.mxu0 0.0
  %1653 = vmatprep.subr.mxu0 0.0
  %1654 = vmatpush2.msra.mxu0 0.0
  %1655 = vmatprep.mubr.f32.mxu0 0.0
  %1656 = vmatmul.mubr.f32.gmra.mxu0 %v1447
  %v1657 = vpop.f32.mrf.mxu0
  %v1658 = vadd.f32 0.0, %v1657
  %v1659 = vpop.f32.mrf.mxu0
  %v1660 = vadd.f32 0.0, %v1659
  %1661 = vdwg.mxu0
  %1662 = vmatprep.subr.mxu0 0.0
  %1663 = vmatpush1.msra.mxu0 0.0
  %1664 = vmatprep.subr.mxu0 0.0
  %1665 = vmatpush1.msra.mxu0 0.0
  %1666 = vmatprep.subr.mxu0 0.0
  %1667 = vmatpush1.msra.mxu0 0.0
  %1668 = vmatprep.subr.mxu0 0.0
  %1669 = vmatpush1.msra.mxu0 0.0
  %1670 = vmatprep.subr.mxu0 0.0
  %1671 = vmatpush1.msra.mxu0 0.0
  %1672 = vmatprep.subr.mxu0 0.0
  %1673 = vmatpush1.msra.mxu0 0.0
  %1674 = vmatprep.subr.mxu0 0.0
  %1675 = vmatpush1.msra.mxu0 0.0
  %1676 = vmatprep.subr.mxu0 %v1430
  %1677 = vmatpush1.msra.mxu0 %v1429
  %1678 = vmatprep.subr.mxu0 %v1385
  %1679 = vmatpush1.msra.mxu0 %v1384
  %1680 = vmatprep.subr.mxu0 %v1340
  %1681 = vmatpush1.msra.mxu0 %v1339
  %1682 = vmatprep.subr.mxu0 %v1295
  %1683 = vmatpush1.msra.mxu0 %v1294
  %1684 = vmatprep.subr.mxu0 %v1250
  %1685 = vmatpush1.msra.mxu0 %v1249
  %1686 = vmatprep.subr.mxu0 %v1205
  %1687 = vmatpush1.msra.mxu0 %v1204
  %1688 = vmatprep.subr.mxu0 %v1160
  %1689 = vmatpush1.msra.mxu0 %v1159
  %1690 = vmatprep.subr.mxu0 %v1115
  %1691 = vmatpush1.msra.mxu0 %v1114
  %1692 = vmatprep.subr.mxu0 %v1071
  %1693 = vmatpush1.msra.mxu0 %v1070
  %1694 = vmatprep.subr.mxu0 0.0
  %1695 = vmatpush2.msra.mxu0 0.0
  %1696 = vmatprep.subr.mxu0 0.0
  %1697 = vmatpush2.msra.mxu0 0.0
  %1698 = vmatprep.subr.mxu0 0.0
  %1699 = vmatpush2.msra.mxu0 0.0
  %1700 = vmatprep.subr.mxu0 0.0
  %1701 = vmatpush2.msra.mxu0 0.0
  %1702 = vmatprep.subr.mxu0 0.0
  %1703 = vmatpush2.msra.mxu0 0.0
  %1704 = vmatprep.subr.mxu0 0.0
  %1705 = vmatpush2.msra.mxu0 0.0
  %1706 = vmatprep.subr.mxu0 0.0
  %1707 = vmatpush2.msra.mxu0 0.0
  %1708 = vmatprep.subr.mxu0 0.0
  %1709 = vmatpush2.msra.mxu0 0.0
  %1710 = vmatprep.subr.mxu0 0.0
  %1711 = vmatpush2.msra.mxu0 0.0
  %1712 = vmatprep.subr.mxu0 0.0
  %1713 = vmatpush2.msra.mxu0 0.0
  %1714 = vmatprep.subr.mxu0 0.0
  %1715 = vmatpush2.msra.mxu0 0.0
  %1716 = vmatprep.subr.mxu0 0.0
  %1717 = vmatpush2.msra.mxu0 0.0
  %1718 = vmatprep.subr.mxu0 0.0
  %1719 = vmatpush2.msra.mxu0 0.0
  %1720 = vmatprep.subr.mxu0 0.0
  %1721 = vmatpush2.msra.mxu0 0.0
  %1722 = vmatprep.subr.mxu0 0.0
  %1723 = vmatpush2.msra.mxu0 0.0
  %1724 = vmatprep.subr.mxu0 0.0
  %1725 = vmatpush2.msra.mxu0 0.0
  %1726 = vmatprep.mubr.f32.mxu0 0.0
  %1727 = vmatmul.mubr.f32.gmra.mxu0 %v1447
  %v1728 = vpop.f32.mrf.mxu0
  %v1729 = vadd.f32 0.0, %v1728
  %v1730 = vpop.f32.mrf.mxu0
  %v1731 = vadd.f32 0.0, %v1730
  %1732 = vdwg.mxu0
  %1733 = vmatprep.subr.mxu0 0.0
  %1734 = vmatpush1.msra.mxu0 0.0
  %1735 = vmatprep.subr.mxu0 0.0
  %1736 = vmatpush1.msra.mxu0 0.0
  %1737 = vmatprep.subr.mxu0 0.0
  %1738 = vmatpush1.msra.mxu0 0.0
  %1739 = vmatprep.subr.mxu0 0.0
  %1740 = vmatpush1.msra.mxu0 0.0
  %1741 = vmatprep.subr.mxu0 0.0
  %1742 = vmatpush1.msra.mxu0 0.0
  %1743 = vmatprep.subr.mxu0 0.0
  %1744 = vmatpush1.msra.mxu0 0.0
  %1745 = vmatprep.subr.mxu0 0.0
  %1746 = vmatpush1.msra.mxu0 0.0
  %1747 = vmatprep.subr.mxu0 %v1432
  %1748 = vmatpush1.msra.mxu0 %v1431
  %1749 = vmatprep.subr.mxu0 %v1387
  %1750 = vmatpush1.msra.mxu0 %v1386
  %1751 = vmatprep.subr.mxu0 %v1342
  %1752 = vmatpush1.msra.mxu0 %v1341
  %1753 = vmatprep.subr.mxu0 %v1297
  %1754 = vmatpush1.msra.mxu0 %v1296
  %1755 = vmatprep.subr.mxu0 %v1252
  %1756 = vmatpush1.msra.mxu0 %v1251
  %1757 = vmatprep.subr.mxu0 %v1207
  %1758 = vmatpush1.msra.mxu0 %v1206
  %1759 = vmatprep.subr.mxu0 %v1162
  %1760 = vmatpush1.msra.mxu0 %v1161
  %1761 = vmatprep.subr.mxu0 %v1117
  %1762 = vmatpush1.msra.mxu0 %v1116
  %1763 = vmatprep.subr.mxu0 %v1073
  %1764 = vmatpush1.msra.mxu0 %v1072
  %1765 = vmatprep.subr.mxu0 0.0
  %1766 = vmatpush2.msra.mxu0 0.0
  %1767 = vmatprep.subr.mxu0 0.0
  %1768 = vmatpush2.msra.mxu0 0.0
  %1769 = vmatprep.subr.mxu0 0.0
  %1770 = vmatpush2.msra.mxu0 0.0
  %1771 = vmatprep.subr.mxu0 0.0
  %1772 = vmatpush2.msra.mxu0 0.0
  %1773 = vmatprep.subr.mxu0 0.0
  %1774 = vmatpush2.msra.mxu0 0.0
  %1775 = vmatprep.subr.mxu0 0.0
  %1776 = vmatpush2.msra.mxu0 0.0
  %1777 = vmatprep.subr.mxu0 0.0
  %1778 = vmatpush2.msra.mxu0 0.0
  %1779 = vmatprep.subr.mxu0 0.0
  %1780 = vmatpush2.msra.mxu0 0.0
  %1781 = vmatprep.subr.mxu0 0.0
  %1782 = vmatpush2.msra.mxu0 0.0
  %1783 = vmatprep.subr.mxu0 0.0
  %1784 = vmatpush2.msra.mxu0 0.0
  %1785 = vmatprep.subr.mxu0 0.0
  %1786 = vmatpush2.msra.mxu0 0.0
  %1787 = vmatprep.subr.mxu0 0.0
  %1788 = vmatpush2.msra.mxu0 0.0
  %1789 = vmatprep.subr.mxu0 0.0
  %1790 = vmatpush2.msra.mxu0 0.0
  %1791 = vmatprep.subr.mxu0 0.0
  %1792 = vmatpush2.msra.mxu0 0.0
  %1793 = vmatprep.subr.mxu0 0.0
  %1794 = vmatpush2.msra.mxu0 0.0
  %1795 = vmatprep.subr.mxu0 0.0
  %1796 = vmatpush2.msra.mxu0 0.0
  %1797 = vmatprep.mubr.f32.mxu0 0.0
  %1798 = vmatmul.mubr.f32.gmra.mxu0 %v1447
  %v1799 = vpop.f32.mrf.mxu0
  %v1800 = vadd.f32 0.0, %v1799
  %v1801 = vpop.f32.mrf.mxu0
  %v1802 = vadd.f32 0.0, %v1801
  %1803 = vdwg.mxu0
  %1804 = vmatprep.subr.mxu0 0.0
  %1805 = vmatpush1.msra.mxu0 0.0
  %1806 = vmatprep.subr.mxu0 0.0
  %1807 = vmatpush1.msra.mxu0 0.0
  %1808 = vmatprep.subr.mxu0 0.0
  %1809 = vmatpush1.msra.mxu0 0.0
  %1810 = vmatprep.subr.mxu0 0.0
  %1811 = vmatpush1.msra.mxu0 0.0
  %1812 = vmatprep.subr.mxu0 0.0
  %1813 = vmatpush1.msra.mxu0 0.0
  %1814 = vmatprep.subr.mxu0 0.0
  %1815 = vmatpush1.msra.mxu0 0.0
  %1816 = vmatprep.subr.mxu0 0.0
  %1817 = vmatpush1.msra.mxu0 0.0
  %1818 = vmatprep.subr.mxu0 0.0
  %1819 = vmatpush1.msra.mxu0 %v1445
  %1820 = vmatprep.subr.mxu0 0.0
  %1821 = vmatpush1.msra.mxu0 %v1400
  %1822 = vmatprep.subr.mxu0 0.0
  %1823 = vmatpush1.msra.mxu0 %v1355
  %1824 = vmatprep.subr.mxu0 0.0
  %1825 = vmatpush1.msra.mxu0 %v1310
  %1826 = vmatprep.subr.mxu0 0.0
  %1827 = vmatpush1.msra.mxu0 %v1265
  %1828 = vmatprep.subr.mxu0 0.0
  %1829 = vmatpush1.msra.mxu0 %v1220
  %1830 = vmatprep.subr.mxu0 0.0
  %1831 = vmatpush1.msra.mxu0 %v1175
  %1832 = vmatprep.subr.mxu0 0.0
  %1833 = vmatpush1.msra.mxu0 %v1130
  %1834 = vmatprep.subr.mxu0 0.0
  %1835 = vmatpush1.msra.mxu0 %v1074
  %1836 = vmatprep.subr.mxu0 0.0
  %1837 = vmatpush2.msra.mxu0 0.0
  %1838 = vmatprep.subr.mxu0 0.0
  %1839 = vmatpush2.msra.mxu0 0.0
  %1840 = vmatprep.subr.mxu0 0.0
  %1841 = vmatpush2.msra.mxu0 0.0
  %1842 = vmatprep.subr.mxu0 0.0
  %1843 = vmatpush2.msra.mxu0 0.0
  %1844 = vmatprep.subr.mxu0 0.0
  %1845 = vmatpush2.msra.mxu0 0.0
  %1846 = vmatprep.subr.mxu0 0.0
  %1847 = vmatpush2.msra.mxu0 0.0
  %1848 = vmatprep.subr.mxu0 0.0
  %1849 = vmatpush2.msra.mxu0 0.0
  %1850 = vmatprep.subr.mxu0 0.0
  %1851 = vmatpush2.msra.mxu0 0.0
  %1852 = vmatprep.subr.mxu0 0.0
  %1853 = vmatpush2.msra.mxu0 0.0
  %1854 = vmatprep.subr.mxu0 0.0
  %1855 = vmatpush2.msra.mxu0 0.0
  %1856 = vmatprep.subr.mxu0 0.0
  %1857 = vmatpush2.msra.mxu0 0.0
  %1858 = vmatprep.subr.mxu0 0.0
  %1859 = vmatpush2.msra.mxu0 0.0
  %1860 = vmatprep.subr.mxu0 0.0
  %1861 = vmatpush2.msra.mxu0 0.0
  %1862 = vmatprep.subr.mxu0 0.0
  %1863 = vmatpush2.msra.mxu0 0.0
  %1864 = vmatprep.subr.mxu0 0.0
  %1865 = vmatpush2.msra.mxu0 0.0
  %1866 = vmatprep.subr.mxu0 0.0
  %1867 = vmatpush2.msra.mxu0 0.0
  %1868 = vmatprep.mubr.f32.mxu0 0.0
  %1869 = vmatmul.mubr.f32.gmra.mxu0 %v1447
  %v1870 = vpop.f32.mrf.mxu0
  %v1871 = vadd.f32 0.0, %v1870
  %v1872 = vpop.f32.mrf.mxu0
  %1873 = vdwg.mxu0
  %v1874 = vlaneseq
  %v1875 = vshrl.u32 %v1874, 7
  %v1876 = vsub.s32 1, %v1875
  %v1877 = vrot.slane %v42, %v1876
  %v1878 = vlaneseq
  %v1879 = vshrl.u32 %v1878, 7
  %v1880 = vsub.s32 5, %v1879
  %v1881 = vrot.slane %v42, %v1880
  %v1882 = vlaneseq
  %v1883 = vshrl.u32 %v1882, 7
  %v1884 = vsub.s32 1, %v1883
  %v1885 = vrot.slane %v43, %v1884
  %v1886 = vlaneseq
  %v1887 = vshrl.u32 %v1886, 7
  %v1888 = vsub.s32 5, %v1887
  %v1889 = vrot.slane %v43, %v1888
  %v1890 = vlaneseq
  %v1891 = vshrl.u32 %v1890, 7
  %v1892 = vsub.s32 1, %v1891
  %v1893 = vrot.slane %v44, %v1892
  %v1894 = vlaneseq
  %v1895 = vshrl.u32 %v1894, 7
  %v1896 = vsub.s32 5, %v1895
  %v1897 = vrot.slane %v44, %v1896
  %v1898 = vlaneseq
  %v1899 = vshrl.u32 %v1898, 7
  %v1900 = vsub.s32 1, %v1899
  %v1901 = vrot.slane %v45, %v1900
  %v1902 = vlaneseq
  %v1903 = vshrl.u32 %v1902, 7
  %v1904 = vsub.s32 5, %v1903
  %v1905 = vrot.slane %v45, %v1904
  %v1906 = vlaneseq
  %v1907 = vshrl.u32 %v1906, 7
  %v1908 = vsub.s32 1, %v1907
  %v1909 = vrot.slane %v46, %v1908
  %v1910 = vlaneseq
  %v1911 = vshrl.u32 %v1910, 7
  %v1912 = vsub.s32 5, %v1911
  %v1913 = vrot.slane %v46, %v1912
  %v1914 = vlaneseq
  %v1915 = vshrl.u32 %v1914, 7
  %v1916 = vsub.s32 1, %v1915
  %v1917 = vrot.slane %v47, %v1916
  %v1929 = vlaneseq
  %v1930 = vshrl.u32 %v1929, 7
  %v1931 = vsub.s32 1, %v1930
  %v1932 = vrot.slane %v1877, %v1931
  %v1933 = vlaneseq
  %v1934 = vshrl.u32 %v1933, 7
  %v1935 = vsub.s32 1, %v1934
  %v1936 = vrot.slane %v1881, %v1935
  %v1937 = vlaneseq
  %v1938 = vshrl.u32 %v1937, 7
  %v1939 = vsub.s32 1, %v1938
  %v1940 = vrot.slane %v1885, %v1939
  %v1941 = vlaneseq
  %v1942 = vshrl.u32 %v1941, 7
  %v1943 = vsub.s32 1, %v1942
  %v1944 = vrot.slane %v1889, %v1943
  %v1945 = vlaneseq
  %v1946 = vshrl.u32 %v1945, 7
  %v1947 = vsub.s32 1, %v1946
  %v1948 = vrot.slane %v1893, %v1947
  %v1949 = vlaneseq
  %v1950 = vshrl.u32 %v1949, 7
  %v1951 = vsub.s32 1, %v1950
  %v1952 = vrot.slane %v1897, %v1951
  %v1953 = vlaneseq
  %v1954 = vshrl.u32 %v1953, 7
  %v1955 = vsub.s32 1, %v1954
  %v1956 = vrot.slane %v1901, %v1955
  %v1957 = vlaneseq
  %v1958 = vshrl.u32 %v1957, 7
  %v1959 = vsub.s32 1, %v1958
  %v1960 = vrot.slane %v1905, %v1959
  %v1961 = vlaneseq
  %v1962 = vshrl.u32 %v1961, 7
  %v1963 = vsub.s32 1, %v1962
  %v1964 = vrot.slane %v1909, %v1963
  %v1965 = vlaneseq
  %v1966 = vshrl.u32 %v1965, 7
  %v1967 = vsub.s32 1, %v1966
  %v1968 = vrot.slane %v1913, %v1967
  %v1969 = vlaneseq
  %v1970 = vshrl.u32 %v1969, 7
  %v1971 = vsub.s32 1, %v1970
  %v1972 = vrot.slane %v1917, %v1971
  %v1973 = vmul.f32 %v1516, %v1932
  %v1974 = vmul.f32 %v1518, %v1936
  %v1975 = vmul.f32 %v1587, %v1940
  %v1976 = vmul.f32 %v1589, %v1944
  %v1977 = vmul.f32 %v1658, %v1948
  %v1978 = vmul.f32 %v1660, %v1952
  %v1979 = vmul.f32 %v1729, %v1956
  %v1980 = vmul.f32 %v1731, %v1960
  %v1981 = vmul.f32 %v1800, %v1964
  %v1982 = vmul.f32 %v1802, %v1968
  %v1983 = vmul.f32 %v1871, %v1972
  %v1984 = vadd.f32 %v1973, %v1974
  %v1985 = vadd.f32 %v1984, %v1975
  %v1986 = vadd.f32 %v1985, %v1976
  %v1987 = vadd.f32 %v1986, %v1977
  %v1988 = vadd.f32 %v1987, %v1978
  %v1989 = vadd.f32 %v1988, %v1979
  %v1990 = vadd.f32 %v1989, %v1980
  %v1991 = vadd.f32 %v1990, %v1981
  %v1992 = vadd.f32 %v1991, %v1982
  %v1993 = vadd.f32 %v1992, %v1983
  %1994 = vadd.xlane.f32.xlu0 %v1993
  %v1995 = vpop.xlane.xlu0 %1994
  %v1996 = vmul.f32 %v1973, %v1973
  %v1997 = vmul.f32 %v1974, %v1974
  %v1998 = vmul.f32 %v1975, %v1975
  %v1999 = vmul.f32 %v1976, %v1976
  %v2000 = vmul.f32 %v1977, %v1977
  %v2001 = vmul.f32 %v1978, %v1978
  %v2002 = vmul.f32 %v1979, %v1979
  %v2003 = vmul.f32 %v1980, %v1980
  %v2004 = vmul.f32 %v1981, %v1981
  %v2005 = vmul.f32 %v1982, %v1982
  %v2006 = vmul.f32 %v1983, %v1983
  %v2007 = vadd.f32 %v1996, %v1997
  %v2008 = vadd.f32 %v2007, %v1998
  %v2009 = vadd.f32 %v2008, %v1999
  %v2010 = vadd.f32 %v2009, %v2000
  %v2011 = vadd.f32 %v2010, %v2001
  %v2012 = vadd.f32 %v2011, %v2002
  %v2013 = vadd.f32 %v2012, %v2003
  %v2014 = vadd.f32 %v2013, %v2004
  %v2015 = vadd.f32 %v2014, %v2005
  %v2016 = vadd.f32 %v2015, %v2006
  %2017 = vadd.xlane.f32.xlu0 %v2016
  %v2018 = vpop.xlane.xlu0 %2017
  %v2019 = vmul.f32 %v1995, 0.0010330578
  %v2020 = vmul.f32 %v2018, 0.0010330578
  %v2021 = vmul.f32 %v2019, %v2019
  %v2022 = vsub.f32 %v2020, %v2021
  %v2023 = vmax.f32 %v2022, 0.0
  %v2024 = vadd.f32 %v2023, 1e-05
  %v2025 = vrsqrt.pop %v2024
  %v2026 = vmul.f32 %v39, %v2025
  %v2027 = vmul.f32 %v2019, %v2026
  %2029 = vrot.lane.b32.xlu0 %v2027, 1
  %v2030 = vpop.permute.xlu0 %2029
  %v2032 = vsub.f32 %v39, %v2030
  %2034 = vset.pattern.permute.xlu0 0
  %2035 = vperm.xlu0 %2034, %v2026
  %v2036 = vpop.permute.xlu0 %2035
  %v2038 = vmul.f32 %v1516, %v2036
  %v2039 = vmul.f32 %v1518, %v2036
  %v2040 = vmul.f32 %v1587, %v2036
  %v2041 = vmul.f32 %v1589, %v2036
  %v2042 = vmul.f32 %v1658, %v2036
  %v2043 = vmul.f32 %v1660, %v2036
  %v2044 = vmul.f32 %v1729, %v2036
  %v2045 = vmul.f32 %v1731, %v2036
  %v2046 = vmul.f32 %v1800, %v2036
  %v2047 = vmul.f32 %v1802, %v2036
  %v2048 = vmul.f32 %v1871, %v2036
  %2050 = vset.pattern.permute.xlu0 1
  %2051 = vperm.xlu0 %2050, %v2032
  %v2052 = vpop.permute.xlu0 %2051
  %v2054 = vadd.f32 %v2038, %v2052
  %v2055 = vadd.f32 %v2039, %v2052
  %v2056 = vadd.f32 %v2040, %v2052
  %v2057 = vadd.f32 %v2041, %v2052
  %v2058 = vadd.f32 %v2042, %v2052
  %v2059 = vadd.f32 %v2043, %v2052
  %v2060 = vadd.f32 %v2044, %v2052
  %v2061 = vadd.f32 %v2045, %v2052
  %v2062 = vadd.f32 %v2046, %v2052
  %v2063 = vadd.f32 %v2047, %v2052
  %v2064 = vadd.f32 %v2048, %v2052
  %v2065 = vmul.f32 %v2054, 0.2
  %v2066 = vmul.f32 %v2055, 0.2
  %v2067 = vmul.f32 %v2056, 0.2
  %v2068 = vmul.f32 %v2057, 0.2
  %v2069 = vmul.f32 %v2058, 0.2
  %v2070 = vmul.f32 %v2059, 0.2
  %v2071 = vmul.f32 %v2060, 0.2
  %v2072 = vmul.f32 %v2061, 0.2
  %v2073 = vmul.f32 %v2062, 0.2
  %v2074 = vmul.f32 %v2063, 0.2
  %v2075 = vmul.f32 %v2064, 0.2
  %v2076 = vmax.f32 %v2054, %v2065
  %v2077 = vmax.f32 %v2055, %v2066
  %v2078 = vmax.f32 %v2056, %v2067
  %v2079 = vmax.f32 %v2057, %v2068
  %v2080 = vmax.f32 %v2058, %v2069
  %v2081 = vmax.f32 %v2059, %v2070
  %v2082 = vmax.f32 %v2060, %v2071
  %v2083 = vmax.f32 %v2061, %v2072
  %v2084 = vmax.f32 %v2062, %v2073
  %v2085 = vmax.f32 %v2063, %v2074
  %v2086 = vmax.f32 %v2064, %v2075
  %2098 = vrot.lane.b32.xlu0 %v2076, 127
  %v2099 = vpop.permute.xlu0 %2098
  %2100 = vrot.lane.b32.xlu0 %v2077, 127
  %v2101 = vpop.permute.xlu0 %2100
  %2102 = vrot.lane.b32.xlu0 %v2078, 127
  %v2103 = vpop.permute.xlu0 %2102
  %2104 = vrot.lane.b32.xlu0 %v2079, 127
  %v2105 = vpop.permute.xlu0 %2104
  %2106 = vrot.lane.b32.xlu0 %v2080, 127
  %v2107 = vpop.permute.xlu0 %2106
  %2108 = vrot.lane.b32.xlu0 %v2081, 127
  %v2109 = vpop.permute.xlu0 %2108
  %2110 = vrot.lane.b32.xlu0 %v2082, 127
  %v2111 = vpop.permute.xlu0 %2110
  %2112 = vrot.lane.b32.xlu0 %v2083, 127
  %v2113 = vpop.permute.xlu0 %2112
  %2114 = vrot.lane.b32.xlu0 %v2084, 127
  %v2115 = vpop.permute.xlu0 %2114
  %2116 = vrot.lane.b32.xlu0 %v2085, 127
  %v2117 = vpop.permute.xlu0 %2116
  %2118 = vrot.lane.b32.xlu0 %v2086, 127
  %v2119 = vpop.permute.xlu0 %2118
  %v2120 = vsel %vm81, %v2099, %v2101
  %v2121 = vsel %vm81, %v2101, %v2103
  %v2122 = vsel %vm81, %v2103, %v2105
  %v2123 = vsel %vm81, %v2105, %v2107
  %v2124 = vsel %vm81, %v2107, %v2109
  %v2125 = vsel %vm81, %v2109, %v2111
  %v2126 = vsel %vm81, %v2111, %v2113
  %v2127 = vsel %vm81, %v2113, %v2115
  %v2128 = vsel %vm81, %v2115, %v2117
  %v2129 = vsel %vm81, %v2117, %v2119
  %v2142 = vsel %vm81, %v2119, %v2099
  %2143 = vrot.lane.b32.xlu0 %v2076, 126
  %v2144 = vpop.permute.xlu0 %2143
  %2145 = vrot.lane.b32.xlu0 %v2077, 126
  %v2146 = vpop.permute.xlu0 %2145
  %2147 = vrot.lane.b32.xlu0 %v2078, 126
  %v2148 = vpop.permute.xlu0 %2147
  %2149 = vrot.lane.b32.xlu0 %v2079, 126
  %v2150 = vpop.permute.xlu0 %2149
  %2151 = vrot.lane.b32.xlu0 %v2080, 126
  %v2152 = vpop.permute.xlu0 %2151
  %2153 = vrot.lane.b32.xlu0 %v2081, 126
  %v2154 = vpop.permute.xlu0 %2153
  %2155 = vrot.lane.b32.xlu0 %v2082, 126
  %v2156 = vpop.permute.xlu0 %2155
  %2157 = vrot.lane.b32.xlu0 %v2083, 126
  %v2158 = vpop.permute.xlu0 %2157
  %2159 = vrot.lane.b32.xlu0 %v2084, 126
  %v2160 = vpop.permute.xlu0 %2159
  %2161 = vrot.lane.b32.xlu0 %v2085, 126
  %v2162 = vpop.permute.xlu0 %2161
  %2163 = vrot.lane.b32.xlu0 %v2086, 126
  %v2164 = vpop.permute.xlu0 %2163
  %v2165 = vsel %vm127, %v2144, %v2146
  %v2166 = vsel %vm127, %v2146, %v2148
  %v2167 = vsel %vm127, %v2148, %v2150
  %v2168 = vsel %vm127, %v2150, %v2152
  %v2169 = vsel %vm127, %v2152, %v2154
  %v2170 = vsel %vm127, %v2154, %v2156
  %v2171 = vsel %vm127, %v2156, %v2158
  %v2172 = vsel %vm127, %v2158, %v2160
  %v2173 = vsel %vm127, %v2160, %v2162
  %v2174 = vsel %vm127, %v2162, %v2164
  %v2187 = vsel %vm127, %v2164, %v2144
  %2188 = vrot.lane.b32.xlu0 %v2076, 102
  %v2189 = vpop.permute.xlu0 %2188
  %2190 = vrot.lane.b32.xlu0 %v2077, 102
  %v2191 = vpop.permute.xlu0 %2190
  %2192 = vrot.lane.b32.xlu0 %v2078, 102
  %v2193 = vpop.permute.xlu0 %2192
  %2194 = vrot.lane.b32.xlu0 %v2079, 102
  %v2195 = vpop.permute.xlu0 %2194
  %2196 = vrot.lane.b32.xlu0 %v2080, 102
  %v2197 = vpop.permute.xlu0 %2196
  %2198 = vrot.lane.b32.xlu0 %v2081, 102
  %v2199 = vpop.permute.xlu0 %2198
  %2200 = vrot.lane.b32.xlu0 %v2082, 102
  %v2201 = vpop.permute.xlu0 %2200
  %2202 = vrot.lane.b32.xlu0 %v2083, 102
  %v2203 = vpop.permute.xlu0 %2202
  %2204 = vrot.lane.b32.xlu0 %v2084, 102
  %v2205 = vpop.permute.xlu0 %2204
  %2206 = vrot.lane.b32.xlu0 %v2085, 102
  %v2207 = vpop.permute.xlu0 %2206
  %2208 = vrot.lane.b32.xlu0 %v2086, 102
  %v2209 = vpop.permute.xlu0 %2208
  %v2210 = vsel %vm173, %v2189, %v2191
  %v2211 = vsel %vm173, %v2191, %v2193
  %v2212 = vsel %vm173, %v2193, %v2195
  %v2213 = vsel %vm173, %v2195, %v2197
  %v2214 = vsel %vm173, %v2197, %v2199
  %v2215 = vsel %vm173, %v2199, %v2201
  %v2216 = vsel %vm173, %v2201, %v2203
  %v2217 = vsel %vm173, %v2203, %v2205
  %v2218 = vsel %vm173, %v2205, %v2207
  %v2219 = vsel %vm173, %v2207, %v2209
  %v2232 = vsel %vm173, %v2209, %v2189
  %2233 = vrot.lane.b32.xlu0 %v2076, 101
  %v2234 = vpop.permute.xlu0 %2233
  %2235 = vrot.lane.b32.xlu0 %v2077, 101
  %v2236 = vpop.permute.xlu0 %2235
  %2237 = vrot.lane.b32.xlu0 %v2078, 101
  %v2238 = vpop.permute.xlu0 %2237
  %2239 = vrot.lane.b32.xlu0 %v2079, 101
  %v2240 = vpop.permute.xlu0 %2239
  %2241 = vrot.lane.b32.xlu0 %v2080, 101
  %v2242 = vpop.permute.xlu0 %2241
  %2243 = vrot.lane.b32.xlu0 %v2081, 101
  %v2244 = vpop.permute.xlu0 %2243
  %2245 = vrot.lane.b32.xlu0 %v2082, 101
  %v2246 = vpop.permute.xlu0 %2245
  %2247 = vrot.lane.b32.xlu0 %v2083, 101
  %v2248 = vpop.permute.xlu0 %2247
  %2249 = vrot.lane.b32.xlu0 %v2084, 101
  %v2250 = vpop.permute.xlu0 %2249
  %2251 = vrot.lane.b32.xlu0 %v2085, 101
  %v2252 = vpop.permute.xlu0 %2251
  %2253 = vrot.lane.b32.xlu0 %v2086, 101
  %v2254 = vpop.permute.xlu0 %2253
  %v2255 = vsel %vm219, %v2234, %v2236
  %v2256 = vsel %vm219, %v2236, %v2238
  %v2257 = vsel %vm219, %v2238, %v2240
  %v2258 = vsel %vm219, %v2240, %v2242
  %v2259 = vsel %vm219, %v2242, %v2244
  %v2260 = vsel %vm219, %v2244, %v2246
  %v2261 = vsel %vm219, %v2246, %v2248
  %v2262 = vsel %vm219, %v2248, %v2250
  %v2263 = vsel %vm219, %v2250, %v2252
  %v2264 = vsel %vm219, %v2252, %v2254
  %v2277 = vsel %vm219, %v2254, %v2234
  %2278 = vrot.lane.b32.xlu0 %v2076, 100
  %v2279 = vpop.permute.xlu0 %2278
  %2280 = vrot.lane.b32.xlu0 %v2077, 100
  %v2281 = vpop.permute.xlu0 %2280
  %2282 = vrot.lane.b32.xlu0 %v2078, 100
  %v2283 = vpop.permute.xlu0 %2282
  %2284 = vrot.lane.b32.xlu0 %v2079, 100
  %v2285 = vpop.permute.xlu0 %2284
  %2286 = vrot.lane.b32.xlu0 %v2080, 100
  %v2287 = vpop.permute.xlu0 %2286
  %2288 = vrot.lane.b32.xlu0 %v2081, 100
  %v2289 = vpop.permute.xlu0 %2288
  %2290 = vrot.lane.b32.xlu0 %v2082, 100
  %v2291 = vpop.permute.xlu0 %2290
  %2292 = vrot.lane.b32.xlu0 %v2083, 100
  %v2293 = vpop.permute.xlu0 %2292
  %2294 = vrot.lane.b32.xlu0 %v2084, 100
  %v2295 = vpop.permute.xlu0 %2294
  %2296 = vrot.lane.b32.xlu0 %v2085, 100
  %v2297 = vpop.permute.xlu0 %2296
  %2298 = vrot.lane.b32.xlu0 %v2086, 100
  %v2299 = vpop.permute.xlu0 %2298
  %v2300 = vsel %vm265, %v2279, %v2281
  %v2301 = vsel %vm265, %v2281, %v2283
  %v2302 = vsel %vm265, %v2283, %v2285
  %v2303 = vsel %vm265, %v2285, %v2287
  %v2304 = vsel %vm265, %v2287, %v2289
  %v2305 = vsel %vm265, %v2289, %v2291
  %v2306 = vsel %vm265, %v2291, %v2293
  %v2307 = vsel %vm265, %v2293, %v2295
  %v2308 = vsel %vm265, %v2295, %v2297
  %v2309 = vsel %vm265, %v2297, %v2299
  %v2322 = vsel %vm265, %v2299, %v2279
  %2323 = vrot.lane.b32.xlu0 %v2076, 76
  %v2324 = vpop.permute.xlu0 %2323
  %2325 = vrot.lane.b32.xlu0 %v2077, 76
  %v2326 = vpop.permute.xlu0 %2325
  %2327 = vrot.lane.b32.xlu0 %v2078, 76
  %v2328 = vpop.permute.xlu0 %2327
  %2329 = vrot.lane.b32.xlu0 %v2079, 76
  %v2330 = vpop.permute.xlu0 %2329
  %2331 = vrot.lane.b32.xlu0 %v2080, 76
  %v2332 = vpop.permute.xlu0 %2331
  %2333 = vrot.lane.b32.xlu0 %v2081, 76
  %v2334 = vpop.permute.xlu0 %2333
  %2335 = vrot.lane.b32.xlu0 %v2082, 76
  %v2336 = vpop.permute.xlu0 %2335
  %2337 = vrot.lane.b32.xlu0 %v2083, 76
  %v2338 = vpop.permute.xlu0 %2337
  %2339 = vrot.lane.b32.xlu0 %v2084, 76
  %v2340 = vpop.permute.xlu0 %2339
  %2341 = vrot.lane.b32.xlu0 %v2085, 76
  %v2342 = vpop.permute.xlu0 %2341
  %2343 = vrot.lane.b32.xlu0 %v2086, 76
  %v2344 = vpop.permute.xlu0 %2343
  %v2345 = vsel %vm311, %v2324, %v2326
  %v2346 = vsel %vm311, %v2326, %v2328
  %v2347 = vsel %vm311, %v2328, %v2330
  %v2348 = vsel %vm311, %v2330, %v2332
  %v2349 = vsel %vm311, %v2332, %v2334
  %v2350 = vsel %vm311, %v2334, %v2336
  %v2351 = vsel %vm311, %v2336, %v2338
  %v2352 = vsel %vm311, %v2338, %v2340
  %v2353 = vsel %vm311, %v2340, %v2342
  %v2354 = vsel %vm311, %v2342, %v2344
  %v2367 = vsel %vm311, %v2344, %v2324
  %2368 = vrot.lane.b32.xlu0 %v2076, 75
  %v2369 = vpop.permute.xlu0 %2368
  %2370 = vrot.lane.b32.xlu0 %v2077, 75
  %v2371 = vpop.permute.xlu0 %2370
  %2372 = vrot.lane.b32.xlu0 %v2078, 75
  %v2373 = vpop.permute.xlu0 %2372
  %2374 = vrot.lane.b32.xlu0 %v2079, 75
  %v2375 = vpop.permute.xlu0 %2374
  %2376 = vrot.lane.b32.xlu0 %v2080, 75
  %v2377 = vpop.permute.xlu0 %2376
  %2378 = vrot.lane.b32.xlu0 %v2081, 75
  %v2379 = vpop.permute.xlu0 %2378
  %2380 = vrot.lane.b32.xlu0 %v2082, 75
  %v2381 = vpop.permute.xlu0 %2380
  %2382 = vrot.lane.b32.xlu0 %v2083, 75
  %v2383 = vpop.permute.xlu0 %2382
  %2384 = vrot.lane.b32.xlu0 %v2084, 75
  %v2385 = vpop.permute.xlu0 %2384
  %2386 = vrot.lane.b32.xlu0 %v2085, 75
  %v2387 = vpop.permute.xlu0 %2386
  %2388 = vrot.lane.b32.xlu0 %v2086, 75
  %v2389 = vpop.permute.xlu0 %2388
  %v2390 = vsel %vm357, %v2369, %v2371
  %v2391 = vsel %vm357, %v2371, %v2373
  %v2392 = vsel %vm357, %v2373, %v2375
  %v2393 = vsel %vm357, %v2375, %v2377
  %v2394 = vsel %vm357, %v2377, %v2379
  %v2395 = vsel %vm357, %v2379, %v2381
  %v2396 = vsel %vm357, %v2381, %v2383
  %v2397 = vsel %vm357, %v2383, %v2385
  %v2398 = vsel %vm357, %v2385, %v2387
  %v2399 = vsel %vm357, %v2387, %v2389
  %v2412 = vsel %vm357, %v2389, %v2369
  %2413 = vrot.lane.b32.xlu0 %v2076, 74
  %v2414 = vpop.permute.xlu0 %2413
  %2415 = vrot.lane.b32.xlu0 %v2077, 74
  %v2416 = vpop.permute.xlu0 %2415
  %2417 = vrot.lane.b32.xlu0 %v2078, 74
  %v2418 = vpop.permute.xlu0 %2417
  %2419 = vrot.lane.b32.xlu0 %v2079, 74
  %v2420 = vpop.permute.xlu0 %2419
  %2421 = vrot.lane.b32.xlu0 %v2080, 74
  %v2422 = vpop.permute.xlu0 %2421
  %2423 = vrot.lane.b32.xlu0 %v2081, 74
  %v2424 = vpop.permute.xlu0 %2423
  %2425 = vrot.lane.b32.xlu0 %v2082, 74
  %v2426 = vpop.permute.xlu0 %2425
  %2427 = vrot.lane.b32.xlu0 %v2083, 74
  %v2428 = vpop.permute.xlu0 %2427
  %2429 = vrot.lane.b32.xlu0 %v2084, 74
  %v2430 = vpop.permute.xlu0 %2429
  %2431 = vrot.lane.b32.xlu0 %v2085, 74
  %v2432 = vpop.permute.xlu0 %2431
  %2433 = vrot.lane.b32.xlu0 %v2086, 74
  %v2434 = vpop.permute.xlu0 %2433
  %v2435 = vsel %vm403, %v2414, %v2416
  %v2436 = vsel %vm403, %v2416, %v2418
  %v2437 = vsel %vm403, %v2418, %v2420
  %v2438 = vsel %vm403, %v2420, %v2422
  %v2439 = vsel %vm403, %v2422, %v2424
  %v2440 = vsel %vm403, %v2424, %v2426
  %v2441 = vsel %vm403, %v2426, %v2428
  %v2442 = vsel %vm403, %v2428, %v2430
  %v2443 = vsel %vm403, %v2430, %v2432
  %v2444 = vsel %vm403, %v2432, %v2434
  %v2457 = vsel %vm403, %v2434, %v2414
  %v2459 = vsel %vm427, %v36, 0
  %2461 = vmatprep.subr.mxu0 0.0
  %2462 = vmatpush1.msra.mxu0 0.0
  %2463 = vmatprep.subr.mxu0 0.0
  %2464 = vmatpush1.msra.mxu0 0.0
  %2465 = vmatprep.subr.mxu0 0.0
  %2466 = vmatpush1.msra.mxu0 0.0
  %2467 = vmatprep.subr.mxu0 0.0
  %2468 = vmatpush1.msra.mxu0 0.0
  %2469 = vmatprep.subr.mxu0 0.0
  %2470 = vmatpush1.msra.mxu0 0.0
  %2471 = vmatprep.subr.mxu0 0.0
  %2472 = vmatpush1.msra.mxu0 0.0
  %2473 = vmatprep.subr.mxu0 0.0
  %2474 = vmatpush1.msra.mxu0 0.0
  %2475 = vmatprep.subr.mxu0 %v2436
  %2476 = vmatpush1.msra.mxu0 %v2435
  %2477 = vmatprep.subr.mxu0 %v2391
  %2478 = vmatpush1.msra.mxu0 %v2390
  %2479 = vmatprep.subr.mxu0 %v2346
  %2480 = vmatpush1.msra.mxu0 %v2345
  %2481 = vmatprep.subr.mxu0 %v2301
  %2482 = vmatpush1.msra.mxu0 %v2300
  %2483 = vmatprep.subr.mxu0 %v2256
  %2484 = vmatpush1.msra.mxu0 %v2255
  %2485 = vmatprep.subr.mxu0 %v2211
  %2486 = vmatpush1.msra.mxu0 %v2210
  %2487 = vmatprep.subr.mxu0 %v2166
  %2488 = vmatpush1.msra.mxu0 %v2165
  %2489 = vmatprep.subr.mxu0 %v2121
  %2490 = vmatpush1.msra.mxu0 %v2120
  %2491 = vmatprep.subr.mxu0 %v2077
  %2492 = vmatpush1.msra.mxu0 %v2076
  %2493 = vmatprep.subr.mxu0 0.0
  %2494 = vmatpush2.msra.mxu0 0.0
  %2495 = vmatprep.subr.mxu0 0.0
  %2496 = vmatpush2.msra.mxu0 0.0
  %2497 = vmatprep.subr.mxu0 0.0
  %2498 = vmatpush2.msra.mxu0 0.0
  %2499 = vmatprep.subr.mxu0 0.0
  %2500 = vmatpush2.msra.mxu0 0.0
  %2501 = vmatprep.subr.mxu0 0.0
  %2502 = vmatpush2.msra.mxu0 0.0
  %2503 = vmatprep.subr.mxu0 0.0
  %2504 = vmatpush2.msra.mxu0 0.0
  %2505 = vmatprep.subr.mxu0 0.0
  %2506 = vmatpush2.msra.mxu0 0.0
  %2507 = vmatprep.subr.mxu0 0.0
  %2508 = vmatpush2.msra.mxu0 0.0
  %2509 = vmatprep.subr.mxu0 0.0
  %2510 = vmatpush2.msra.mxu0 0.0
  %2511 = vmatprep.subr.mxu0 0.0
  %2512 = vmatpush2.msra.mxu0 0.0
  %2513 = vmatprep.subr.mxu0 0.0
  %2514 = vmatpush2.msra.mxu0 0.0
  %2515 = vmatprep.subr.mxu0 0.0
  %2516 = vmatpush2.msra.mxu0 0.0
  %2517 = vmatprep.subr.mxu0 0.0
  %2518 = vmatpush2.msra.mxu0 0.0
  %2519 = vmatprep.subr.mxu0 0.0
  %2520 = vmatpush2.msra.mxu0 0.0
  %2521 = vmatprep.subr.mxu0 0.0
  %2522 = vmatpush2.msra.mxu0 0.0
  %2523 = vmatprep.subr.mxu0 0.0
  %2524 = vmatpush2.msra.mxu0 0.0
  %2525 = vmatprep.mubr.f32.mxu0 0.0
  %2526 = vmatmul.mubr.f32.gmra.mxu0 %v2459
  %v2527 = vpop.f32.mrf.mxu0
  %v2528 = vadd.f32 0.0, %v2527
  %v2529 = vpop.f32.mrf.mxu0
  %v2530 = vadd.f32 0.0, %v2529
  %2531 = vdwg.mxu0
  %2532 = vmatprep.subr.mxu0 0.0
  %2533 = vmatpush1.msra.mxu0 0.0
  %2534 = vmatprep.subr.mxu0 0.0
  %2535 = vmatpush1.msra.mxu0 0.0
  %2536 = vmatprep.subr.mxu0 0.0
  %2537 = vmatpush1.msra.mxu0 0.0
  %2538 = vmatprep.subr.mxu0 0.0
  %2539 = vmatpush1.msra.mxu0 0.0
  %2540 = vmatprep.subr.mxu0 0.0
  %2541 = vmatpush1.msra.mxu0 0.0
  %2542 = vmatprep.subr.mxu0 0.0
  %2543 = vmatpush1.msra.mxu0 0.0
  %2544 = vmatprep.subr.mxu0 0.0
  %2545 = vmatpush1.msra.mxu0 0.0
  %2546 = vmatprep.subr.mxu0 %v2438
  %2547 = vmatpush1.msra.mxu0 %v2437
  %2548 = vmatprep.subr.mxu0 %v2393
  %2549 = vmatpush1.msra.mxu0 %v2392
  %2550 = vmatprep.subr.mxu0 %v2348
  %2551 = vmatpush1.msra.mxu0 %v2347
  %2552 = vmatprep.subr.mxu0 %v2303
  %2553 = vmatpush1.msra.mxu0 %v2302
  %2554 = vmatprep.subr.mxu0 %v2258
  %2555 = vmatpush1.msra.mxu0 %v2257
  %2556 = vmatprep.subr.mxu0 %v2213
  %2557 = vmatpush1.msra.mxu0 %v2212
  %2558 = vmatprep.subr.mxu0 %v2168
  %2559 = vmatpush1.msra.mxu0 %v2167
  %2560 = vmatprep.subr.mxu0 %v2123
  %2561 = vmatpush1.msra.mxu0 %v2122
  %2562 = vmatprep.subr.mxu0 %v2079
  %2563 = vmatpush1.msra.mxu0 %v2078
  %2564 = vmatprep.subr.mxu0 0.0
  %2565 = vmatpush2.msra.mxu0 0.0
  %2566 = vmatprep.subr.mxu0 0.0
  %2567 = vmatpush2.msra.mxu0 0.0
  %2568 = vmatprep.subr.mxu0 0.0
  %2569 = vmatpush2.msra.mxu0 0.0
  %2570 = vmatprep.subr.mxu0 0.0
  %2571 = vmatpush2.msra.mxu0 0.0
  %2572 = vmatprep.subr.mxu0 0.0
  %2573 = vmatpush2.msra.mxu0 0.0
  %2574 = vmatprep.subr.mxu0 0.0
  %2575 = vmatpush2.msra.mxu0 0.0
  %2576 = vmatprep.subr.mxu0 0.0
  %2577 = vmatpush2.msra.mxu0 0.0
  %2578 = vmatprep.subr.mxu0 0.0
  %2579 = vmatpush2.msra.mxu0 0.0
  %2580 = vmatprep.subr.mxu0 0.0
  %2581 = vmatpush2.msra.mxu0 0.0
  %2582 = vmatprep.subr.mxu0 0.0
  %2583 = vmatpush2.msra.mxu0 0.0
  %2584 = vmatprep.subr.mxu0 0.0
  %2585 = vmatpush2.msra.mxu0 0.0
  %2586 = vmatprep.subr.mxu0 0.0
  %2587 = vmatpush2.msra.mxu0 0.0
  %2588 = vmatprep.subr.mxu0 0.0
  %2589 = vmatpush2.msra.mxu0 0.0
  %2590 = vmatprep.subr.mxu0 0.0
  %2591 = vmatpush2.msra.mxu0 0.0
  %2592 = vmatprep.subr.mxu0 0.0
  %2593 = vmatpush2.msra.mxu0 0.0
  %2594 = vmatprep.subr.mxu0 0.0
  %2595 = vmatpush2.msra.mxu0 0.0
  %2596 = vmatprep.mubr.f32.mxu0 0.0
  %2597 = vmatmul.mubr.f32.gmra.mxu0 %v2459
  %v2598 = vpop.f32.mrf.mxu0
  %v2599 = vadd.f32 0.0, %v2598
  %v2600 = vpop.f32.mrf.mxu0
  %v2601 = vadd.f32 0.0, %v2600
  %2602 = vdwg.mxu0
  %2603 = vmatprep.subr.mxu0 0.0
  %2604 = vmatpush1.msra.mxu0 0.0
  %2605 = vmatprep.subr.mxu0 0.0
  %2606 = vmatpush1.msra.mxu0 0.0
  %2607 = vmatprep.subr.mxu0 0.0
  %2608 = vmatpush1.msra.mxu0 0.0
  %2609 = vmatprep.subr.mxu0 0.0
  %2610 = vmatpush1.msra.mxu0 0.0
  %2611 = vmatprep.subr.mxu0 0.0
  %2612 = vmatpush1.msra.mxu0 0.0
  %2613 = vmatprep.subr.mxu0 0.0
  %2614 = vmatpush1.msra.mxu0 0.0
  %2615 = vmatprep.subr.mxu0 0.0
  %2616 = vmatpush1.msra.mxu0 0.0
  %2617 = vmatprep.subr.mxu0 %v2440
  %2618 = vmatpush1.msra.mxu0 %v2439
  %2619 = vmatprep.subr.mxu0 %v2395
  %2620 = vmatpush1.msra.mxu0 %v2394
  %2621 = vmatprep.subr.mxu0 %v2350
  %2622 = vmatpush1.msra.mxu0 %v2349
  %2623 = vmatprep.subr.mxu0 %v2305
  %2624 = vmatpush1.msra.mxu0 %v2304
  %2625 = vmatprep.subr.mxu0 %v2260
  %2626 = vmatpush1.msra.mxu0 %v2259
  %2627 = vmatprep.subr.mxu0 %v2215
  %2628 = vmatpush1.msra.mxu0 %v2214
  %2629 = vmatprep.subr.mxu0 %v2170
  %2630 = vmatpush1.msra.mxu0 %v2169
  %2631 = vmatprep.subr.mxu0 %v2125
  %2632 = vmatpush1.msra.mxu0 %v2124
  %2633 = vmatprep.subr.mxu0 %v2081
  %2634 = vmatpush1.msra.mxu0 %v2080
  %2635 = vmatprep.subr.mxu0 0.0
  %2636 = vmatpush2.msra.mxu0 0.0
  %2637 = vmatprep.subr.mxu0 0.0
  %2638 = vmatpush2.msra.mxu0 0.0
  %2639 = vmatprep.subr.mxu0 0.0
  %2640 = vmatpush2.msra.mxu0 0.0
  %2641 = vmatprep.subr.mxu0 0.0
  %2642 = vmatpush2.msra.mxu0 0.0
  %2643 = vmatprep.subr.mxu0 0.0
  %2644 = vmatpush2.msra.mxu0 0.0
  %2645 = vmatprep.subr.mxu0 0.0
  %2646 = vmatpush2.msra.mxu0 0.0
  %2647 = vmatprep.subr.mxu0 0.0
  %2648 = vmatpush2.msra.mxu0 0.0
  %2649 = vmatprep.subr.mxu0 0.0
  %2650 = vmatpush2.msra.mxu0 0.0
  %2651 = vmatprep.subr.mxu0 0.0
  %2652 = vmatpush2.msra.mxu0 0.0
  %2653 = vmatprep.subr.mxu0 0.0
  %2654 = vmatpush2.msra.mxu0 0.0
  %2655 = vmatprep.subr.mxu0 0.0
  %2656 = vmatpush2.msra.mxu0 0.0
  %2657 = vmatprep.subr.mxu0 0.0
  %2658 = vmatpush2.msra.mxu0 0.0
  %2659 = vmatprep.subr.mxu0 0.0
  %2660 = vmatpush2.msra.mxu0 0.0
  %2661 = vmatprep.subr.mxu0 0.0
  %2662 = vmatpush2.msra.mxu0 0.0
  %2663 = vmatprep.subr.mxu0 0.0
  %2664 = vmatpush2.msra.mxu0 0.0
  %2665 = vmatprep.subr.mxu0 0.0
  %2666 = vmatpush2.msra.mxu0 0.0
  %2667 = vmatprep.mubr.f32.mxu0 0.0
  %2668 = vmatmul.mubr.f32.gmra.mxu0 %v2459
  %v2669 = vpop.f32.mrf.mxu0
  %v2670 = vadd.f32 0.0, %v2669
  %v2671 = vpop.f32.mrf.mxu0
  %v2672 = vadd.f32 0.0, %v2671
  %2673 = vdwg.mxu0
  %2674 = vmatprep.subr.mxu0 0.0
  %2675 = vmatpush1.msra.mxu0 0.0
  %2676 = vmatprep.subr.mxu0 0.0
  %2677 = vmatpush1.msra.mxu0 0.0
  %2678 = vmatprep.subr.mxu0 0.0
  %2679 = vmatpush1.msra.mxu0 0.0
  %2680 = vmatprep.subr.mxu0 0.0
  %2681 = vmatpush1.msra.mxu0 0.0
  %2682 = vmatprep.subr.mxu0 0.0
  %2683 = vmatpush1.msra.mxu0 0.0
  %2684 = vmatprep.subr.mxu0 0.0
  %2685 = vmatpush1.msra.mxu0 0.0
  %2686 = vmatprep.subr.mxu0 0.0
  %2687 = vmatpush1.msra.mxu0 0.0
  %2688 = vmatprep.subr.mxu0 %v2442
  %2689 = vmatpush1.msra.mxu0 %v2441
  %2690 = vmatprep.subr.mxu0 %v2397
  %2691 = vmatpush1.msra.mxu0 %v2396
  %2692 = vmatprep.subr.mxu0 %v2352
  %2693 = vmatpush1.msra.mxu0 %v2351
  %2694 = vmatprep.subr.mxu0 %v2307
  %2695 = vmatpush1.msra.mxu0 %v2306
  %2696 = vmatprep.subr.mxu0 %v2262
  %2697 = vmatpush1.msra.mxu0 %v2261
  %2698 = vmatprep.subr.mxu0 %v2217
  %2699 = vmatpush1.msra.mxu0 %v2216
  %2700 = vmatprep.subr.mxu0 %v2172
  %2701 = vmatpush1.msra.mxu0 %v2171
  %2702 = vmatprep.subr.mxu0 %v2127
  %2703 = vmatpush1.msra.mxu0 %v2126
  %2704 = vmatprep.subr.mxu0 %v2083
  %2705 = vmatpush1.msra.mxu0 %v2082
  %2706 = vmatprep.subr.mxu0 0.0
  %2707 = vmatpush2.msra.mxu0 0.0
  %2708 = vmatprep.subr.mxu0 0.0
  %2709 = vmatpush2.msra.mxu0 0.0
  %2710 = vmatprep.subr.mxu0 0.0
  %2711 = vmatpush2.msra.mxu0 0.0
  %2712 = vmatprep.subr.mxu0 0.0
  %2713 = vmatpush2.msra.mxu0 0.0
  %2714 = vmatprep.subr.mxu0 0.0
  %2715 = vmatpush2.msra.mxu0 0.0
  %2716 = vmatprep.subr.mxu0 0.0
  %2717 = vmatpush2.msra.mxu0 0.0
  %2718 = vmatprep.subr.mxu0 0.0
  %2719 = vmatpush2.msra.mxu0 0.0
  %2720 = vmatprep.subr.mxu0 0.0
  %2721 = vmatpush2.msra.mxu0 0.0
  %2722 = vmatprep.subr.mxu0 0.0
  %2723 = vmatpush2.msra.mxu0 0.0
  %2724 = vmatprep.subr.mxu0 0.0
  %2725 = vmatpush2.msra.mxu0 0.0
  %2726 = vmatprep.subr.mxu0 0.0
  %2727 = vmatpush2.msra.mxu0 0.0
  %2728 = vmatprep.subr.mxu0 0.0
  %2729 = vmatpush2.msra.mxu0 0.0
  %2730 = vmatprep.subr.mxu0 0.0
  %2731 = vmatpush2.msra.mxu0 0.0
  %2732 = vmatprep.subr.mxu0 0.0
  %2733 = vmatpush2.msra.mxu0 0.0
  %2734 = vmatprep.subr.mxu0 0.0
  %2735 = vmatpush2.msra.mxu0 0.0
  %2736 = vmatprep.subr.mxu0 0.0
  %2737 = vmatpush2.msra.mxu0 0.0
  %2738 = vmatprep.mubr.f32.mxu0 0.0
  %2739 = vmatmul.mubr.f32.gmra.mxu0 %v2459
  %v2740 = vpop.f32.mrf.mxu0
  %v2741 = vadd.f32 0.0, %v2740
  %v2742 = vpop.f32.mrf.mxu0
  %v2743 = vadd.f32 0.0, %v2742
  %2744 = vdwg.mxu0
  %2745 = vmatprep.subr.mxu0 0.0
  %2746 = vmatpush1.msra.mxu0 0.0
  %2747 = vmatprep.subr.mxu0 0.0
  %2748 = vmatpush1.msra.mxu0 0.0
  %2749 = vmatprep.subr.mxu0 0.0
  %2750 = vmatpush1.msra.mxu0 0.0
  %2751 = vmatprep.subr.mxu0 0.0
  %2752 = vmatpush1.msra.mxu0 0.0
  %2753 = vmatprep.subr.mxu0 0.0
  %2754 = vmatpush1.msra.mxu0 0.0
  %2755 = vmatprep.subr.mxu0 0.0
  %2756 = vmatpush1.msra.mxu0 0.0
  %2757 = vmatprep.subr.mxu0 0.0
  %2758 = vmatpush1.msra.mxu0 0.0
  %2759 = vmatprep.subr.mxu0 %v2444
  %2760 = vmatpush1.msra.mxu0 %v2443
  %2761 = vmatprep.subr.mxu0 %v2399
  %2762 = vmatpush1.msra.mxu0 %v2398
  %2763 = vmatprep.subr.mxu0 %v2354
  %2764 = vmatpush1.msra.mxu0 %v2353
  %2765 = vmatprep.subr.mxu0 %v2309
  %2766 = vmatpush1.msra.mxu0 %v2308
  %2767 = vmatprep.subr.mxu0 %v2264
  %2768 = vmatpush1.msra.mxu0 %v2263
  %2769 = vmatprep.subr.mxu0 %v2219
  %2770 = vmatpush1.msra.mxu0 %v2218
  %2771 = vmatprep.subr.mxu0 %v2174
  %2772 = vmatpush1.msra.mxu0 %v2173
  %2773 = vmatprep.subr.mxu0 %v2129
  %2774 = vmatpush1.msra.mxu0 %v2128
  %2775 = vmatprep.subr.mxu0 %v2085
  %2776 = vmatpush1.msra.mxu0 %v2084
  %2777 = vmatprep.subr.mxu0 0.0
  %2778 = vmatpush2.msra.mxu0 0.0
  %2779 = vmatprep.subr.mxu0 0.0
  %2780 = vmatpush2.msra.mxu0 0.0
  %2781 = vmatprep.subr.mxu0 0.0
  %2782 = vmatpush2.msra.mxu0 0.0
  %2783 = vmatprep.subr.mxu0 0.0
  %2784 = vmatpush2.msra.mxu0 0.0
  %2785 = vmatprep.subr.mxu0 0.0
  %2786 = vmatpush2.msra.mxu0 0.0
  %2787 = vmatprep.subr.mxu0 0.0
  %2788 = vmatpush2.msra.mxu0 0.0
  %2789 = vmatprep.subr.mxu0 0.0
  %2790 = vmatpush2.msra.mxu0 0.0
  %2791 = vmatprep.subr.mxu0 0.0
  %2792 = vmatpush2.msra.mxu0 0.0
  %2793 = vmatprep.subr.mxu0 0.0
  %2794 = vmatpush2.msra.mxu0 0.0
  %2795 = vmatprep.subr.mxu0 0.0
  %2796 = vmatpush2.msra.mxu0 0.0
  %2797 = vmatprep.subr.mxu0 0.0
  %2798 = vmatpush2.msra.mxu0 0.0
  %2799 = vmatprep.subr.mxu0 0.0
  %2800 = vmatpush2.msra.mxu0 0.0
  %2801 = vmatprep.subr.mxu0 0.0
  %2802 = vmatpush2.msra.mxu0 0.0
  %2803 = vmatprep.subr.mxu0 0.0
  %2804 = vmatpush2.msra.mxu0 0.0
  %2805 = vmatprep.subr.mxu0 0.0
  %2806 = vmatpush2.msra.mxu0 0.0
  %2807 = vmatprep.subr.mxu0 0.0
  %2808 = vmatpush2.msra.mxu0 0.0
  %2809 = vmatprep.mubr.f32.mxu0 0.0
  %2810 = vmatmul.mubr.f32.gmra.mxu0 %v2459
  %v2811 = vpop.f32.mrf.mxu0
  %v2812 = vadd.f32 0.0, %v2811
  %v2813 = vpop.f32.mrf.mxu0
  %v2814 = vadd.f32 0.0, %v2813
  %2815 = vdwg.mxu0
  %2816 = vmatprep.subr.mxu0 0.0
  %2817 = vmatpush1.msra.mxu0 0.0
  %2818 = vmatprep.subr.mxu0 0.0
  %2819 = vmatpush1.msra.mxu0 0.0
  %2820 = vmatprep.subr.mxu0 0.0
  %2821 = vmatpush1.msra.mxu0 0.0
  %2822 = vmatprep.subr.mxu0 0.0
  %2823 = vmatpush1.msra.mxu0 0.0
  %2824 = vmatprep.subr.mxu0 0.0
  %2825 = vmatpush1.msra.mxu0 0.0
  %2826 = vmatprep.subr.mxu0 0.0
  %2827 = vmatpush1.msra.mxu0 0.0
  %2828 = vmatprep.subr.mxu0 0.0
  %2829 = vmatpush1.msra.mxu0 0.0
  %2830 = vmatprep.subr.mxu0 0.0
  %2831 = vmatpush1.msra.mxu0 %v2457
  %2832 = vmatprep.subr.mxu0 0.0
  %2833 = vmatpush1.msra.mxu0 %v2412
  %2834 = vmatprep.subr.mxu0 0.0
  %2835 = vmatpush1.msra.mxu0 %v2367
  %2836 = vmatprep.subr.mxu0 0.0
  %2837 = vmatpush1.msra.mxu0 %v2322
  %2838 = vmatprep.subr.mxu0 0.0
  %2839 = vmatpush1.msra.mxu0 %v2277
  %2840 = vmatprep.subr.mxu0 0.0
  %2841 = vmatpush1.msra.mxu0 %v2232
  %2842 = vmatprep.subr.mxu0 0.0
  %2843 = vmatpush1.msra.mxu0 %v2187
  %2844 = vmatprep.subr.mxu0 0.0
  %2845 = vmatpush1.msra.mxu0 %v2142
  %2846 = vmatprep.subr.mxu0 0.0
  %2847 = vmatpush1.msra.mxu0 %v2086
  %2848 = vmatprep.subr.mxu0 0.0
  %2849 = vmatpush2.msra.mxu0 0.0
  %2850 = vmatprep.subr.mxu0 0.0
  %2851 = vmatpush2.msra.mxu0 0.0
  %2852 = vmatprep.subr.mxu0 0.0
  %2853 = vmatpush2.msra.mxu0 0.0
  %2854 = vmatprep.subr.mxu0 0.0
  %2855 = vmatpush2.msra.mxu0 0.0
  %2856 = vmatprep.subr.mxu0 0.0
  %2857 = vmatpush2.msra.mxu0 0.0
  %2858 = vmatprep.subr.mxu0 0.0
  %2859 = vmatpush2.msra.mxu0 0.0
  %2860 = vmatprep.subr.mxu0 0.0
  %2861 = vmatpush2.msra.mxu0 0.0
  %2862 = vmatprep.subr.mxu0 0.0
  %2863 = vmatpush2.msra.mxu0 0.0
  %2864 = vmatprep.subr.mxu0 0.0
  %2865 = vmatpush2.msra.mxu0 0.0
  %2866 = vmatprep.subr.mxu0 0.0
  %2867 = vmatpush2.msra.mxu0 0.0
  %2868 = vmatprep.subr.mxu0 0.0
  %2869 = vmatpush2.msra.mxu0 0.0
  %2870 = vmatprep.subr.mxu0 0.0
  %2871 = vmatpush2.msra.mxu0 0.0
  %2872 = vmatprep.subr.mxu0 0.0
  %2873 = vmatpush2.msra.mxu0 0.0
  %2874 = vmatprep.subr.mxu0 0.0
  %2875 = vmatpush2.msra.mxu0 0.0
  %2876 = vmatprep.subr.mxu0 0.0
  %2877 = vmatpush2.msra.mxu0 0.0
  %2878 = vmatprep.subr.mxu0 0.0
  %2879 = vmatpush2.msra.mxu0 0.0
  %2880 = vmatprep.mubr.f32.mxu0 0.0
  %2881 = vmatmul.mubr.f32.gmra.mxu0 %v2459
  %v2882 = vpop.f32.mrf.mxu0
  %v2883 = vadd.f32 0.0, %v2882
  %v2884 = vpop.f32.mrf.mxu0
  %2885 = vdwg.mxu0
  %v2886 = vlaneseq
  %v2887 = vshrl.u32 %v2886, 7
  %v2888 = vsub.s32 2, %v2887
  %v2889 = vrot.slane %v42, %v2888
  %v2890 = vlaneseq
  %v2891 = vshrl.u32 %v2890, 7
  %v2892 = vsub.s32 6, %v2891
  %v2893 = vrot.slane %v42, %v2892
  %v2894 = vlaneseq
  %v2895 = vshrl.u32 %v2894, 7
  %v2896 = vsub.s32 2, %v2895
  %v2897 = vrot.slane %v43, %v2896
  %v2898 = vlaneseq
  %v2899 = vshrl.u32 %v2898, 7
  %v2900 = vsub.s32 6, %v2899
  %v2901 = vrot.slane %v43, %v2900
  %v2902 = vlaneseq
  %v2903 = vshrl.u32 %v2902, 7
  %v2904 = vsub.s32 2, %v2903
  %v2905 = vrot.slane %v44, %v2904
  %v2906 = vlaneseq
  %v2907 = vshrl.u32 %v2906, 7
  %v2908 = vsub.s32 6, %v2907
  %v2909 = vrot.slane %v44, %v2908
  %v2910 = vlaneseq
  %v2911 = vshrl.u32 %v2910, 7
  %v2912 = vsub.s32 2, %v2911
  %v2913 = vrot.slane %v45, %v2912
  %v2914 = vlaneseq
  %v2915 = vshrl.u32 %v2914, 7
  %v2916 = vsub.s32 6, %v2915
  %v2917 = vrot.slane %v45, %v2916
  %v2918 = vlaneseq
  %v2919 = vshrl.u32 %v2918, 7
  %v2920 = vsub.s32 2, %v2919
  %v2921 = vrot.slane %v46, %v2920
  %v2922 = vlaneseq
  %v2923 = vshrl.u32 %v2922, 7
  %v2924 = vsub.s32 6, %v2923
  %v2925 = vrot.slane %v46, %v2924
  %v2926 = vlaneseq
  %v2927 = vshrl.u32 %v2926, 7
  %v2928 = vsub.s32 2, %v2927
  %v2929 = vrot.slane %v47, %v2928
  %v2941 = vlaneseq
  %v2942 = vshrl.u32 %v2941, 7
  %v2943 = vsub.s32 2, %v2942
  %v2944 = vrot.slane %v2889, %v2943
  %v2945 = vlaneseq
  %v2946 = vshrl.u32 %v2945, 7
  %v2947 = vsub.s32 2, %v2946
  %v2948 = vrot.slane %v2893, %v2947
  %v2949 = vlaneseq
  %v2950 = vshrl.u32 %v2949, 7
  %v2951 = vsub.s32 2, %v2950
  %v2952 = vrot.slane %v2897, %v2951
  %v2953 = vlaneseq
  %v2954 = vshrl.u32 %v2953, 7
  %v2955 = vsub.s32 2, %v2954
  %v2956 = vrot.slane %v2901, %v2955
  %v2957 = vlaneseq
  %v2958 = vshrl.u32 %v2957, 7
  %v2959 = vsub.s32 2, %v2958
  %v2960 = vrot.slane %v2905, %v2959
  %v2961 = vlaneseq
  %v2962 = vshrl.u32 %v2961, 7
  %v2963 = vsub.s32 2, %v2962
  %v2964 = vrot.slane %v2909, %v2963
  %v2965 = vlaneseq
  %v2966 = vshrl.u32 %v2965, 7
  %v2967 = vsub.s32 2, %v2966
  %v2968 = vrot.slane %v2913, %v2967
  %v2969 = vlaneseq
  %v2970 = vshrl.u32 %v2969, 7
  %v2971 = vsub.s32 2, %v2970
  %v2972 = vrot.slane %v2917, %v2971
  %v2973 = vlaneseq
  %v2974 = vshrl.u32 %v2973, 7
  %v2975 = vsub.s32 2, %v2974
  %v2976 = vrot.slane %v2921, %v2975
  %v2977 = vlaneseq
  %v2978 = vshrl.u32 %v2977, 7
  %v2979 = vsub.s32 2, %v2978
  %v2980 = vrot.slane %v2925, %v2979
  %v2981 = vlaneseq
  %v2982 = vshrl.u32 %v2981, 7
  %v2983 = vsub.s32 2, %v2982
  %v2984 = vrot.slane %v2929, %v2983
  %v2985 = vmul.f32 %v2528, %v2944
  %v2986 = vmul.f32 %v2530, %v2948
  %v2987 = vmul.f32 %v2599, %v2952
  %v2988 = vmul.f32 %v2601, %v2956
  %v2989 = vmul.f32 %v2670, %v2960
  %v2990 = vmul.f32 %v2672, %v2964
  %v2991 = vmul.f32 %v2741, %v2968
  %v2992 = vmul.f32 %v2743, %v2972
  %v2993 = vmul.f32 %v2812, %v2976
  %v2994 = vmul.f32 %v2814, %v2980
  %v2995 = vmul.f32 %v2883, %v2984
  %v2996 = vadd.f32 %v2985, %v2986
  %v2997 = vadd.f32 %v2996, %v2987
  %v2998 = vadd.f32 %v2997, %v2988
  %v2999 = vadd.f32 %v2998, %v2989
  %v3000 = vadd.f32 %v2999, %v2990
  %v3001 = vadd.f32 %v3000, %v2991
  %v3002 = vadd.f32 %v3001, %v2992
  %v3003 = vadd.f32 %v3002, %v2993
  %v3004 = vadd.f32 %v3003, %v2994
  %v3005 = vadd.f32 %v3004, %v2995
  %3006 = vadd.xlane.f32.xlu0 %v3005
  %v3007 = vpop.xlane.xlu0 %3006
  %v3008 = vmul.f32 %v2985, %v2985
  %v3009 = vmul.f32 %v2986, %v2986
  %v3010 = vmul.f32 %v2987, %v2987
  %v3011 = vmul.f32 %v2988, %v2988
  %v3012 = vmul.f32 %v2989, %v2989
  %v3013 = vmul.f32 %v2990, %v2990
  %v3014 = vmul.f32 %v2991, %v2991
  %v3015 = vmul.f32 %v2992, %v2992
  %v3016 = vmul.f32 %v2993, %v2993
  %v3017 = vmul.f32 %v2994, %v2994
  %v3018 = vmul.f32 %v2995, %v2995
  %v3019 = vadd.f32 %v3008, %v3009
  %v3020 = vadd.f32 %v3019, %v3010
  %v3021 = vadd.f32 %v3020, %v3011
  %v3022 = vadd.f32 %v3021, %v3012
  %v3023 = vadd.f32 %v3022, %v3013
  %v3024 = vadd.f32 %v3023, %v3014
  %v3025 = vadd.f32 %v3024, %v3015
  %v3026 = vadd.f32 %v3025, %v3016
  %v3027 = vadd.f32 %v3026, %v3017
  %v3028 = vadd.f32 %v3027, %v3018
  %3029 = vadd.xlane.f32.xlu0 %v3028
  %v3030 = vpop.xlane.xlu0 %3029
  %v3031 = vmul.f32 %v3007, 0.00125
  %v3032 = vmul.f32 %v3030, 0.00125
  %v3033 = vmul.f32 %v3031, %v3031
  %v3034 = vsub.f32 %v3032, %v3033
  %v3035 = vmax.f32 %v3034, 0.0
  %v3036 = vadd.f32 %v3035, 1e-05
  %v3037 = vrsqrt.pop %v3036
  %v3038 = vmul.f32 %v40, %v3037
  %v3039 = vmul.f32 %v3031, %v3038
  %3041 = vrot.lane.b32.xlu0 %v3039, 1
  %v3042 = vpop.permute.xlu0 %3041
  %v3044 = vsub.f32 %v40, %v3042
  %3046 = vset.pattern.permute.xlu0 0
  %3047 = vperm.xlu0 %3046, %v3038
  %v3048 = vpop.permute.xlu0 %3047
  %v3050 = vmul.f32 %v2528, %v3048
  %v3051 = vmul.f32 %v2530, %v3048
  %v3052 = vmul.f32 %v2599, %v3048
  %v3053 = vmul.f32 %v2601, %v3048
  %v3054 = vmul.f32 %v2670, %v3048
  %v3055 = vmul.f32 %v2672, %v3048
  %v3056 = vmul.f32 %v2741, %v3048
  %v3057 = vmul.f32 %v2743, %v3048
  %v3058 = vmul.f32 %v2812, %v3048
  %v3059 = vmul.f32 %v2814, %v3048
  %v3060 = vmul.f32 %v2883, %v3048
  %3062 = vset.pattern.permute.xlu0 1
  %3063 = vperm.xlu0 %3062, %v3044
  %v3064 = vpop.permute.xlu0 %3063
  %v3066 = vadd.f32 %v3050, %v3064
  %v3067 = vadd.f32 %v3051, %v3064
  %v3068 = vadd.f32 %v3052, %v3064
  %v3069 = vadd.f32 %v3053, %v3064
  %v3070 = vadd.f32 %v3054, %v3064
  %v3071 = vadd.f32 %v3055, %v3064
  %v3072 = vadd.f32 %v3056, %v3064
  %v3073 = vadd.f32 %v3057, %v3064
  %v3074 = vadd.f32 %v3058, %v3064
  %v3075 = vadd.f32 %v3059, %v3064
  %v3076 = vadd.f32 %v3060, %v3064
  %v3077 = vmul.f32 %v3066, 0.2
  %v3078 = vmul.f32 %v3067, 0.2
  %v3079 = vmul.f32 %v3068, 0.2
  %v3080 = vmul.f32 %v3069, 0.2
  %v3081 = vmul.f32 %v3070, 0.2
  %v3082 = vmul.f32 %v3071, 0.2
  %v3083 = vmul.f32 %v3072, 0.2
  %v3084 = vmul.f32 %v3073, 0.2
  %v3085 = vmul.f32 %v3074, 0.2
  %v3086 = vmul.f32 %v3075, 0.2
  %v3087 = vmul.f32 %v3076, 0.2
  %v3088 = vmax.f32 %v3066, %v3077
  %v3089 = vmax.f32 %v3067, %v3078
  %v3090 = vmax.f32 %v3068, %v3079
  %v3091 = vmax.f32 %v3069, %v3080
  %v3092 = vmax.f32 %v3070, %v3081
  %v3093 = vmax.f32 %v3071, %v3082
  %v3094 = vmax.f32 %v3072, %v3083
  %v3095 = vmax.f32 %v3073, %v3084
  %v3096 = vmax.f32 %v3074, %v3085
  %v3097 = vmax.f32 %v3075, %v3086
  %v3098 = vmax.f32 %v3076, %v3087
  %3110 = vrot.lane.b32.xlu0 %v3088, 127
  %v3111 = vpop.permute.xlu0 %3110
  %3112 = vrot.lane.b32.xlu0 %v3089, 127
  %v3113 = vpop.permute.xlu0 %3112
  %3114 = vrot.lane.b32.xlu0 %v3090, 127
  %v3115 = vpop.permute.xlu0 %3114
  %3116 = vrot.lane.b32.xlu0 %v3091, 127
  %v3117 = vpop.permute.xlu0 %3116
  %3118 = vrot.lane.b32.xlu0 %v3092, 127
  %v3119 = vpop.permute.xlu0 %3118
  %3120 = vrot.lane.b32.xlu0 %v3093, 127
  %v3121 = vpop.permute.xlu0 %3120
  %3122 = vrot.lane.b32.xlu0 %v3094, 127
  %v3123 = vpop.permute.xlu0 %3122
  %3124 = vrot.lane.b32.xlu0 %v3095, 127
  %v3125 = vpop.permute.xlu0 %3124
  %3126 = vrot.lane.b32.xlu0 %v3096, 127
  %v3127 = vpop.permute.xlu0 %3126
  %3128 = vrot.lane.b32.xlu0 %v3097, 127
  %v3129 = vpop.permute.xlu0 %3128
  %3130 = vrot.lane.b32.xlu0 %v3098, 127
  %v3131 = vpop.permute.xlu0 %3130
  %v3132 = vsel %vm81, %v3111, %v3113
  %v3133 = vsel %vm81, %v3113, %v3115
  %v3134 = vsel %vm81, %v3115, %v3117
  %v3135 = vsel %vm81, %v3117, %v3119
  %v3136 = vsel %vm81, %v3119, %v3121
  %v3137 = vsel %vm81, %v3121, %v3123
  %v3138 = vsel %vm81, %v3123, %v3125
  %v3139 = vsel %vm81, %v3125, %v3127
  %v3140 = vsel %vm81, %v3127, %v3129
  %v3141 = vsel %vm81, %v3129, %v3131
  %v3154 = vsel %vm81, %v3131, %v3111
  %3155 = vrot.lane.b32.xlu0 %v3088, 126
  %v3156 = vpop.permute.xlu0 %3155
  %3157 = vrot.lane.b32.xlu0 %v3089, 126
  %v3158 = vpop.permute.xlu0 %3157
  %3159 = vrot.lane.b32.xlu0 %v3090, 126
  %v3160 = vpop.permute.xlu0 %3159
  %3161 = vrot.lane.b32.xlu0 %v3091, 126
  %v3162 = vpop.permute.xlu0 %3161
  %3163 = vrot.lane.b32.xlu0 %v3092, 126
  %v3164 = vpop.permute.xlu0 %3163
  %3165 = vrot.lane.b32.xlu0 %v3093, 126
  %v3166 = vpop.permute.xlu0 %3165
  %3167 = vrot.lane.b32.xlu0 %v3094, 126
  %v3168 = vpop.permute.xlu0 %3167
  %3169 = vrot.lane.b32.xlu0 %v3095, 126
  %v3170 = vpop.permute.xlu0 %3169
  %3171 = vrot.lane.b32.xlu0 %v3096, 126
  %v3172 = vpop.permute.xlu0 %3171
  %3173 = vrot.lane.b32.xlu0 %v3097, 126
  %v3174 = vpop.permute.xlu0 %3173
  %3175 = vrot.lane.b32.xlu0 %v3098, 126
  %v3176 = vpop.permute.xlu0 %3175
  %v3177 = vsel %vm127, %v3156, %v3158
  %v3178 = vsel %vm127, %v3158, %v3160
  %v3179 = vsel %vm127, %v3160, %v3162
  %v3180 = vsel %vm127, %v3162, %v3164
  %v3181 = vsel %vm127, %v3164, %v3166
  %v3182 = vsel %vm127, %v3166, %v3168
  %v3183 = vsel %vm127, %v3168, %v3170
  %v3184 = vsel %vm127, %v3170, %v3172
  %v3185 = vsel %vm127, %v3172, %v3174
  %v3186 = vsel %vm127, %v3174, %v3176
  %v3199 = vsel %vm127, %v3176, %v3156
  %3200 = vrot.lane.b32.xlu0 %v3088, 102
  %v3201 = vpop.permute.xlu0 %3200
  %3202 = vrot.lane.b32.xlu0 %v3089, 102
  %v3203 = vpop.permute.xlu0 %3202
  %3204 = vrot.lane.b32.xlu0 %v3090, 102
  %v3205 = vpop.permute.xlu0 %3204
  %3206 = vrot.lane.b32.xlu0 %v3091, 102
  %v3207 = vpop.permute.xlu0 %3206
  %3208 = vrot.lane.b32.xlu0 %v3092, 102
  %v3209 = vpop.permute.xlu0 %3208
  %3210 = vrot.lane.b32.xlu0 %v3093, 102
  %v3211 = vpop.permute.xlu0 %3210
  %3212 = vrot.lane.b32.xlu0 %v3094, 102
  %v3213 = vpop.permute.xlu0 %3212
  %3214 = vrot.lane.b32.xlu0 %v3095, 102
  %v3215 = vpop.permute.xlu0 %3214
  %3216 = vrot.lane.b32.xlu0 %v3096, 102
  %v3217 = vpop.permute.xlu0 %3216
  %3218 = vrot.lane.b32.xlu0 %v3097, 102
  %v3219 = vpop.permute.xlu0 %3218
  %3220 = vrot.lane.b32.xlu0 %v3098, 102
  %v3221 = vpop.permute.xlu0 %3220
  %v3222 = vsel %vm173, %v3201, %v3203
  %v3223 = vsel %vm173, %v3203, %v3205
  %v3224 = vsel %vm173, %v3205, %v3207
  %v3225 = vsel %vm173, %v3207, %v3209
  %v3226 = vsel %vm173, %v3209, %v3211
  %v3227 = vsel %vm173, %v3211, %v3213
  %v3228 = vsel %vm173, %v3213, %v3215
  %v3229 = vsel %vm173, %v3215, %v3217
  %v3230 = vsel %vm173, %v3217, %v3219
  %v3231 = vsel %vm173, %v3219, %v3221
  %v3244 = vsel %vm173, %v3221, %v3201
  %3245 = vrot.lane.b32.xlu0 %v3088, 101
  %v3246 = vpop.permute.xlu0 %3245
  %3247 = vrot.lane.b32.xlu0 %v3089, 101
  %v3248 = vpop.permute.xlu0 %3247
  %3249 = vrot.lane.b32.xlu0 %v3090, 101
  %v3250 = vpop.permute.xlu0 %3249
  %3251 = vrot.lane.b32.xlu0 %v3091, 101
  %v3252 = vpop.permute.xlu0 %3251
  %3253 = vrot.lane.b32.xlu0 %v3092, 101
  %v3254 = vpop.permute.xlu0 %3253
  %3255 = vrot.lane.b32.xlu0 %v3093, 101
  %v3256 = vpop.permute.xlu0 %3255
  %3257 = vrot.lane.b32.xlu0 %v3094, 101
  %v3258 = vpop.permute.xlu0 %3257
  %3259 = vrot.lane.b32.xlu0 %v3095, 101
  %v3260 = vpop.permute.xlu0 %3259
  %3261 = vrot.lane.b32.xlu0 %v3096, 101
  %v3262 = vpop.permute.xlu0 %3261
  %3263 = vrot.lane.b32.xlu0 %v3097, 101
  %v3264 = vpop.permute.xlu0 %3263
  %3265 = vrot.lane.b32.xlu0 %v3098, 101
  %v3266 = vpop.permute.xlu0 %3265
  %v3267 = vsel %vm219, %v3246, %v3248
  %v3268 = vsel %vm219, %v3248, %v3250
  %v3269 = vsel %vm219, %v3250, %v3252
  %v3270 = vsel %vm219, %v3252, %v3254
  %v3271 = vsel %vm219, %v3254, %v3256
  %v3272 = vsel %vm219, %v3256, %v3258
  %v3273 = vsel %vm219, %v3258, %v3260
  %v3274 = vsel %vm219, %v3260, %v3262
  %v3275 = vsel %vm219, %v3262, %v3264
  %v3276 = vsel %vm219, %v3264, %v3266
  %v3289 = vsel %vm219, %v3266, %v3246
  %3290 = vrot.lane.b32.xlu0 %v3088, 100
  %v3291 = vpop.permute.xlu0 %3290
  %3292 = vrot.lane.b32.xlu0 %v3089, 100
  %v3293 = vpop.permute.xlu0 %3292
  %3294 = vrot.lane.b32.xlu0 %v3090, 100
  %v3295 = vpop.permute.xlu0 %3294
  %3296 = vrot.lane.b32.xlu0 %v3091, 100
  %v3297 = vpop.permute.xlu0 %3296
  %3298 = vrot.lane.b32.xlu0 %v3092, 100
  %v3299 = vpop.permute.xlu0 %3298
  %3300 = vrot.lane.b32.xlu0 %v3093, 100
  %v3301 = vpop.permute.xlu0 %3300
  %3302 = vrot.lane.b32.xlu0 %v3094, 100
  %v3303 = vpop.permute.xlu0 %3302
  %3304 = vrot.lane.b32.xlu0 %v3095, 100
  %v3305 = vpop.permute.xlu0 %3304
  %3306 = vrot.lane.b32.xlu0 %v3096, 100
  %v3307 = vpop.permute.xlu0 %3306
  %3308 = vrot.lane.b32.xlu0 %v3097, 100
  %v3309 = vpop.permute.xlu0 %3308
  %3310 = vrot.lane.b32.xlu0 %v3098, 100
  %v3311 = vpop.permute.xlu0 %3310
  %v3312 = vsel %vm265, %v3291, %v3293
  %v3313 = vsel %vm265, %v3293, %v3295
  %v3314 = vsel %vm265, %v3295, %v3297
  %v3315 = vsel %vm265, %v3297, %v3299
  %v3316 = vsel %vm265, %v3299, %v3301
  %v3317 = vsel %vm265, %v3301, %v3303
  %v3318 = vsel %vm265, %v3303, %v3305
  %v3319 = vsel %vm265, %v3305, %v3307
  %v3320 = vsel %vm265, %v3307, %v3309
  %v3321 = vsel %vm265, %v3309, %v3311
  %v3334 = vsel %vm265, %v3311, %v3291
  %3335 = vrot.lane.b32.xlu0 %v3088, 76
  %v3336 = vpop.permute.xlu0 %3335
  %3337 = vrot.lane.b32.xlu0 %v3089, 76
  %v3338 = vpop.permute.xlu0 %3337
  %3339 = vrot.lane.b32.xlu0 %v3090, 76
  %v3340 = vpop.permute.xlu0 %3339
  %3341 = vrot.lane.b32.xlu0 %v3091, 76
  %v3342 = vpop.permute.xlu0 %3341
  %3343 = vrot.lane.b32.xlu0 %v3092, 76
  %v3344 = vpop.permute.xlu0 %3343
  %3345 = vrot.lane.b32.xlu0 %v3093, 76
  %v3346 = vpop.permute.xlu0 %3345
  %3347 = vrot.lane.b32.xlu0 %v3094, 76
  %v3348 = vpop.permute.xlu0 %3347
  %3349 = vrot.lane.b32.xlu0 %v3095, 76
  %v3350 = vpop.permute.xlu0 %3349
  %3351 = vrot.lane.b32.xlu0 %v3096, 76
  %v3352 = vpop.permute.xlu0 %3351
  %3353 = vrot.lane.b32.xlu0 %v3097, 76
  %v3354 = vpop.permute.xlu0 %3353
  %3355 = vrot.lane.b32.xlu0 %v3098, 76
  %v3356 = vpop.permute.xlu0 %3355
  %v3357 = vsel %vm311, %v3336, %v3338
  %v3358 = vsel %vm311, %v3338, %v3340
  %v3359 = vsel %vm311, %v3340, %v3342
  %v3360 = vsel %vm311, %v3342, %v3344
  %v3361 = vsel %vm311, %v3344, %v3346
  %v3362 = vsel %vm311, %v3346, %v3348
  %v3363 = vsel %vm311, %v3348, %v3350
  %v3364 = vsel %vm311, %v3350, %v3352
  %v3365 = vsel %vm311, %v3352, %v3354
  %v3366 = vsel %vm311, %v3354, %v3356
  %v3379 = vsel %vm311, %v3356, %v3336
  %3380 = vrot.lane.b32.xlu0 %v3088, 75
  %v3381 = vpop.permute.xlu0 %3380
  %3382 = vrot.lane.b32.xlu0 %v3089, 75
  %v3383 = vpop.permute.xlu0 %3382
  %3384 = vrot.lane.b32.xlu0 %v3090, 75
  %v3385 = vpop.permute.xlu0 %3384
  %3386 = vrot.lane.b32.xlu0 %v3091, 75
  %v3387 = vpop.permute.xlu0 %3386
  %3388 = vrot.lane.b32.xlu0 %v3092, 75
  %v3389 = vpop.permute.xlu0 %3388
  %3390 = vrot.lane.b32.xlu0 %v3093, 75
  %v3391 = vpop.permute.xlu0 %3390
  %3392 = vrot.lane.b32.xlu0 %v3094, 75
  %v3393 = vpop.permute.xlu0 %3392
  %3394 = vrot.lane.b32.xlu0 %v3095, 75
  %v3395 = vpop.permute.xlu0 %3394
  %3396 = vrot.lane.b32.xlu0 %v3096, 75
  %v3397 = vpop.permute.xlu0 %3396
  %3398 = vrot.lane.b32.xlu0 %v3097, 75
  %v3399 = vpop.permute.xlu0 %3398
  %3400 = vrot.lane.b32.xlu0 %v3098, 75
  %v3401 = vpop.permute.xlu0 %3400
  %v3402 = vsel %vm357, %v3381, %v3383
  %v3403 = vsel %vm357, %v3383, %v3385
  %v3404 = vsel %vm357, %v3385, %v3387
  %v3405 = vsel %vm357, %v3387, %v3389
  %v3406 = vsel %vm357, %v3389, %v3391
  %v3407 = vsel %vm357, %v3391, %v3393
  %v3408 = vsel %vm357, %v3393, %v3395
  %v3409 = vsel %vm357, %v3395, %v3397
  %v3410 = vsel %vm357, %v3397, %v3399
  %v3411 = vsel %vm357, %v3399, %v3401
  %v3424 = vsel %vm357, %v3401, %v3381
  %3425 = vrot.lane.b32.xlu0 %v3088, 74
  %v3426 = vpop.permute.xlu0 %3425
  %3427 = vrot.lane.b32.xlu0 %v3089, 74
  %v3428 = vpop.permute.xlu0 %3427
  %3429 = vrot.lane.b32.xlu0 %v3090, 74
  %v3430 = vpop.permute.xlu0 %3429
  %3431 = vrot.lane.b32.xlu0 %v3091, 74
  %v3432 = vpop.permute.xlu0 %3431
  %3433 = vrot.lane.b32.xlu0 %v3092, 74
  %v3434 = vpop.permute.xlu0 %3433
  %3435 = vrot.lane.b32.xlu0 %v3093, 74
  %v3436 = vpop.permute.xlu0 %3435
  %3437 = vrot.lane.b32.xlu0 %v3094, 74
  %v3438 = vpop.permute.xlu0 %3437
  %3439 = vrot.lane.b32.xlu0 %v3095, 74
  %v3440 = vpop.permute.xlu0 %3439
  %3441 = vrot.lane.b32.xlu0 %v3096, 74
  %v3442 = vpop.permute.xlu0 %3441
  %3443 = vrot.lane.b32.xlu0 %v3097, 74
  %v3444 = vpop.permute.xlu0 %3443
  %3445 = vrot.lane.b32.xlu0 %v3098, 74
  %v3446 = vpop.permute.xlu0 %3445
  %v3447 = vsel %vm403, %v3426, %v3428
  %v3448 = vsel %vm403, %v3428, %v3430
  %v3449 = vsel %vm403, %v3430, %v3432
  %v3450 = vsel %vm403, %v3432, %v3434
  %v3451 = vsel %vm403, %v3434, %v3436
  %v3452 = vsel %vm403, %v3436, %v3438
  %v3453 = vsel %vm403, %v3438, %v3440
  %v3454 = vsel %vm403, %v3440, %v3442
  %v3455 = vsel %vm403, %v3442, %v3444
  %v3456 = vsel %vm403, %v3444, %v3446
  %v3469 = vsel %vm403, %v3446, %v3426
  %v3471 = vsel %vm427, %v37, 0
  %3473 = vmatprep.subr.mxu0 0.0
  %3474 = vmatpush1.msra.mxu0 0.0
  %3475 = vmatprep.subr.mxu0 0.0
  %3476 = vmatpush1.msra.mxu0 0.0
  %3477 = vmatprep.subr.mxu0 0.0
  %3478 = vmatpush1.msra.mxu0 0.0
  %3479 = vmatprep.subr.mxu0 0.0
  %3480 = vmatpush1.msra.mxu0 0.0
  %3481 = vmatprep.subr.mxu0 0.0
  %3482 = vmatpush1.msra.mxu0 0.0
  %3483 = vmatprep.subr.mxu0 0.0
  %3484 = vmatpush1.msra.mxu0 0.0
  %3485 = vmatprep.subr.mxu0 0.0
  %3486 = vmatpush1.msra.mxu0 0.0
  %3487 = vmatprep.subr.mxu0 %v3448
  %3488 = vmatpush1.msra.mxu0 %v3447
  %3489 = vmatprep.subr.mxu0 %v3403
  %3490 = vmatpush1.msra.mxu0 %v3402
  %3491 = vmatprep.subr.mxu0 %v3358
  %3492 = vmatpush1.msra.mxu0 %v3357
  %3493 = vmatprep.subr.mxu0 %v3313
  %3494 = vmatpush1.msra.mxu0 %v3312
  %3495 = vmatprep.subr.mxu0 %v3268
  %3496 = vmatpush1.msra.mxu0 %v3267
  %3497 = vmatprep.subr.mxu0 %v3223
  %3498 = vmatpush1.msra.mxu0 %v3222
  %3499 = vmatprep.subr.mxu0 %v3178
  %3500 = vmatpush1.msra.mxu0 %v3177
  %3501 = vmatprep.subr.mxu0 %v3133
  %3502 = vmatpush1.msra.mxu0 %v3132
  %3503 = vmatprep.subr.mxu0 %v3089
  %3504 = vmatpush1.msra.mxu0 %v3088
  %3505 = vmatprep.subr.mxu0 0.0
  %3506 = vmatpush2.msra.mxu0 0.0
  %3507 = vmatprep.subr.mxu0 0.0
  %3508 = vmatpush2.msra.mxu0 0.0
  %3509 = vmatprep.subr.mxu0 0.0
  %3510 = vmatpush2.msra.mxu0 0.0
  %3511 = vmatprep.subr.mxu0 0.0
  %3512 = vmatpush2.msra.mxu0 0.0
  %3513 = vmatprep.subr.mxu0 0.0
  %3514 = vmatpush2.msra.mxu0 0.0
  %3515 = vmatprep.subr.mxu0 0.0
  %3516 = vmatpush2.msra.mxu0 0.0
  %3517 = vmatprep.subr.mxu0 0.0
  %3518 = vmatpush2.msra.mxu0 0.0
  %3519 = vmatprep.subr.mxu0 0.0
  %3520 = vmatpush2.msra.mxu0 0.0
  %3521 = vmatprep.subr.mxu0 0.0
  %3522 = vmatpush2.msra.mxu0 0.0
  %3523 = vmatprep.subr.mxu0 0.0
  %3524 = vmatpush2.msra.mxu0 0.0
  %3525 = vmatprep.subr.mxu0 0.0
  %3526 = vmatpush2.msra.mxu0 0.0
  %3527 = vmatprep.subr.mxu0 0.0
  %3528 = vmatpush2.msra.mxu0 0.0
  %3529 = vmatprep.subr.mxu0 0.0
  %3530 = vmatpush2.msra.mxu0 0.0
  %3531 = vmatprep.subr.mxu0 0.0
  %3532 = vmatpush2.msra.mxu0 0.0
  %3533 = vmatprep.subr.mxu0 0.0
  %3534 = vmatpush2.msra.mxu0 0.0
  %3535 = vmatprep.subr.mxu0 0.0
  %3536 = vmatpush2.msra.mxu0 0.0
  %3537 = vmatprep.mubr.f32.mxu0 0.0
  %3538 = vmatmul.mubr.f32.gmra.mxu0 %v3471
  %v3539 = vpop.f32.mrf.mxu0
  %v3540 = vadd.f32 0.0, %v3539
  %v3541 = vpop.f32.mrf.mxu0
  %v3542 = vadd.f32 0.0, %v3541
  %3543 = vdwg.mxu0
  %3544 = vmatprep.subr.mxu0 0.0
  %3545 = vmatpush1.msra.mxu0 0.0
  %3546 = vmatprep.subr.mxu0 0.0
  %3547 = vmatpush1.msra.mxu0 0.0
  %3548 = vmatprep.subr.mxu0 0.0
  %3549 = vmatpush1.msra.mxu0 0.0
  %3550 = vmatprep.subr.mxu0 0.0
  %3551 = vmatpush1.msra.mxu0 0.0
  %3552 = vmatprep.subr.mxu0 0.0
  %3553 = vmatpush1.msra.mxu0 0.0
  %3554 = vmatprep.subr.mxu0 0.0
  %3555 = vmatpush1.msra.mxu0 0.0
  %3556 = vmatprep.subr.mxu0 0.0
  %3557 = vmatpush1.msra.mxu0 0.0
  %3558 = vmatprep.subr.mxu0 %v3450
  %3559 = vmatpush1.msra.mxu0 %v3449
  %3560 = vmatprep.subr.mxu0 %v3405
  %3561 = vmatpush1.msra.mxu0 %v3404
  %3562 = vmatprep.subr.mxu0 %v3360
  %3563 = vmatpush1.msra.mxu0 %v3359
  %3564 = vmatprep.subr.mxu0 %v3315
  %3565 = vmatpush1.msra.mxu0 %v3314
  %3566 = vmatprep.subr.mxu0 %v3270
  %3567 = vmatpush1.msra.mxu0 %v3269
  %3568 = vmatprep.subr.mxu0 %v3225
  %3569 = vmatpush1.msra.mxu0 %v3224
  %3570 = vmatprep.subr.mxu0 %v3180
  %3571 = vmatpush1.msra.mxu0 %v3179
  %3572 = vmatprep.subr.mxu0 %v3135
  %3573 = vmatpush1.msra.mxu0 %v3134
  %3574 = vmatprep.subr.mxu0 %v3091
  %3575 = vmatpush1.msra.mxu0 %v3090
  %3576 = vmatprep.subr.mxu0 0.0
  %3577 = vmatpush2.msra.mxu0 0.0
  %3578 = vmatprep.subr.mxu0 0.0
  %3579 = vmatpush2.msra.mxu0 0.0
  %3580 = vmatprep.subr.mxu0 0.0
  %3581 = vmatpush2.msra.mxu0 0.0
  %3582 = vmatprep.subr.mxu0 0.0
  %3583 = vmatpush2.msra.mxu0 0.0
  %3584 = vmatprep.subr.mxu0 0.0
  %3585 = vmatpush2.msra.mxu0 0.0
  %3586 = vmatprep.subr.mxu0 0.0
  %3587 = vmatpush2.msra.mxu0 0.0
  %3588 = vmatprep.subr.mxu0 0.0
  %3589 = vmatpush2.msra.mxu0 0.0
  %3590 = vmatprep.subr.mxu0 0.0
  %3591 = vmatpush2.msra.mxu0 0.0
  %3592 = vmatprep.subr.mxu0 0.0
  %3593 = vmatpush2.msra.mxu0 0.0
  %3594 = vmatprep.subr.mxu0 0.0
  %3595 = vmatpush2.msra.mxu0 0.0
  %3596 = vmatprep.subr.mxu0 0.0
  %3597 = vmatpush2.msra.mxu0 0.0
  %3598 = vmatprep.subr.mxu0 0.0
  %3599 = vmatpush2.msra.mxu0 0.0
  %3600 = vmatprep.subr.mxu0 0.0
  %3601 = vmatpush2.msra.mxu0 0.0
  %3602 = vmatprep.subr.mxu0 0.0
  %3603 = vmatpush2.msra.mxu0 0.0
  %3604 = vmatprep.subr.mxu0 0.0
  %3605 = vmatpush2.msra.mxu0 0.0
  %3606 = vmatprep.subr.mxu0 0.0
  %3607 = vmatpush2.msra.mxu0 0.0
  %3608 = vmatprep.mubr.f32.mxu0 0.0
  %3609 = vmatmul.mubr.f32.gmra.mxu0 %v3471
  %v3610 = vpop.f32.mrf.mxu0
  %v3611 = vadd.f32 0.0, %v3610
  %v3612 = vpop.f32.mrf.mxu0
  %v3613 = vadd.f32 0.0, %v3612
  %3614 = vdwg.mxu0
  %3615 = vmatprep.subr.mxu0 0.0
  %3616 = vmatpush1.msra.mxu0 0.0
  %3617 = vmatprep.subr.mxu0 0.0
  %3618 = vmatpush1.msra.mxu0 0.0
  %3619 = vmatprep.subr.mxu0 0.0
  %3620 = vmatpush1.msra.mxu0 0.0
  %3621 = vmatprep.subr.mxu0 0.0
  %3622 = vmatpush1.msra.mxu0 0.0
  %3623 = vmatprep.subr.mxu0 0.0
  %3624 = vmatpush1.msra.mxu0 0.0
  %3625 = vmatprep.subr.mxu0 0.0
  %3626 = vmatpush1.msra.mxu0 0.0
  %3627 = vmatprep.subr.mxu0 0.0
  %3628 = vmatpush1.msra.mxu0 0.0
  %3629 = vmatprep.subr.mxu0 %v3452
  %3630 = vmatpush1.msra.mxu0 %v3451
  %3631 = vmatprep.subr.mxu0 %v3407
  %3632 = vmatpush1.msra.mxu0 %v3406
  %3633 = vmatprep.subr.mxu0 %v3362
  %3634 = vmatpush1.msra.mxu0 %v3361
  %3635 = vmatprep.subr.mxu0 %v3317
  %3636 = vmatpush1.msra.mxu0 %v3316
  %3637 = vmatprep.subr.mxu0 %v3272
  %3638 = vmatpush1.msra.mxu0 %v3271
  %3639 = vmatprep.subr.mxu0 %v3227
  %3640 = vmatpush1.msra.mxu0 %v3226
  %3641 = vmatprep.subr.mxu0 %v3182
  %3642 = vmatpush1.msra.mxu0 %v3181
  %3643 = vmatprep.subr.mxu0 %v3137
  %3644 = vmatpush1.msra.mxu0 %v3136
  %3645 = vmatprep.subr.mxu0 %v3093
  %3646 = vmatpush1.msra.mxu0 %v3092
  %3647 = vmatprep.subr.mxu0 0.0
  %3648 = vmatpush2.msra.mxu0 0.0
  %3649 = vmatprep.subr.mxu0 0.0
  %3650 = vmatpush2.msra.mxu0 0.0
  %3651 = vmatprep.subr.mxu0 0.0
  %3652 = vmatpush2.msra.mxu0 0.0
  %3653 = vmatprep.subr.mxu0 0.0
  %3654 = vmatpush2.msra.mxu0 0.0
  %3655 = vmatprep.subr.mxu0 0.0
  %3656 = vmatpush2.msra.mxu0 0.0
  %3657 = vmatprep.subr.mxu0 0.0
  %3658 = vmatpush2.msra.mxu0 0.0
  %3659 = vmatprep.subr.mxu0 0.0
  %3660 = vmatpush2.msra.mxu0 0.0
  %3661 = vmatprep.subr.mxu0 0.0
  %3662 = vmatpush2.msra.mxu0 0.0
  %3663 = vmatprep.subr.mxu0 0.0
  %3664 = vmatpush2.msra.mxu0 0.0
  %3665 = vmatprep.subr.mxu0 0.0
  %3666 = vmatpush2.msra.mxu0 0.0
  %3667 = vmatprep.subr.mxu0 0.0
  %3668 = vmatpush2.msra.mxu0 0.0
  %3669 = vmatprep.subr.mxu0 0.0
  %3670 = vmatpush2.msra.mxu0 0.0
  %3671 = vmatprep.subr.mxu0 0.0
  %3672 = vmatpush2.msra.mxu0 0.0
  %3673 = vmatprep.subr.mxu0 0.0
  %3674 = vmatpush2.msra.mxu0 0.0
  %3675 = vmatprep.subr.mxu0 0.0
  %3676 = vmatpush2.msra.mxu0 0.0
  %3677 = vmatprep.subr.mxu0 0.0
  %3678 = vmatpush2.msra.mxu0 0.0
  %3679 = vmatprep.mubr.f32.mxu0 0.0
  %3680 = vmatmul.mubr.f32.gmra.mxu0 %v3471
  %v3681 = vpop.f32.mrf.mxu0
  %v3682 = vadd.f32 0.0, %v3681
  %v3683 = vpop.f32.mrf.mxu0
  %v3684 = vadd.f32 0.0, %v3683
  %3685 = vdwg.mxu0
  %3686 = vmatprep.subr.mxu0 0.0
  %3687 = vmatpush1.msra.mxu0 0.0
  %3688 = vmatprep.subr.mxu0 0.0
  %3689 = vmatpush1.msra.mxu0 0.0
  %3690 = vmatprep.subr.mxu0 0.0
  %3691 = vmatpush1.msra.mxu0 0.0
  %3692 = vmatprep.subr.mxu0 0.0
  %3693 = vmatpush1.msra.mxu0 0.0
  %3694 = vmatprep.subr.mxu0 0.0
  %3695 = vmatpush1.msra.mxu0 0.0
  %3696 = vmatprep.subr.mxu0 0.0
  %3697 = vmatpush1.msra.mxu0 0.0
  %3698 = vmatprep.subr.mxu0 0.0
  %3699 = vmatpush1.msra.mxu0 0.0
  %3700 = vmatprep.subr.mxu0 %v3454
  %3701 = vmatpush1.msra.mxu0 %v3453
  %3702 = vmatprep.subr.mxu0 %v3409
  %3703 = vmatpush1.msra.mxu0 %v3408
  %3704 = vmatprep.subr.mxu0 %v3364
  %3705 = vmatpush1.msra.mxu0 %v3363
  %3706 = vmatprep.subr.mxu0 %v3319
  %3707 = vmatpush1.msra.mxu0 %v3318
  %3708 = vmatprep.subr.mxu0 %v3274
  %3709 = vmatpush1.msra.mxu0 %v3273
  %3710 = vmatprep.subr.mxu0 %v3229
  %3711 = vmatpush1.msra.mxu0 %v3228
  %3712 = vmatprep.subr.mxu0 %v3184
  %3713 = vmatpush1.msra.mxu0 %v3183
  %3714 = vmatprep.subr.mxu0 %v3139
  %3715 = vmatpush1.msra.mxu0 %v3138
  %3716 = vmatprep.subr.mxu0 %v3095
  %3717 = vmatpush1.msra.mxu0 %v3094
  %3718 = vmatprep.subr.mxu0 0.0
  %3719 = vmatpush2.msra.mxu0 0.0
  %3720 = vmatprep.subr.mxu0 0.0
  %3721 = vmatpush2.msra.mxu0 0.0
  %3722 = vmatprep.subr.mxu0 0.0
  %3723 = vmatpush2.msra.mxu0 0.0
  %3724 = vmatprep.subr.mxu0 0.0
  %3725 = vmatpush2.msra.mxu0 0.0
  %3726 = vmatprep.subr.mxu0 0.0
  %3727 = vmatpush2.msra.mxu0 0.0
  %3728 = vmatprep.subr.mxu0 0.0
  %3729 = vmatpush2.msra.mxu0 0.0
  %3730 = vmatprep.subr.mxu0 0.0
  %3731 = vmatpush2.msra.mxu0 0.0
  %3732 = vmatprep.subr.mxu0 0.0
  %3733 = vmatpush2.msra.mxu0 0.0
  %3734 = vmatprep.subr.mxu0 0.0
  %3735 = vmatpush2.msra.mxu0 0.0
  %3736 = vmatprep.subr.mxu0 0.0
  %3737 = vmatpush2.msra.mxu0 0.0
  %3738 = vmatprep.subr.mxu0 0.0
  %3739 = vmatpush2.msra.mxu0 0.0
  %3740 = vmatprep.subr.mxu0 0.0
  %3741 = vmatpush2.msra.mxu0 0.0
  %3742 = vmatprep.subr.mxu0 0.0
  %3743 = vmatpush2.msra.mxu0 0.0
  %3744 = vmatprep.subr.mxu0 0.0
  %3745 = vmatpush2.msra.mxu0 0.0
  %3746 = vmatprep.subr.mxu0 0.0
  %3747 = vmatpush2.msra.mxu0 0.0
  %3748 = vmatprep.subr.mxu0 0.0
  %3749 = vmatpush2.msra.mxu0 0.0
  %3750 = vmatprep.mubr.f32.mxu0 0.0
  %3751 = vmatmul.mubr.f32.gmra.mxu0 %v3471
  %v3752 = vpop.f32.mrf.mxu0
  %v3753 = vadd.f32 0.0, %v3752
  %v3754 = vpop.f32.mrf.mxu0
  %v3755 = vadd.f32 0.0, %v3754
  %3756 = vdwg.mxu0
  %3757 = vmatprep.subr.mxu0 0.0
  %3758 = vmatpush1.msra.mxu0 0.0
  %3759 = vmatprep.subr.mxu0 0.0
  %3760 = vmatpush1.msra.mxu0 0.0
  %3761 = vmatprep.subr.mxu0 0.0
  %3762 = vmatpush1.msra.mxu0 0.0
  %3763 = vmatprep.subr.mxu0 0.0
  %3764 = vmatpush1.msra.mxu0 0.0
  %3765 = vmatprep.subr.mxu0 0.0
  %3766 = vmatpush1.msra.mxu0 0.0
  %3767 = vmatprep.subr.mxu0 0.0
  %3768 = vmatpush1.msra.mxu0 0.0
  %3769 = vmatprep.subr.mxu0 0.0
  %3770 = vmatpush1.msra.mxu0 0.0
  %3771 = vmatprep.subr.mxu0 %v3456
  %3772 = vmatpush1.msra.mxu0 %v3455
  %3773 = vmatprep.subr.mxu0 %v3411
  %3774 = vmatpush1.msra.mxu0 %v3410
  %3775 = vmatprep.subr.mxu0 %v3366
  %3776 = vmatpush1.msra.mxu0 %v3365
  %3777 = vmatprep.subr.mxu0 %v3321
  %3778 = vmatpush1.msra.mxu0 %v3320
  %3779 = vmatprep.subr.mxu0 %v3276
  %3780 = vmatpush1.msra.mxu0 %v3275
  %3781 = vmatprep.subr.mxu0 %v3231
  %3782 = vmatpush1.msra.mxu0 %v3230
  %3783 = vmatprep.subr.mxu0 %v3186
  %3784 = vmatpush1.msra.mxu0 %v3185
  %3785 = vmatprep.subr.mxu0 %v3141
  %3786 = vmatpush1.msra.mxu0 %v3140
  %3787 = vmatprep.subr.mxu0 %v3097
  %3788 = vmatpush1.msra.mxu0 %v3096
  %3789 = vmatprep.subr.mxu0 0.0
  %3790 = vmatpush2.msra.mxu0 0.0
  %3791 = vmatprep.subr.mxu0 0.0
  %3792 = vmatpush2.msra.mxu0 0.0
  %3793 = vmatprep.subr.mxu0 0.0
  %3794 = vmatpush2.msra.mxu0 0.0
  %3795 = vmatprep.subr.mxu0 0.0
  %3796 = vmatpush2.msra.mxu0 0.0
  %3797 = vmatprep.subr.mxu0 0.0
  %3798 = vmatpush2.msra.mxu0 0.0
  %3799 = vmatprep.subr.mxu0 0.0
  %3800 = vmatpush2.msra.mxu0 0.0
  %3801 = vmatprep.subr.mxu0 0.0
  %3802 = vmatpush2.msra.mxu0 0.0
  %3803 = vmatprep.subr.mxu0 0.0
  %3804 = vmatpush2.msra.mxu0 0.0
  %3805 = vmatprep.subr.mxu0 0.0
  %3806 = vmatpush2.msra.mxu0 0.0
  %3807 = vmatprep.subr.mxu0 0.0
  %3808 = vmatpush2.msra.mxu0 0.0
  %3809 = vmatprep.subr.mxu0 0.0
  %3810 = vmatpush2.msra.mxu0 0.0
  %3811 = vmatprep.subr.mxu0 0.0
  %3812 = vmatpush2.msra.mxu0 0.0
  %3813 = vmatprep.subr.mxu0 0.0
  %3814 = vmatpush2.msra.mxu0 0.0
  %3815 = vmatprep.subr.mxu0 0.0
  %3816 = vmatpush2.msra.mxu0 0.0
  %3817 = vmatprep.subr.mxu0 0.0
  %3818 = vmatpush2.msra.mxu0 0.0
  %3819 = vmatprep.subr.mxu0 0.0
  %3820 = vmatpush2.msra.mxu0 0.0
  %3821 = vmatprep.mubr.f32.mxu0 0.0
  %3822 = vmatmul.mubr.f32.gmra.mxu0 %v3471
  %v3823 = vpop.f32.mrf.mxu0
  %v3824 = vadd.f32 0.0, %v3823
  %v3825 = vpop.f32.mrf.mxu0
  %v3826 = vadd.f32 0.0, %v3825
  %3827 = vdwg.mxu0
  %3828 = vmatprep.subr.mxu0 0.0
  %3829 = vmatpush1.msra.mxu0 0.0
  %3830 = vmatprep.subr.mxu0 0.0
  %3831 = vmatpush1.msra.mxu0 0.0
  %3832 = vmatprep.subr.mxu0 0.0
  %3833 = vmatpush1.msra.mxu0 0.0
  %3834 = vmatprep.subr.mxu0 0.0
  %3835 = vmatpush1.msra.mxu0 0.0
  %3836 = vmatprep.subr.mxu0 0.0
  %3837 = vmatpush1.msra.mxu0 0.0
  %3838 = vmatprep.subr.mxu0 0.0
  %3839 = vmatpush1.msra.mxu0 0.0
  %3840 = vmatprep.subr.mxu0 0.0
  %3841 = vmatpush1.msra.mxu0 0.0
  %3842 = vmatprep.subr.mxu0 0.0
  %3843 = vmatpush1.msra.mxu0 %v3469
  %3844 = vmatprep.subr.mxu0 0.0
  %3845 = vmatpush1.msra.mxu0 %v3424
  %3846 = vmatprep.subr.mxu0 0.0
  %3847 = vmatpush1.msra.mxu0 %v3379
  %3848 = vmatprep.subr.mxu0 0.0
  %3849 = vmatpush1.msra.mxu0 %v3334
  %3850 = vmatprep.subr.mxu0 0.0
  %3851 = vmatpush1.msra.mxu0 %v3289
  %3852 = vmatprep.subr.mxu0 0.0
  %3853 = vmatpush1.msra.mxu0 %v3244
  %3854 = vmatprep.subr.mxu0 0.0
  %3855 = vmatpush1.msra.mxu0 %v3199
  %3856 = vmatprep.subr.mxu0 0.0
  %3857 = vmatpush1.msra.mxu0 %v3154
  %3858 = vmatprep.subr.mxu0 0.0
  %3859 = vmatpush1.msra.mxu0 %v3098
  %3860 = vmatprep.subr.mxu0 0.0
  %3861 = vmatpush2.msra.mxu0 0.0
  %3862 = vmatprep.subr.mxu0 0.0
  %3863 = vmatpush2.msra.mxu0 0.0
  %3864 = vmatprep.subr.mxu0 0.0
  %3865 = vmatpush2.msra.mxu0 0.0
  %3866 = vmatprep.subr.mxu0 0.0
  %3867 = vmatpush2.msra.mxu0 0.0
  %3868 = vmatprep.subr.mxu0 0.0
  %3869 = vmatpush2.msra.mxu0 0.0
  %3870 = vmatprep.subr.mxu0 0.0
  %3871 = vmatpush2.msra.mxu0 0.0
  %3872 = vmatprep.subr.mxu0 0.0
  %3873 = vmatpush2.msra.mxu0 0.0
  %3874 = vmatprep.subr.mxu0 0.0
  %3875 = vmatpush2.msra.mxu0 0.0
  %3876 = vmatprep.subr.mxu0 0.0
  %3877 = vmatpush2.msra.mxu0 0.0
  %3878 = vmatprep.subr.mxu0 0.0
  %3879 = vmatpush2.msra.mxu0 0.0
  %3880 = vmatprep.subr.mxu0 0.0
  %3881 = vmatpush2.msra.mxu0 0.0
  %3882 = vmatprep.subr.mxu0 0.0
  %3883 = vmatpush2.msra.mxu0 0.0
  %3884 = vmatprep.subr.mxu0 0.0
  %3885 = vmatpush2.msra.mxu0 0.0
  %3886 = vmatprep.subr.mxu0 0.0
  %3887 = vmatpush2.msra.mxu0 0.0
  %3888 = vmatprep.subr.mxu0 0.0
  %3889 = vmatpush2.msra.mxu0 0.0
  %3890 = vmatprep.subr.mxu0 0.0
  %3891 = vmatpush2.msra.mxu0 0.0
  %3892 = vmatprep.mubr.f32.mxu0 0.0
  %3893 = vmatmul.mubr.f32.gmra.mxu0 %v3471
  %v3894 = vpop.f32.mrf.mxu0
  %v3895 = vadd.f32 0.0, %v3894
  %v3896 = vpop.f32.mrf.mxu0
  %3897 = vdwg.mxu0
  %v3898 = vlaneseq
  %v3899 = vshrl.u32 %v3898, 7
  %v3900 = vsub.s32 3, %v3899
  %v3901 = vrot.slane %v42, %v3900
  %v3902 = vlaneseq
  %v3903 = vshrl.u32 %v3902, 7
  %v3904 = vsub.s32 7, %v3903
  %v3905 = vrot.slane %v42, %v3904
  %v3906 = vlaneseq
  %v3907 = vshrl.u32 %v3906, 7
  %v3908 = vsub.s32 3, %v3907
  %v3909 = vrot.slane %v43, %v3908
  %v3910 = vlaneseq
  %v3911 = vshrl.u32 %v3910, 7
  %v3912 = vsub.s32 7, %v3911
  %v3913 = vrot.slane %v43, %v3912
  %v3914 = vlaneseq
  %v3915 = vshrl.u32 %v3914, 7
  %v3916 = vsub.s32 3, %v3915
  %v3917 = vrot.slane %v44, %v3916
  %v3918 = vlaneseq
  %v3919 = vshrl.u32 %v3918, 7
  %v3920 = vsub.s32 7, %v3919
  %v3921 = vrot.slane %v44, %v3920
  %v3922 = vlaneseq
  %v3923 = vshrl.u32 %v3922, 7
  %v3924 = vsub.s32 3, %v3923
  %v3925 = vrot.slane %v45, %v3924
  %v3926 = vlaneseq
  %v3927 = vshrl.u32 %v3926, 7
  %v3928 = vsub.s32 7, %v3927
  %v3929 = vrot.slane %v45, %v3928
  %v3930 = vlaneseq
  %v3931 = vshrl.u32 %v3930, 7
  %v3932 = vsub.s32 3, %v3931
  %v3933 = vrot.slane %v46, %v3932
  %v3934 = vlaneseq
  %v3935 = vshrl.u32 %v3934, 7
  %v3936 = vsub.s32 7, %v3935
  %v3937 = vrot.slane %v46, %v3936
  %v3938 = vlaneseq
  %v3939 = vshrl.u32 %v3938, 7
  %v3940 = vsub.s32 3, %v3939
  %v3941 = vrot.slane %v47, %v3940
  %v3953 = vlaneseq
  %v3954 = vshrl.u32 %v3953, 7
  %v3955 = vsub.s32 3, %v3954
  %v3956 = vrot.slane %v3901, %v3955
  %v3957 = vlaneseq
  %v3958 = vshrl.u32 %v3957, 7
  %v3959 = vsub.s32 3, %v3958
  %v3960 = vrot.slane %v3905, %v3959
  %v3961 = vlaneseq
  %v3962 = vshrl.u32 %v3961, 7
  %v3963 = vsub.s32 3, %v3962
  %v3964 = vrot.slane %v3909, %v3963
  %v3965 = vlaneseq
  %v3966 = vshrl.u32 %v3965, 7
  %v3967 = vsub.s32 3, %v3966
  %v3968 = vrot.slane %v3913, %v3967
  %v3969 = vlaneseq
  %v3970 = vshrl.u32 %v3969, 7
  %v3971 = vsub.s32 3, %v3970
  %v3972 = vrot.slane %v3917, %v3971
  %v3973 = vlaneseq
  %v3974 = vshrl.u32 %v3973, 7
  %v3975 = vsub.s32 3, %v3974
  %v3976 = vrot.slane %v3921, %v3975
  %v3977 = vlaneseq
  %v3978 = vshrl.u32 %v3977, 7
  %v3979 = vsub.s32 3, %v3978
  %v3980 = vrot.slane %v3925, %v3979
  %v3981 = vlaneseq
  %v3982 = vshrl.u32 %v3981, 7
  %v3983 = vsub.s32 3, %v3982
  %v3984 = vrot.slane %v3929, %v3983
  %v3985 = vlaneseq
  %v3986 = vshrl.u32 %v3985, 7
  %v3987 = vsub.s32 3, %v3986
  %v3988 = vrot.slane %v3933, %v3987
  %v3989 = vlaneseq
  %v3990 = vshrl.u32 %v3989, 7
  %v3991 = vsub.s32 3, %v3990
  %v3992 = vrot.slane %v3937, %v3991
  %v3993 = vlaneseq
  %v3994 = vshrl.u32 %v3993, 7
  %v3995 = vsub.s32 3, %v3994
  %v3996 = vrot.slane %v3941, %v3995
  %v3997 = vmul.f32 %v3540, %v3956
  %v3998 = vmul.f32 %v3542, %v3960
  %v3999 = vmul.f32 %v3611, %v3964
  %v4000 = vmul.f32 %v3613, %v3968
  %v4001 = vmul.f32 %v3682, %v3972
  %v4002 = vmul.f32 %v3684, %v3976
  %v4003 = vmul.f32 %v3753, %v3980
  %v4004 = vmul.f32 %v3755, %v3984
  %v4005 = vmul.f32 %v3824, %v3988
  %v4006 = vmul.f32 %v3826, %v3992
  %v4007 = vmul.f32 %v3895, %v3996
  %v4008 = vadd.f32 %v3997, %v3998
  %v4009 = vadd.f32 %v4008, %v3999
  %v4010 = vadd.f32 %v4009, %v4000
  %v4011 = vadd.f32 %v4010, %v4001
  %v4012 = vadd.f32 %v4011, %v4002
  %v4013 = vadd.f32 %v4012, %v4003
  %v4014 = vadd.f32 %v4013, %v4004
  %v4015 = vadd.f32 %v4014, %v4005
  %v4016 = vadd.f32 %v4015, %v4006
  %v4017 = vadd.f32 %v4016, %v4007
  %4018 = vadd.xlane.f32.xlu0 %v4017
  %v4019 = vpop.xlane.xlu0 %4018
  %v4020 = vmul.f32 %v3997, %v3997
  %v4021 = vmul.f32 %v3998, %v3998
  %v4022 = vmul.f32 %v3999, %v3999
  %v4023 = vmul.f32 %v4000, %v4000
  %v4024 = vmul.f32 %v4001, %v4001
  %v4025 = vmul.f32 %v4002, %v4002
  %v4026 = vmul.f32 %v4003, %v4003
  %v4027 = vmul.f32 %v4004, %v4004
  %v4028 = vmul.f32 %v4005, %v4005
  %v4029 = vmul.f32 %v4006, %v4006
  %v4030 = vmul.f32 %v4007, %v4007
  %v4031 = vadd.f32 %v4020, %v4021
  %v4032 = vadd.f32 %v4031, %v4022
  %v4033 = vadd.f32 %v4032, %v4023
  %v4034 = vadd.f32 %v4033, %v4024
  %v4035 = vadd.f32 %v4034, %v4025
  %v4036 = vadd.f32 %v4035, %v4026
  %v4037 = vadd.f32 %v4036, %v4027
  %v4038 = vadd.f32 %v4037, %v4028
  %v4039 = vadd.f32 %v4038, %v4029
  %v4040 = vadd.f32 %v4039, %v4030
  %4041 = vadd.xlane.f32.xlu0 %v4040
  %v4042 = vpop.xlane.xlu0 %4041
  %v4043 = vmul.f32 %v4019, 0.0015432099
  %v4044 = vmul.f32 %v4042, 0.0015432099
  %v4045 = vmul.f32 %v4043, %v4043
  %v4046 = vsub.f32 %v4044, %v4045
  %v4047 = vmax.f32 %v4046, 0.0
  %v4048 = vadd.f32 %v4047, 1e-05
  %v4049 = vrsqrt.pop %v4048
  %v4050 = vmul.f32 %v41, %v4049
  %v4051 = vmul.f32 %v4043, %v4050
  %4053 = vrot.lane.b32.xlu0 %v4051, 1
  %v4054 = vpop.permute.xlu0 %4053
  %v4056 = vsub.f32 %v41, %v4054
  %4058 = vset.pattern.permute.xlu0 0
  %4059 = vperm.xlu0 %4058, %v4050
  %v4060 = vpop.permute.xlu0 %4059
  %v4062 = vmul.f32 %v3540, %v4060
  %v4063 = vmul.f32 %v3542, %v4060
  %v4064 = vmul.f32 %v3611, %v4060
  %v4065 = vmul.f32 %v3613, %v4060
  %v4066 = vmul.f32 %v3682, %v4060
  %v4067 = vmul.f32 %v3684, %v4060
  %v4068 = vmul.f32 %v3753, %v4060
  %v4069 = vmul.f32 %v3755, %v4060
  %v4070 = vmul.f32 %v3824, %v4060
  %v4071 = vmul.f32 %v3826, %v4060
  %v4072 = vmul.f32 %v3895, %v4060
  %4074 = vset.pattern.permute.xlu0 1
  %4075 = vperm.xlu0 %4074, %v4056
  %v4076 = vpop.permute.xlu0 %4075
  %v4078 = vadd.f32 %v4062, %v4076
  %v4079 = vadd.f32 %v4063, %v4076
  %v4080 = vadd.f32 %v4064, %v4076
  %v4081 = vadd.f32 %v4065, %v4076
  %v4082 = vadd.f32 %v4066, %v4076
  %v4083 = vadd.f32 %v4067, %v4076
  %v4084 = vadd.f32 %v4068, %v4076
  %v4085 = vadd.f32 %v4069, %v4076
  %v4086 = vadd.f32 %v4070, %v4076
  %v4087 = vadd.f32 %v4071, %v4076
  %v4088 = vadd.f32 %v4072, %v4076
  %v4089 = vmul.f32 %v4078, 0.2
  %v4090 = vmul.f32 %v4079, 0.2
  %v4091 = vmul.f32 %v4080, 0.2
  %v4092 = vmul.f32 %v4081, 0.2
  %v4093 = vmul.f32 %v4082, 0.2
  %v4094 = vmul.f32 %v4083, 0.2
  %v4095 = vmul.f32 %v4084, 0.2
  %v4096 = vmul.f32 %v4085, 0.2
  %v4097 = vmul.f32 %v4086, 0.2
  %v4098 = vmul.f32 %v4087, 0.2
  %v4099 = vmul.f32 %v4088, 0.2
  %v4100 = vmax.f32 %v4078, %v4089
  %v4101 = vmax.f32 %v4079, %v4090
  %v4102 = vmax.f32 %v4080, %v4091
  %v4103 = vmax.f32 %v4081, %v4092
  %v4104 = vmax.f32 %v4082, %v4093
  %v4105 = vmax.f32 %v4083, %v4094
  %v4106 = vmax.f32 %v4084, %v4095
  %v4107 = vmax.f32 %v4085, %v4096
  %v4108 = vmax.f32 %v4086, %v4097
  %v4109 = vmax.f32 %v4087, %v4098
  %v4110 = vmax.f32 %v4088, %v4099
  %4122 = vrot.lane.b32.xlu0 %v4100, 127
  %v4123 = vpop.permute.xlu0 %4122
  %4124 = vrot.lane.b32.xlu0 %v4101, 127
  %v4125 = vpop.permute.xlu0 %4124
  %4126 = vrot.lane.b32.xlu0 %v4102, 127
  %v4127 = vpop.permute.xlu0 %4126
  %4128 = vrot.lane.b32.xlu0 %v4103, 127
  %v4129 = vpop.permute.xlu0 %4128
  %4130 = vrot.lane.b32.xlu0 %v4104, 127
  %v4131 = vpop.permute.xlu0 %4130
  %4132 = vrot.lane.b32.xlu0 %v4105, 127
  %v4133 = vpop.permute.xlu0 %4132
  %4134 = vrot.lane.b32.xlu0 %v4106, 127
  %v4135 = vpop.permute.xlu0 %4134
  %4136 = vrot.lane.b32.xlu0 %v4107, 127
  %v4137 = vpop.permute.xlu0 %4136
  %4138 = vrot.lane.b32.xlu0 %v4108, 127
  %v4139 = vpop.permute.xlu0 %4138
  %4140 = vrot.lane.b32.xlu0 %v4109, 127
  %v4141 = vpop.permute.xlu0 %4140
  %4142 = vrot.lane.b32.xlu0 %v4110, 127
  %v4143 = vpop.permute.xlu0 %4142
  %v4144 = vsel %vm81, %v4123, %v4125
  %v4145 = vsel %vm81, %v4125, %v4127
  %v4146 = vsel %vm81, %v4127, %v4129
  %v4147 = vsel %vm81, %v4129, %v4131
  %v4148 = vsel %vm81, %v4131, %v4133
  %v4149 = vsel %vm81, %v4133, %v4135
  %v4150 = vsel %vm81, %v4135, %v4137
  %v4151 = vsel %vm81, %v4137, %v4139
  %v4152 = vsel %vm81, %v4139, %v4141
  %v4153 = vsel %vm81, %v4141, %v4143
  %v4166 = vsel %vm81, %v4143, %v4123
  %4167 = vrot.lane.b32.xlu0 %v4100, 126
  %v4168 = vpop.permute.xlu0 %4167
  %4169 = vrot.lane.b32.xlu0 %v4101, 126
  %v4170 = vpop.permute.xlu0 %4169
  %4171 = vrot.lane.b32.xlu0 %v4102, 126
  %v4172 = vpop.permute.xlu0 %4171
  %4173 = vrot.lane.b32.xlu0 %v4103, 126
  %v4174 = vpop.permute.xlu0 %4173
  %4175 = vrot.lane.b32.xlu0 %v4104, 126
  %v4176 = vpop.permute.xlu0 %4175
  %4177 = vrot.lane.b32.xlu0 %v4105, 126
  %v4178 = vpop.permute.xlu0 %4177
  %4179 = vrot.lane.b32.xlu0 %v4106, 126
  %v4180 = vpop.permute.xlu0 %4179
  %4181 = vrot.lane.b32.xlu0 %v4107, 126
  %v4182 = vpop.permute.xlu0 %4181
  %4183 = vrot.lane.b32.xlu0 %v4108, 126
  %v4184 = vpop.permute.xlu0 %4183
  %4185 = vrot.lane.b32.xlu0 %v4109, 126
  %v4186 = vpop.permute.xlu0 %4185
  %4187 = vrot.lane.b32.xlu0 %v4110, 126
  %v4188 = vpop.permute.xlu0 %4187
  %v4189 = vsel %vm127, %v4168, %v4170
  %v4190 = vsel %vm127, %v4170, %v4172
  %v4191 = vsel %vm127, %v4172, %v4174
  %v4192 = vsel %vm127, %v4174, %v4176
  %v4193 = vsel %vm127, %v4176, %v4178
  %v4194 = vsel %vm127, %v4178, %v4180
  %v4195 = vsel %vm127, %v4180, %v4182
  %v4196 = vsel %vm127, %v4182, %v4184
  %v4197 = vsel %vm127, %v4184, %v4186
  %v4198 = vsel %vm127, %v4186, %v4188
  %v4211 = vsel %vm127, %v4188, %v4168
  %4212 = vrot.lane.b32.xlu0 %v4100, 102
  %v4213 = vpop.permute.xlu0 %4212
  %4214 = vrot.lane.b32.xlu0 %v4101, 102
  %v4215 = vpop.permute.xlu0 %4214
  %4216 = vrot.lane.b32.xlu0 %v4102, 102
  %v4217 = vpop.permute.xlu0 %4216
  %4218 = vrot.lane.b32.xlu0 %v4103, 102
  %v4219 = vpop.permute.xlu0 %4218
  %4220 = vrot.lane.b32.xlu0 %v4104, 102
  %v4221 = vpop.permute.xlu0 %4220
  %4222 = vrot.lane.b32.xlu0 %v4105, 102
  %v4223 = vpop.permute.xlu0 %4222
  %4224 = vrot.lane.b32.xlu0 %v4106, 102
  %v4225 = vpop.permute.xlu0 %4224
  %4226 = vrot.lane.b32.xlu0 %v4107, 102
  %v4227 = vpop.permute.xlu0 %4226
  %4228 = vrot.lane.b32.xlu0 %v4108, 102
  %v4229 = vpop.permute.xlu0 %4228
  %4230 = vrot.lane.b32.xlu0 %v4109, 102
  %v4231 = vpop.permute.xlu0 %4230
  %4232 = vrot.lane.b32.xlu0 %v4110, 102
  %v4233 = vpop.permute.xlu0 %4232
  %v4234 = vsel %vm173, %v4213, %v4215
  %v4235 = vsel %vm173, %v4215, %v4217
  %v4236 = vsel %vm173, %v4217, %v4219
  %v4237 = vsel %vm173, %v4219, %v4221
  %v4238 = vsel %vm173, %v4221, %v4223
  %v4239 = vsel %vm173, %v4223, %v4225
  %v4240 = vsel %vm173, %v4225, %v4227
  %v4241 = vsel %vm173, %v4227, %v4229
  %v4242 = vsel %vm173, %v4229, %v4231
  %v4243 = vsel %vm173, %v4231, %v4233
  %v4256 = vsel %vm173, %v4233, %v4213
  %4257 = vrot.lane.b32.xlu0 %v4100, 101
  %v4258 = vpop.permute.xlu0 %4257
  %4259 = vrot.lane.b32.xlu0 %v4101, 101
  %v4260 = vpop.permute.xlu0 %4259
  %4261 = vrot.lane.b32.xlu0 %v4102, 101
  %v4262 = vpop.permute.xlu0 %4261
  %4263 = vrot.lane.b32.xlu0 %v4103, 101
  %v4264 = vpop.permute.xlu0 %4263
  %4265 = vrot.lane.b32.xlu0 %v4104, 101
  %v4266 = vpop.permute.xlu0 %4265
  %4267 = vrot.lane.b32.xlu0 %v4105, 101
  %v4268 = vpop.permute.xlu0 %4267
  %4269 = vrot.lane.b32.xlu0 %v4106, 101
  %v4270 = vpop.permute.xlu0 %4269
  %4271 = vrot.lane.b32.xlu0 %v4107, 101
  %v4272 = vpop.permute.xlu0 %4271
  %4273 = vrot.lane.b32.xlu0 %v4108, 101
  %v4274 = vpop.permute.xlu0 %4273
  %4275 = vrot.lane.b32.xlu0 %v4109, 101
  %v4276 = vpop.permute.xlu0 %4275
  %4277 = vrot.lane.b32.xlu0 %v4110, 101
  %v4278 = vpop.permute.xlu0 %4277
  %v4279 = vsel %vm219, %v4258, %v4260
  %v4280 = vsel %vm219, %v4260, %v4262
  %v4281 = vsel %vm219, %v4262, %v4264
  %v4282 = vsel %vm219, %v4264, %v4266
  %v4283 = vsel %vm219, %v4266, %v4268
  %v4284 = vsel %vm219, %v4268, %v4270
  %v4285 = vsel %vm219, %v4270, %v4272
  %v4286 = vsel %vm219, %v4272, %v4274
  %v4287 = vsel %vm219, %v4274, %v4276
  %v4288 = vsel %vm219, %v4276, %v4278
  %v4301 = vsel %vm219, %v4278, %v4258
  %4302 = vrot.lane.b32.xlu0 %v4100, 100
  %v4303 = vpop.permute.xlu0 %4302
  %4304 = vrot.lane.b32.xlu0 %v4101, 100
  %v4305 = vpop.permute.xlu0 %4304
  %4306 = vrot.lane.b32.xlu0 %v4102, 100
  %v4307 = vpop.permute.xlu0 %4306
  %4308 = vrot.lane.b32.xlu0 %v4103, 100
  %v4309 = vpop.permute.xlu0 %4308
  %4310 = vrot.lane.b32.xlu0 %v4104, 100
  %v4311 = vpop.permute.xlu0 %4310
  %4312 = vrot.lane.b32.xlu0 %v4105, 100
  %v4313 = vpop.permute.xlu0 %4312
  %4314 = vrot.lane.b32.xlu0 %v4106, 100
  %v4315 = vpop.permute.xlu0 %4314
  %4316 = vrot.lane.b32.xlu0 %v4107, 100
  %v4317 = vpop.permute.xlu0 %4316
  %4318 = vrot.lane.b32.xlu0 %v4108, 100
  %v4319 = vpop.permute.xlu0 %4318
  %4320 = vrot.lane.b32.xlu0 %v4109, 100
  %v4321 = vpop.permute.xlu0 %4320
  %4322 = vrot.lane.b32.xlu0 %v4110, 100
  %v4323 = vpop.permute.xlu0 %4322
  %v4324 = vsel %vm265, %v4303, %v4305
  %v4325 = vsel %vm265, %v4305, %v4307
  %v4326 = vsel %vm265, %v4307, %v4309
  %v4327 = vsel %vm265, %v4309, %v4311
  %v4328 = vsel %vm265, %v4311, %v4313
  %v4329 = vsel %vm265, %v4313, %v4315
  %v4330 = vsel %vm265, %v4315, %v4317
  %v4331 = vsel %vm265, %v4317, %v4319
  %v4332 = vsel %vm265, %v4319, %v4321
  %v4333 = vsel %vm265, %v4321, %v4323
  %v4346 = vsel %vm265, %v4323, %v4303
  %4347 = vrot.lane.b32.xlu0 %v4100, 76
  %v4348 = vpop.permute.xlu0 %4347
  %4349 = vrot.lane.b32.xlu0 %v4101, 76
  %v4350 = vpop.permute.xlu0 %4349
  %4351 = vrot.lane.b32.xlu0 %v4102, 76
  %v4352 = vpop.permute.xlu0 %4351
  %4353 = vrot.lane.b32.xlu0 %v4103, 76
  %v4354 = vpop.permute.xlu0 %4353
  %4355 = vrot.lane.b32.xlu0 %v4104, 76
  %v4356 = vpop.permute.xlu0 %4355
  %4357 = vrot.lane.b32.xlu0 %v4105, 76
  %v4358 = vpop.permute.xlu0 %4357
  %4359 = vrot.lane.b32.xlu0 %v4106, 76
  %v4360 = vpop.permute.xlu0 %4359
  %4361 = vrot.lane.b32.xlu0 %v4107, 76
  %v4362 = vpop.permute.xlu0 %4361
  %4363 = vrot.lane.b32.xlu0 %v4108, 76
  %v4364 = vpop.permute.xlu0 %4363
  %4365 = vrot.lane.b32.xlu0 %v4109, 76
  %v4366 = vpop.permute.xlu0 %4365
  %4367 = vrot.lane.b32.xlu0 %v4110, 76
  %v4368 = vpop.permute.xlu0 %4367
  %v4369 = vsel %vm311, %v4348, %v4350
  %v4370 = vsel %vm311, %v4350, %v4352
  %v4371 = vsel %vm311, %v4352, %v4354
  %v4372 = vsel %vm311, %v4354, %v4356
  %v4373 = vsel %vm311, %v4356, %v4358
  %v4374 = vsel %vm311, %v4358, %v4360
  %v4375 = vsel %vm311, %v4360, %v4362
  %v4376 = vsel %vm311, %v4362, %v4364
  %v4377 = vsel %vm311, %v4364, %v4366
  %v4378 = vsel %vm311, %v4366, %v4368
  %v4391 = vsel %vm311, %v4368, %v4348
  %4392 = vrot.lane.b32.xlu0 %v4100, 75
  %v4393 = vpop.permute.xlu0 %4392
  %4394 = vrot.lane.b32.xlu0 %v4101, 75
  %v4395 = vpop.permute.xlu0 %4394
  %4396 = vrot.lane.b32.xlu0 %v4102, 75
  %v4397 = vpop.permute.xlu0 %4396
  %4398 = vrot.lane.b32.xlu0 %v4103, 75
  %v4399 = vpop.permute.xlu0 %4398
  %4400 = vrot.lane.b32.xlu0 %v4104, 75
  %v4401 = vpop.permute.xlu0 %4400
  %4402 = vrot.lane.b32.xlu0 %v4105, 75
  %v4403 = vpop.permute.xlu0 %4402
  %4404 = vrot.lane.b32.xlu0 %v4106, 75
  %v4405 = vpop.permute.xlu0 %4404
  %4406 = vrot.lane.b32.xlu0 %v4107, 75
  %v4407 = vpop.permute.xlu0 %4406
  %4408 = vrot.lane.b32.xlu0 %v4108, 75
  %v4409 = vpop.permute.xlu0 %4408
  %4410 = vrot.lane.b32.xlu0 %v4109, 75
  %v4411 = vpop.permute.xlu0 %4410
  %4412 = vrot.lane.b32.xlu0 %v4110, 75
  %v4413 = vpop.permute.xlu0 %4412
  %v4414 = vsel %vm357, %v4393, %v4395
  %v4415 = vsel %vm357, %v4395, %v4397
  %v4416 = vsel %vm357, %v4397, %v4399
  %v4417 = vsel %vm357, %v4399, %v4401
  %v4418 = vsel %vm357, %v4401, %v4403
  %v4419 = vsel %vm357, %v4403, %v4405
  %v4420 = vsel %vm357, %v4405, %v4407
  %v4421 = vsel %vm357, %v4407, %v4409
  %v4422 = vsel %vm357, %v4409, %v4411
  %v4423 = vsel %vm357, %v4411, %v4413
  %v4436 = vsel %vm357, %v4413, %v4393
  %4437 = vrot.lane.b32.xlu0 %v4100, 74
  %v4438 = vpop.permute.xlu0 %4437
  %4439 = vrot.lane.b32.xlu0 %v4101, 74
  %v4440 = vpop.permute.xlu0 %4439
  %4441 = vrot.lane.b32.xlu0 %v4102, 74
  %v4442 = vpop.permute.xlu0 %4441
  %4443 = vrot.lane.b32.xlu0 %v4103, 74
  %v4444 = vpop.permute.xlu0 %4443
  %4445 = vrot.lane.b32.xlu0 %v4104, 74
  %v4446 = vpop.permute.xlu0 %4445
  %4447 = vrot.lane.b32.xlu0 %v4105, 74
  %v4448 = vpop.permute.xlu0 %4447
  %4449 = vrot.lane.b32.xlu0 %v4106, 74
  %v4450 = vpop.permute.xlu0 %4449
  %4451 = vrot.lane.b32.xlu0 %v4107, 74
  %v4452 = vpop.permute.xlu0 %4451
  %4453 = vrot.lane.b32.xlu0 %v4108, 74
  %v4454 = vpop.permute.xlu0 %4453
  %4455 = vrot.lane.b32.xlu0 %v4109, 74
  %v4456 = vpop.permute.xlu0 %4455
  %4457 = vrot.lane.b32.xlu0 %v4110, 74
  %v4458 = vpop.permute.xlu0 %4457
  %v4459 = vsel %vm403, %v4438, %v4440
  %v4460 = vsel %vm403, %v4440, %v4442
  %v4461 = vsel %vm403, %v4442, %v4444
  %v4462 = vsel %vm403, %v4444, %v4446
  %v4463 = vsel %vm403, %v4446, %v4448
  %v4464 = vsel %vm403, %v4448, %v4450
  %v4465 = vsel %vm403, %v4450, %v4452
  %v4466 = vsel %vm403, %v4452, %v4454
  %v4467 = vsel %vm403, %v4454, %v4456
  %v4468 = vsel %vm403, %v4456, %v4458
  %v4481 = vsel %vm403, %v4458, %v4438
  %v4482 = vld [vmem:[%s3] sm:$0x7]
  %4484 = vset.pattern.permute.xlu0 72
  %4485 = vperm.xlu0 %4484, %v4482
  %v4486 = vpop.permute.xlu0 %4485
  %v4488 = vsel %vm427, %v4482, 0
  %4490 = vmatprep.subr.mxu0 0.0
  %4491 = vmatpush1.msra.mxu0 0.0
  %4492 = vmatprep.subr.mxu0 0.0
  %4493 = vmatpush1.msra.mxu0 0.0
  %4494 = vmatprep.subr.mxu0 0.0
  %4495 = vmatpush1.msra.mxu0 0.0
  %4496 = vmatprep.subr.mxu0 0.0
  %4497 = vmatpush1.msra.mxu0 0.0
  %4498 = vmatprep.subr.mxu0 0.0
  %4499 = vmatpush1.msra.mxu0 0.0
  %4500 = vmatprep.subr.mxu0 0.0
  %4501 = vmatpush1.msra.mxu0 0.0
  %4502 = vmatprep.subr.mxu0 0.0
  %4503 = vmatpush1.msra.mxu0 0.0
  %4504 = vmatprep.subr.mxu0 %v4460
  %4505 = vmatpush1.msra.mxu0 %v4459
  %4506 = vmatprep.subr.mxu0 %v4415
  %4507 = vmatpush1.msra.mxu0 %v4414
  %4508 = vmatprep.subr.mxu0 %v4370
  %4509 = vmatpush1.msra.mxu0 %v4369
  %4510 = vmatprep.subr.mxu0 %v4325
  %4511 = vmatpush1.msra.mxu0 %v4324
  %4512 = vmatprep.subr.mxu0 %v4280
  %4513 = vmatpush1.msra.mxu0 %v4279
  %4514 = vmatprep.subr.mxu0 %v4235
  %4515 = vmatpush1.msra.mxu0 %v4234
  %4516 = vmatprep.subr.mxu0 %v4190
  %4517 = vmatpush1.msra.mxu0 %v4189
  %4518 = vmatprep.subr.mxu0 %v4145
  %4519 = vmatpush1.msra.mxu0 %v4144
  %4520 = vmatprep.subr.mxu0 %v4101
  %4521 = vmatpush1.msra.mxu0 %v4100
  %4522 = vmatprep.subr.mxu0 0.0
  %4523 = vmatpush2.msra.mxu0 0.0
  %4524 = vmatprep.subr.mxu0 0.0
  %4525 = vmatpush2.msra.mxu0 0.0
  %4526 = vmatprep.subr.mxu0 0.0
  %4527 = vmatpush2.msra.mxu0 0.0
  %4528 = vmatprep.subr.mxu0 0.0
  %4529 = vmatpush2.msra.mxu0 0.0
  %4530 = vmatprep.subr.mxu0 0.0
  %4531 = vmatpush2.msra.mxu0 0.0
  %4532 = vmatprep.subr.mxu0 0.0
  %4533 = vmatpush2.msra.mxu0 0.0
  %4534 = vmatprep.subr.mxu0 0.0
  %4535 = vmatpush2.msra.mxu0 0.0
  %4536 = vmatprep.subr.mxu0 0.0
  %4537 = vmatpush2.msra.mxu0 0.0
  %4538 = vmatprep.subr.mxu0 0.0
  %4539 = vmatpush2.msra.mxu0 0.0
  %4540 = vmatprep.subr.mxu0 0.0
  %4541 = vmatpush2.msra.mxu0 0.0
  %4542 = vmatprep.subr.mxu0 0.0
  %4543 = vmatpush2.msra.mxu0 0.0
  %4544 = vmatprep.subr.mxu0 0.0
  %4545 = vmatpush2.msra.mxu0 0.0
  %4546 = vmatprep.subr.mxu0 0.0
  %4547 = vmatpush2.msra.mxu0 0.0
  %4548 = vmatprep.subr.mxu0 0.0
  %4549 = vmatpush2.msra.mxu0 0.0
  %4550 = vmatprep.subr.mxu0 0.0
  %4551 = vmatpush2.msra.mxu0 0.0
  %4552 = vmatprep.subr.mxu0 0.0
  %4553 = vmatpush2.msra.mxu0 0.0
  %4554 = vmatprep.mubr.f32.mxu0 0.0
  %4555 = vmatmul.mubr.f32.gmra.mxu0 %v4488
  %v4556 = vpop.f32.mrf.mxu0
  %v4557 = vadd.f32 %v4486, %v4556
  %v4558 = vpop.f32.mrf.mxu0
  %v4559 = vadd.f32 %v4486, %v4558
  %4560 = vdwg.mxu0
  %4561 = vmatprep.subr.mxu0 0.0
  %4562 = vmatpush1.msra.mxu0 0.0
  %4563 = vmatprep.subr.mxu0 0.0
  %4564 = vmatpush1.msra.mxu0 0.0
  %4565 = vmatprep.subr.mxu0 0.0
  %4566 = vmatpush1.msra.mxu0 0.0
  %4567 = vmatprep.subr.mxu0 0.0
  %4568 = vmatpush1.msra.mxu0 0.0
  %4569 = vmatprep.subr.mxu0 0.0
  %4570 = vmatpush1.msra.mxu0 0.0
  %4571 = vmatprep.subr.mxu0 0.0
  %4572 = vmatpush1.msra.mxu0 0.0
  %4573 = vmatprep.subr.mxu0 0.0
  %4574 = vmatpush1.msra.mxu0 0.0
  %4575 = vmatprep.subr.mxu0 %v4462
  %4576 = vmatpush1.msra.mxu0 %v4461
  %4577 = vmatprep.subr.mxu0 %v4417
  %4578 = vmatpush1.msra.mxu0 %v4416
  %4579 = vmatprep.subr.mxu0 %v4372
  %4580 = vmatpush1.msra.mxu0 %v4371
  %4581 = vmatprep.subr.mxu0 %v4327
  %4582 = vmatpush1.msra.mxu0 %v4326
  %4583 = vmatprep.subr.mxu0 %v4282
  %4584 = vmatpush1.msra.mxu0 %v4281
  %4585 = vmatprep.subr.mxu0 %v4237
  %4586 = vmatpush1.msra.mxu0 %v4236
  %4587 = vmatprep.subr.mxu0 %v4192
  %4588 = vmatpush1.msra.mxu0 %v4191
  %4589 = vmatprep.subr.mxu0 %v4147
  %4590 = vmatpush1.msra.mxu0 %v4146
  %4591 = vmatprep.subr.mxu0 %v4103
  %4592 = vmatpush1.msra.mxu0 %v4102
  %4593 = vmatprep.subr.mxu0 0.0
  %4594 = vmatpush2.msra.mxu0 0.0
  %4595 = vmatprep.subr.mxu0 0.0
  %4596 = vmatpush2.msra.mxu0 0.0
  %4597 = vmatprep.subr.mxu0 0.0
  %4598 = vmatpush2.msra.mxu0 0.0
  %4599 = vmatprep.subr.mxu0 0.0
  %4600 = vmatpush2.msra.mxu0 0.0
  %4601 = vmatprep.subr.mxu0 0.0
  %4602 = vmatpush2.msra.mxu0 0.0
  %4603 = vmatprep.subr.mxu0 0.0
  %4604 = vmatpush2.msra.mxu0 0.0
  %4605 = vmatprep.subr.mxu0 0.0
  %4606 = vmatpush2.msra.mxu0 0.0
  %4607 = vmatprep.subr.mxu0 0.0
  %4608 = vmatpush2.msra.mxu0 0.0
  %4609 = vmatprep.subr.mxu0 0.0
  %4610 = vmatpush2.msra.mxu0 0.0
  %4611 = vmatprep.subr.mxu0 0.0
  %4612 = vmatpush2.msra.mxu0 0.0
  %4613 = vmatprep.subr.mxu0 0.0
  %4614 = vmatpush2.msra.mxu0 0.0
  %4615 = vmatprep.subr.mxu0 0.0
  %4616 = vmatpush2.msra.mxu0 0.0
  %4617 = vmatprep.subr.mxu0 0.0
  %4618 = vmatpush2.msra.mxu0 0.0
  %4619 = vmatprep.subr.mxu0 0.0
  %4620 = vmatpush2.msra.mxu0 0.0
  %4621 = vmatprep.subr.mxu0 0.0
  %4622 = vmatpush2.msra.mxu0 0.0
  %4623 = vmatprep.subr.mxu0 0.0
  %4624 = vmatpush2.msra.mxu0 0.0
  %4625 = vmatprep.mubr.f32.mxu0 0.0
  %4626 = vmatmul.mubr.f32.gmra.mxu0 %v4488
  %v4627 = vpop.f32.mrf.mxu0
  %v4628 = vadd.f32 %v4486, %v4627
  %v4629 = vpop.f32.mrf.mxu0
  %v4630 = vadd.f32 %v4486, %v4629
  %4631 = vdwg.mxu0
  %4632 = vmatprep.subr.mxu0 0.0
  %4633 = vmatpush1.msra.mxu0 0.0
  %4634 = vmatprep.subr.mxu0 0.0
  %4635 = vmatpush1.msra.mxu0 0.0
  %4636 = vmatprep.subr.mxu0 0.0
  %4637 = vmatpush1.msra.mxu0 0.0
  %4638 = vmatprep.subr.mxu0 0.0
  %4639 = vmatpush1.msra.mxu0 0.0
  %4640 = vmatprep.subr.mxu0 0.0
  %4641 = vmatpush1.msra.mxu0 0.0
  %4642 = vmatprep.subr.mxu0 0.0
  %4643 = vmatpush1.msra.mxu0 0.0
  %4644 = vmatprep.subr.mxu0 0.0
  %4645 = vmatpush1.msra.mxu0 0.0
  %4646 = vmatprep.subr.mxu0 %v4464
  %4647 = vmatpush1.msra.mxu0 %v4463
  %4648 = vmatprep.subr.mxu0 %v4419
  %4649 = vmatpush1.msra.mxu0 %v4418
  %4650 = vmatprep.subr.mxu0 %v4374
  %4651 = vmatpush1.msra.mxu0 %v4373
  %4652 = vmatprep.subr.mxu0 %v4329
  %4653 = vmatpush1.msra.mxu0 %v4328
  %4654 = vmatprep.subr.mxu0 %v4284
  %4655 = vmatpush1.msra.mxu0 %v4283
  %4656 = vmatprep.subr.mxu0 %v4239
  %4657 = vmatpush1.msra.mxu0 %v4238
  %4658 = vmatprep.subr.mxu0 %v4194
  %4659 = vmatpush1.msra.mxu0 %v4193
  %4660 = vmatprep.subr.mxu0 %v4149
  %4661 = vmatpush1.msra.mxu0 %v4148
  %4662 = vmatprep.subr.mxu0 %v4105
  %4663 = vmatpush1.msra.mxu0 %v4104
  %4664 = vmatprep.subr.mxu0 0.0
  %4665 = vmatpush2.msra.mxu0 0.0
  %4666 = vmatprep.subr.mxu0 0.0
  %4667 = vmatpush2.msra.mxu0 0.0
  %4668 = vmatprep.subr.mxu0 0.0
  %4669 = vmatpush2.msra.mxu0 0.0
  %4670 = vmatprep.subr.mxu0 0.0
  %4671 = vmatpush2.msra.mxu0 0.0
  %4672 = vmatprep.subr.mxu0 0.0
  %4673 = vmatpush2.msra.mxu0 0.0
  %4674 = vmatprep.subr.mxu0 0.0
  %4675 = vmatpush2.msra.mxu0 0.0
  %4676 = vmatprep.subr.mxu0 0.0
  %4677 = vmatpush2.msra.mxu0 0.0
  %4678 = vmatprep.subr.mxu0 0.0
  %4679 = vmatpush2.msra.mxu0 0.0
  %4680 = vmatprep.subr.mxu0 0.0
  %4681 = vmatpush2.msra.mxu0 0.0
  %4682 = vmatprep.subr.mxu0 0.0
  %4683 = vmatpush2.msra.mxu0 0.0
  %4684 = vmatprep.subr.mxu0 0.0
  %4685 = vmatpush2.msra.mxu0 0.0
  %4686 = vmatprep.subr.mxu0 0.0
  %4687 = vmatpush2.msra.mxu0 0.0
  %4688 = vmatprep.subr.mxu0 0.0
  %4689 = vmatpush2.msra.mxu0 0.0
  %4690 = vmatprep.subr.mxu0 0.0
  %4691 = vmatpush2.msra.mxu0 0.0
  %4692 = vmatprep.subr.mxu0 0.0
  %4693 = vmatpush2.msra.mxu0 0.0
  %4694 = vmatprep.subr.mxu0 0.0
  %4695 = vmatpush2.msra.mxu0 0.0
  %4696 = vmatprep.mubr.f32.mxu0 0.0
  %4697 = vmatmul.mubr.f32.gmra.mxu0 %v4488
  %v4698 = vpop.f32.mrf.mxu0
  %v4699 = vadd.f32 %v4486, %v4698
  %v4700 = vpop.f32.mrf.mxu0
  %v4701 = vadd.f32 %v4486, %v4700
  %4702 = vdwg.mxu0
  %4703 = vmatprep.subr.mxu0 0.0
  %4704 = vmatpush1.msra.mxu0 0.0
  %4705 = vmatprep.subr.mxu0 0.0
  %4706 = vmatpush1.msra.mxu0 0.0
  %4707 = vmatprep.subr.mxu0 0.0
  %4708 = vmatpush1.msra.mxu0 0.0
  %4709 = vmatprep.subr.mxu0 0.0
  %4710 = vmatpush1.msra.mxu0 0.0
  %4711 = vmatprep.subr.mxu0 0.0
  %4712 = vmatpush1.msra.mxu0 0.0
  %4713 = vmatprep.subr.mxu0 0.0
  %4714 = vmatpush1.msra.mxu0 0.0
  %4715 = vmatprep.subr.mxu0 0.0
  %4716 = vmatpush1.msra.mxu0 0.0
  %4717 = vmatprep.subr.mxu0 %v4466
  %4718 = vmatpush1.msra.mxu0 %v4465
  %4719 = vmatprep.subr.mxu0 %v4421
  %4720 = vmatpush1.msra.mxu0 %v4420
  %4721 = vmatprep.subr.mxu0 %v4376
  %4722 = vmatpush1.msra.mxu0 %v4375
  %4723 = vmatprep.subr.mxu0 %v4331
  %4724 = vmatpush1.msra.mxu0 %v4330
  %4725 = vmatprep.subr.mxu0 %v4286
  %4726 = vmatpush1.msra.mxu0 %v4285
  %4727 = vmatprep.subr.mxu0 %v4241
  %4728 = vmatpush1.msra.mxu0 %v4240
  %4729 = vmatprep.subr.mxu0 %v4196
  %4730 = vmatpush1.msra.mxu0 %v4195
  %4731 = vmatprep.subr.mxu0 %v4151
  %4732 = vmatpush1.msra.mxu0 %v4150
  %4733 = vmatprep.subr.mxu0 %v4107
  %4734 = vmatpush1.msra.mxu0 %v4106
  %4735 = vmatprep.subr.mxu0 0.0
  %4736 = vmatpush2.msra.mxu0 0.0
  %4737 = vmatprep.subr.mxu0 0.0
  %4738 = vmatpush2.msra.mxu0 0.0
  %4739 = vmatprep.subr.mxu0 0.0
  %4740 = vmatpush2.msra.mxu0 0.0
  %4741 = vmatprep.subr.mxu0 0.0
  %4742 = vmatpush2.msra.mxu0 0.0
  %4743 = vmatprep.subr.mxu0 0.0
  %4744 = vmatpush2.msra.mxu0 0.0
  %4745 = vmatprep.subr.mxu0 0.0
  %4746 = vmatpush2.msra.mxu0 0.0
  %4747 = vmatprep.subr.mxu0 0.0
  %4748 = vmatpush2.msra.mxu0 0.0
  %4749 = vmatprep.subr.mxu0 0.0
  %4750 = vmatpush2.msra.mxu0 0.0
  %4751 = vmatprep.subr.mxu0 0.0
  %4752 = vmatpush2.msra.mxu0 0.0
  %4753 = vmatprep.subr.mxu0 0.0
  %4754 = vmatpush2.msra.mxu0 0.0
  %4755 = vmatprep.subr.mxu0 0.0
  %4756 = vmatpush2.msra.mxu0 0.0
  %4757 = vmatprep.subr.mxu0 0.0
  %4758 = vmatpush2.msra.mxu0 0.0
  %4759 = vmatprep.subr.mxu0 0.0
  %4760 = vmatpush2.msra.mxu0 0.0
  %4761 = vmatprep.subr.mxu0 0.0
  %4762 = vmatpush2.msra.mxu0 0.0
  %4763 = vmatprep.subr.mxu0 0.0
  %4764 = vmatpush2.msra.mxu0 0.0
  %4765 = vmatprep.subr.mxu0 0.0
  %4766 = vmatpush2.msra.mxu0 0.0
  %4767 = vmatprep.mubr.f32.mxu0 0.0
  %4768 = vmatmul.mubr.f32.gmra.mxu0 %v4488
  %v4769 = vpop.f32.mrf.mxu0
  %v4770 = vadd.f32 %v4486, %v4769
  %v4771 = vpop.f32.mrf.mxu0
  %v4772 = vadd.f32 %v4486, %v4771
  %4773 = vdwg.mxu0
  %4774 = vmatprep.subr.mxu0 0.0
  %4775 = vmatpush1.msra.mxu0 0.0
  %4776 = vmatprep.subr.mxu0 0.0
  %4777 = vmatpush1.msra.mxu0 0.0
  %4778 = vmatprep.subr.mxu0 0.0
  %4779 = vmatpush1.msra.mxu0 0.0
  %4780 = vmatprep.subr.mxu0 0.0
  %4781 = vmatpush1.msra.mxu0 0.0
  %4782 = vmatprep.subr.mxu0 0.0
  %4783 = vmatpush1.msra.mxu0 0.0
  %4784 = vmatprep.subr.mxu0 0.0
  %4785 = vmatpush1.msra.mxu0 0.0
  %4786 = vmatprep.subr.mxu0 0.0
  %4787 = vmatpush1.msra.mxu0 0.0
  %4788 = vmatprep.subr.mxu0 %v4468
  %4789 = vmatpush1.msra.mxu0 %v4467
  %4790 = vmatprep.subr.mxu0 %v4423
  %4791 = vmatpush1.msra.mxu0 %v4422
  %4792 = vmatprep.subr.mxu0 %v4378
  %4793 = vmatpush1.msra.mxu0 %v4377
  %4794 = vmatprep.subr.mxu0 %v4333
  %4795 = vmatpush1.msra.mxu0 %v4332
  %4796 = vmatprep.subr.mxu0 %v4288
  %4797 = vmatpush1.msra.mxu0 %v4287
  %4798 = vmatprep.subr.mxu0 %v4243
  %4799 = vmatpush1.msra.mxu0 %v4242
  %4800 = vmatprep.subr.mxu0 %v4198
  %4801 = vmatpush1.msra.mxu0 %v4197
  %4802 = vmatprep.subr.mxu0 %v4153
  %4803 = vmatpush1.msra.mxu0 %v4152
  %4804 = vmatprep.subr.mxu0 %v4109
  %4805 = vmatpush1.msra.mxu0 %v4108
  %4806 = vmatprep.subr.mxu0 0.0
  %4807 = vmatpush2.msra.mxu0 0.0
  %4808 = vmatprep.subr.mxu0 0.0
  %4809 = vmatpush2.msra.mxu0 0.0
  %4810 = vmatprep.subr.mxu0 0.0
  %4811 = vmatpush2.msra.mxu0 0.0
  %4812 = vmatprep.subr.mxu0 0.0
  %4813 = vmatpush2.msra.mxu0 0.0
  %4814 = vmatprep.subr.mxu0 0.0
  %4815 = vmatpush2.msra.mxu0 0.0
  %4816 = vmatprep.subr.mxu0 0.0
  %4817 = vmatpush2.msra.mxu0 0.0
  %4818 = vmatprep.subr.mxu0 0.0
  %4819 = vmatpush2.msra.mxu0 0.0
  %4820 = vmatprep.subr.mxu0 0.0
  %4821 = vmatpush2.msra.mxu0 0.0
  %4822 = vmatprep.subr.mxu0 0.0
  %4823 = vmatpush2.msra.mxu0 0.0
  %4824 = vmatprep.subr.mxu0 0.0
  %4825 = vmatpush2.msra.mxu0 0.0
  %4826 = vmatprep.subr.mxu0 0.0
  %4827 = vmatpush2.msra.mxu0 0.0
  %4828 = vmatprep.subr.mxu0 0.0
  %4829 = vmatpush2.msra.mxu0 0.0
  %4830 = vmatprep.subr.mxu0 0.0
  %4831 = vmatpush2.msra.mxu0 0.0
  %4832 = vmatprep.subr.mxu0 0.0
  %4833 = vmatpush2.msra.mxu0 0.0
  %4834 = vmatprep.subr.mxu0 0.0
  %4835 = vmatpush2.msra.mxu0 0.0
  %4836 = vmatprep.subr.mxu0 0.0
  %4837 = vmatpush2.msra.mxu0 0.0
  %4838 = vmatprep.mubr.f32.mxu0 0.0
  %4839 = vmatmul.mubr.f32.gmra.mxu0 %v4488
  %v4840 = vpop.f32.mrf.mxu0
  %v4841 = vadd.f32 %v4486, %v4840
  %v4842 = vpop.f32.mrf.mxu0
  %v4843 = vadd.f32 %v4486, %v4842
  %4844 = vdwg.mxu0
  %4845 = vmatprep.subr.mxu0 0.0
  %4846 = vmatpush1.msra.mxu0 0.0
  %4847 = vmatprep.subr.mxu0 0.0
  %4848 = vmatpush1.msra.mxu0 0.0
  %4849 = vmatprep.subr.mxu0 0.0
  %4850 = vmatpush1.msra.mxu0 0.0
  %4851 = vmatprep.subr.mxu0 0.0
  %4852 = vmatpush1.msra.mxu0 0.0
  %4853 = vmatprep.subr.mxu0 0.0
  %4854 = vmatpush1.msra.mxu0 0.0
  %4855 = vmatprep.subr.mxu0 0.0
  %4856 = vmatpush1.msra.mxu0 0.0
  %4857 = vmatprep.subr.mxu0 0.0
  %4858 = vmatpush1.msra.mxu0 0.0
  %4859 = vmatprep.subr.mxu0 0.0
  %4860 = vmatpush1.msra.mxu0 %v4481
  %4861 = vmatprep.subr.mxu0 0.0
  %4862 = vmatpush1.msra.mxu0 %v4436
  %4863 = vmatprep.subr.mxu0 0.0
  %4864 = vmatpush1.msra.mxu0 %v4391
  %4865 = vmatprep.subr.mxu0 0.0
  %4866 = vmatpush1.msra.mxu0 %v4346
  %4867 = vmatprep.subr.mxu0 0.0
  %4868 = vmatpush1.msra.mxu0 %v4301
  %4869 = vmatprep.subr.mxu0 0.0
  %4870 = vmatpush1.msra.mxu0 %v4256
  %4871 = vmatprep.subr.mxu0 0.0
  %4872 = vmatpush1.msra.mxu0 %v4211
  %4873 = vmatprep.subr.mxu0 0.0
  %4874 = vmatpush1.msra.mxu0 %v4166
  %4875 = vmatprep.subr.mxu0 0.0
  %4876 = vmatpush1.msra.mxu0 %v4110
  %4877 = vmatprep.subr.mxu0 0.0
  %4878 = vmatpush2.msra.mxu0 0.0
  %4879 = vmatprep.subr.mxu0 0.0
  %4880 = vmatpush2.msra.mxu0 0.0
  %4881 = vmatprep.subr.mxu0 0.0
  %4882 = vmatpush2.msra.mxu0 0.0
  %4883 = vmatprep.subr.mxu0 0.0
  %4884 = vmatpush2.msra.mxu0 0.0
  %4885 = vmatprep.subr.mxu0 0.0
  %4886 = vmatpush2.msra.mxu0 0.0
  %4887 = vmatprep.subr.mxu0 0.0
  %4888 = vmatpush2.msra.mxu0 0.0
  %4889 = vmatprep.subr.mxu0 0.0
  %4890 = vmatpush2.msra.mxu0 0.0
  %4891 = vmatprep.subr.mxu0 0.0
  %4892 = vmatpush2.msra.mxu0 0.0
  %4893 = vmatprep.subr.mxu0 0.0
  %4894 = vmatpush2.msra.mxu0 0.0
  %4895 = vmatprep.subr.mxu0 0.0
  %4896 = vmatpush2.msra.mxu0 0.0
  %4897 = vmatprep.subr.mxu0 0.0
  %4898 = vmatpush2.msra.mxu0 0.0
  %4899 = vmatprep.subr.mxu0 0.0
  %4900 = vmatpush2.msra.mxu0 0.0
  %4901 = vmatprep.subr.mxu0 0.0
  %4902 = vmatpush2.msra.mxu0 0.0
  %4903 = vmatprep.subr.mxu0 0.0
  %4904 = vmatpush2.msra.mxu0 0.0
  %4905 = vmatprep.subr.mxu0 0.0
  %4906 = vmatpush2.msra.mxu0 0.0
  %4907 = vmatprep.subr.mxu0 0.0
  %4908 = vmatpush2.msra.mxu0 0.0
  %4909 = vmatprep.mubr.f32.mxu0 0.0
  %4910 = vmatmul.mubr.f32.gmra.mxu0 %v4488
  %v4911 = vpop.f32.mrf.mxu0
  %v4912 = vadd.f32 %v4486, %v4911
  %v4913 = vpop.f32.mrf.mxu0
  %4914 = vdwg.mxu0
  %v4915 = vtanh.pop %v4557
  %v4916 = vtanh.pop %v4559
  %v4917 = vtanh.pop %v4628
  %v4918 = vtanh.pop %v4630
  %v4919 = vtanh.pop %v4699
  %v4920 = vtanh.pop %v4701
  %v4921 = vtanh.pop %v4770
  %v4922 = vtanh.pop %v4772
  %v4923 = vtanh.pop %v4841
  %v4924 = vtanh.pop %v4843
  %v4925 = vtanh.pop %v4912
  %v4926 = vld [vmem:[%s4] sm:$0x77]
  %v4927 = vld [vmem:[%s4 + $0x8] sm:$0x77]
  %v4928 = vld [vmem:[%s4 + $0x10] sm:$0x77]
  %v4929 = vld [vmem:[%s4 + $0x18] sm:$0x77]
  %v4930 = vld [vmem:[%s4 + $0x20] sm:$0x77]
  %v4931 = vld [vmem:[%s4 + $0x28] sm:$0x7]
  %v4937 = vcombine.high %v4926, %v4926
  %v4938 = vcombine.high %v4927, %v4927
  %v4939 = vcombine.high %v4928, %v4928
  %v4940 = vcombine.high %v4929, %v4929
  %v4941 = vcombine.high %v4930, %v4930
  %v4947 = vadd.f32 %v4915, %v4926
  %v4948 = vadd.f32 %v4916, %v4937
  %v4949 = vadd.f32 %v4917, %v4927
  %v4950 = vadd.f32 %v4918, %v4938
  %v4951 = vadd.f32 %v4919, %v4928
  %v4952 = vadd.f32 %v4920, %v4939
  %v4953 = vadd.f32 %v4921, %v4929
  %v4954 = vadd.f32 %v4922, %v4940
  %v4955 = vadd.f32 %v4923, %v4930
  %v4956 = vadd.f32 %v4924, %v4941
  %v4957 = vadd.f32 %v4925, %v4931
  %v4968 = vcombine.low %v4947, %v4948
  %v4969 = vcombine.low %v4949, %v4950
  %v4970 = vcombine.low %v4951, %v4952
  %v4971 = vcombine.low %v4953, %v4954
  %v4972 = vcombine.low %v4955, %v4956
  %4978 = vst [vmem:[%s6] sm:$0x77] %v4968
  %4979 = vst [vmem:[%s6 + $0x8] sm:$0x77] %v4969
  %4980 = vst [vmem:[%s6 + $0x10] sm:$0x77] %v4970
  %4981 = vst [vmem:[%s6 + $0x18] sm:$0x77] %v4971
  %4982 = vst [vmem:[%s6 + $0x20] sm:$0x77] %v4972
  %4983 = vst [vmem:[%s6 + $0x28] sm:$0x7] %v4957
  // Predicated region
  $region26: #{generator_forward.1} parent=0 // pred_check
    _
  $region27: #{generator_forward.1} parent=0 // pred_check_branch
    %4985 = sbr.rel (0) target = $region29
  $region28: #{generator_forward.1} parent=0 // pred_region
    _
  $region29: #{generator_forward.1} parent=0 // pred_fallthru
    _
  // Predicated region
  $region30: #{generator_forward.1} parent=0 // pred_check
    _
  $region31: #{generator_forward.1} parent=0 // pred_check_branch
    %4987 = sbr.rel (0) target = $region33
  $region32: #{generator_forward.1} parent=0 // pred_region
    _
  $region33: #{generator_forward.1} parent=0 // pred_fallthru
    _

</llo_original>
